<compile_context>
chip_gen: v5e
topology: v5e:2x2
jax: 0.10.0
libtpu: 0.0.40
codegen_flags: <defaults>
</compile_context>

<pallas_src>
import numpy as np

import jax
import jax.numpy as jnp
from jax.experimental import pallas as pl
from jax.experimental.pallas import tpu as pltpu


# --------------------------------------------------------------------------- #
# Static geometry and (shape-only / weight-only) helper matrices
# --------------------------------------------------------------------------- #
def _layer_geoms(layer_cfg, h, w):
    geoms = []
    for (cin, cout), k, s, p in layer_cfg:
        hp, wp = h + 2 * p, w + 2 * p
        ho, wo = (hp - k) // s + 1, (wp - k) // s + 1
        geoms.append(dict(cin=cin, cout=cout, k=k, s=s, p=p,
                          h=h, w=w, hp=hp, wp=wp, ho=ho, wo=wo))
        h, w = ho, wo
    return geoms


def _row_select_matrix(n, hp, ho, s, k):
    """S[kh*n*ho + b*ho + oh, b*hp + s*oh + kh] = 1  (0/1, shape-only)."""
    sel = np.zeros((k * n * ho, n * hp), np.float32)
    for kh in range(k):
        for b in range(n):
            for oh in range(ho):
                sel[kh * n * ho + b * ho + oh, b * hp + s * oh + kh] = 1.0
    return sel


def _channel_mean_matrix(cout, wo, m_count):
    """Block-ones matrix scaled by 1/M: (col sums) @ B -> per-channel mean,
    broadcast back over that channel's Wo columns."""
    blk = np.kron(np.eye(cout, dtype=np.float32), np.ones((wo, wo), np.float32))
    return blk / float(m_count)


def _tap_weight_matrix(w_l, s, wp, wo):
    """M[kh, c*wp + w, co*wo + ow] = W[co, c, kh, w - s*ow] (0 outside tap)."""
    cout, cin, k, _ = w_l.shape
    widx = jnp.arange(wp)[:, None]                       # (wp, 1)
    oidx = jnp.arange(wo)[None, :]                       # (1, wo)
    kw = widx - s * oidx                                 # (wp, wo)
    valid = ((kw >= 0) & (kw < k)).astype(w_l.dtype)
    kw_c = jnp.clip(kw, 0, k - 1)
    g = w_l[:, :, :, kw_c] * valid[None, None, None]     # (cout, cin, k, wp, wo)
    g = jnp.transpose(g, (2, 1, 3, 0, 4)).reshape(k, cin * wp, cout * wo)
    return g.astype(jnp.bfloat16)


# --------------------------------------------------------------------------- #
# The fused whole-encoder Pallas kernel
# --------------------------------------------------------------------------- #
def _make_encoder_kernel(geoms, n_batch):
    num_layers = len(geoms)

    def kernel(*refs):
        # refs: x, (sel, M, Bavg, gamma_cols, beta_cols) per layer, alphas,
        #       out_1..L (NCHW), pad_1..L (VMEM scratch)
        x_ref = refs[0]
        layer_refs = [refs[1 + 5 * i: 1 + 5 * (i + 1)] for i in range(num_layers)]
        alpha_ref = refs[1 + 5 * num_layers]
        o_refs = refs[2 + 5 * num_layers: 2 + 6 * num_layers]
        pad_refs = refs[2 + 6 * num_layers:]

        act = None  # previous layer's activation, layout (N*Ho, Cout*Wo), f32
        for li, g in enumerate(geoms):
            sel_ref, m_ref, bavg_ref, gam_ref, bet_ref = layer_refs[li]
            pad_ref = pad_refs[li]
            k, p = g['k'], g['p']
            cin, cout = g['cin'], g['cout']
            h, w, hp, wp = g['h'], g['w'], g['hp'], g['wp']
            ho, wo = g['ho'], g['wo']
            q = n_batch * ho

            # ---- stage this layer's zero-padded input canvas (f32 scratch) --
            pad_ref[...] = jnp.zeros(pad_ref.shape, pad_ref.dtype)
            for n in range(n_batch):
                for c in range(cin):
                    src = (x_ref[n, c] if li == 0
                           else act[n * h:(n + 1) * h, c * w:(c + 1) * w])
                    pad_ref[n * hp + p: n * hp + p + h,
                            c * wp + p: c * wp + p + w] = src

            # ---- convolution: row-select matmul + per-kh folded-weight dots -
            patches = pad_ref[...].astype(jnp.bfloat16)          # (N*Hp, Cin*Wp)
            rows = jnp.dot(sel_ref[...], patches,
                           preferred_element_type=jnp.float32)   # (k*q, Cin*Wp)
            acc = jnp.zeros((q, cout * wo), jnp.float32)
            for kh in range(k):
                r_kh = rows[kh * q:(kh + 1) * q, :].astype(jnp.bfloat16)
                acc = acc + jnp.dot(r_kh, m_ref[kh],
                                    preferred_element_type=jnp.float32)

            # ---- BatchNorm (batch stats) folded to scale/shift, then PReLU --
            ones_row = jnp.ones((1, q), jnp.float32)
            mean = jnp.dot(jnp.dot(ones_row, acc), bavg_ref[...])       # (1, Cout*Wo)
            centered = acc - mean
            var = jnp.dot(jnp.dot(ones_row, centered * centered), bavg_ref[...])
            scale = gam_ref[...] * jax.lax.rsqrt(var + 1e-5)
            z = centered * scale + bet_ref[...]
            alpha = alpha_ref[li]
            act = jnp.where(z > 0.0, z, alpha * z)                       # (q, Cout*Wo)

            # ---- emit this layer's output directly in NCHW ------------------
            o_ref = o_refs[li]
            for n in range(n_batch):
                for co in range(cout):
                    o_ref[n, co] = act[n * ho:(n + 1) * ho,
                                       co * wo:(co + 1) * wo]

    return kernel


# --------------------------------------------------------------------------- #
# Encoder: parameter init + jitted forward (single fused pallas_call)
# --------------------------------------------------------------------------- #
def init_encoder(key, layers):
    params = []
    for idx, ((cin, cout), k, _s, _p) in enumerate(layers):
        kw_key, kb_key = jax.random.split(jax.random.fold_in(key, idx))
        fan_in = cin * k * k
        bound = 1.0 / float(fan_in) ** 0.5
        params.append(dict(
            w=jax.random.uniform(kw_key, (cout, cin, k, k), jnp.float32, -bound, bound),
            b=jax.random.uniform(kb_key, (cout,), jnp.float32, -bound, bound),
            gamma=jnp.ones((cout,), jnp.float32),     # BatchNorm2d default init
            beta=jnp.zeros((cout,), jnp.float32),
            alpha=jnp.array([0.25], jnp.float32),     # nn.PReLU() default init
        ))
    return params


def make_encoder_forward(layers):
    layer_cfg = tuple((tuple(cfg[0]), int(cfg[1]), int(cfg[2]), int(cfg[3]))
                      for cfg in layers)

    @jax.jit
    def forward(x, params):
        n, cin0, h0, w0 = x.shape
        assert cin0 == layer_cfg[0][0][0]
        geoms = _layer_geoms(layer_cfg, h0, w0)
        num_layers = len(geoms)

        inputs = [x.astype(jnp.float32)]
        out_shapes, scratch = [], []
        for g, prm in zip(geoms, params):
            m_count = n * g['ho'] * g['wo']
            inputs.append(jnp.asarray(
                _row_select_matrix(n, g['hp'], g['ho'], g['s'], g['k']),
                jnp.bfloat16))
            inputs.append(_tap_weight_matrix(prm['w'], g['s'], g['wp'], g['wo']))
            inputs.append(jnp.asarray(
                _channel_mean_matrix(g['cout'], g['wo'], m_count), jnp.float32))
            inputs.append(jnp.repeat(prm['gamma'].astype(jnp.float32), g['wo'])[None, :])
            inputs.append(jnp.repeat(prm['beta'].astype(jnp.float32), g['wo'])[None, :])
            out_shapes.append(jax.ShapeDtypeStruct(
                (n, g['cout'], g['ho'], g['wo']), jnp.float32))
            scratch.append(pltpu.VMEM((n * g['hp'], g['cin'] * g['wp']), jnp.float32))
        inputs.append(jnp.concatenate(
            [prm['alpha'].reshape(-1).astype(jnp.float32) for prm in params]))

        vmem = pl.BlockSpec(memory_space=pltpu.MemorySpace.VMEM)
        smem = pl.BlockSpec(memory_space=pltpu.MemorySpace.SMEM)
        outs = pl.pallas_call(
            _make_encoder_kernel(tuple(geoms), n),
            out_shape=tuple(out_shapes),
            in_specs=[vmem] * (1 + 5 * num_layers) + [smem],
            out_specs=tuple(vmem for _ in range(num_layers)),
            scratch_shapes=scratch,
            compiler_params=pltpu.CompilerParams(
                vmem_limit_bytes=16 * 1024 * 1024),
        )(*inputs)
        return list(outs)

    return forward


# --------------------------------------------------------------------------- #
# Pure-JAX reference (correctness check).  Models the same bf16 quantization
# of the conv operands as the kernel; keeps the conv bias (which cancels
# through training-mode BN) to verify that dropping it in the kernel is safe.
# --------------------------------------------------------------------------- #
def _ref_layer(x, prm, stride, padding):
    xq = x.astype(jnp.bfloat16).astype(jnp.float32)
    wq = prm["w"].astype(jnp.bfloat16).astype(jnp.float32)
    y = jax.lax.conv_general_dilated(
        xq, wq, (stride, stride), [(padding, padding)] * 2,
        dimension_numbers=("NCHW", "OIHW", "NCHW"),
        precision=jax.lax.Precision.HIGHEST,
    )
    y = y + prm["b"][None, :, None, None]
    mean = jnp.mean(y, axis=(0, 2, 3), keepdims=True)
    var = jnp.mean((y - mean) ** 2, axis=(0, 2, 3), keepdims=True)
    z = (y - mean) * jax.lax.rsqrt(var + 1e-5)
    z = z * prm["gamma"][None, :, None, None] + prm["beta"][None, :, None, None]
    return jnp.where(z > 0, z, prm["alpha"][0] * z)


if __name__ == "__main__":
    # layers spec mirrors the PyTorch ctor: ((Cin, Cout), kernel, stride, padding)
    layers = [((4, 8), 3, 1, 1), ((8, 16), 3, 2, 1), ((16, 16), 3, 2, 1)]

    key = jax.random.PRNGKey(0)
    xkey, pkey = jax.random.split(key)
    x = jax.random.normal(xkey, (2, 4, 16, 16), jnp.float32)   # NCHW input

    params = init_encoder(pkey, layers)
    forward = make_encoder_forward(layers)
    outs = forward(x, params)
    for o in outs:
        jax.block_until_ready(o)

    # correctness: each fused-kernel layer output vs. pure-JAX reference on the
    # same (previous kernel-layer) input, so errors do not compound.
    prev = x
    for o, prm, cfg in zip(outs, params, layers):
        _, _, s, p = cfg
        yr = _ref_layer(prev, prm, s, p)
        assert o.shape == yr.shape, (o.shape, yr.shape)
        err = float(jnp.max(jnp.abs(o - yr)))
        assert jnp.allclose(o, yr, atol=5e-3, rtol=5e-3), f"max abs diff {err}"
        prev = o

    print("KERNEL_OK")
</pallas_src>

<mosaic_0001>
module attributes {stable_mosaic.version = 11 : i64} {
  func.func @kernel(%arg0: memref<2x4x16x16xf32, #tpu.memory_space<vmem>>, %arg1: memref<96x36xbf16, #tpu.memory_space<vmem>>, %arg2: memref<3x72x128xbf16, #tpu.memory_space<vmem>>, %arg3: memref<128x128xf32, #tpu.memory_space<vmem>>, %arg4: memref<1x128xf32, #tpu.memory_space<vmem>>, %arg5: memref<1x128xf32, #tpu.memory_space<vmem>>, %arg6: memref<48x36xbf16, #tpu.memory_space<vmem>>, %arg7: memref<3x144x128xbf16, #tpu.memory_space<vmem>>, %arg8: memref<128x128xf32, #tpu.memory_space<vmem>>, %arg9: memref<1x128xf32, #tpu.memory_space<vmem>>, %arg10: memref<1x128xf32, #tpu.memory_space<vmem>>, %arg11: memref<24x20xbf16, #tpu.memory_space<vmem>>, %arg12: memref<3x160x64xbf16, #tpu.memory_space<vmem>>, %arg13: memref<64x64xf32, #tpu.memory_space<vmem>>, %arg14: memref<1x64xf32, #tpu.memory_space<vmem>>, %arg15: memref<1x64xf32, #tpu.memory_space<vmem>>, %arg16: memref<3xf32, #tpu.memory_space<smem>>, %arg17: memref<2x8x16x16xf32, #tpu.memory_space<vmem>>, %arg18: memref<2x16x8x8xf32, #tpu.memory_space<vmem>>, %arg19: memref<2x16x4x4xf32, #tpu.memory_space<vmem>>, %arg20: memref<36x72xf32, #tpu.memory_space<vmem>>, %arg21: memref<36x144xf32, #tpu.memory_space<vmem>>, %arg22: memref<20x160xf32, #tpu.memory_space<vmem>>) attributes {dimension_semantics = [], scalar_prefetch = 0 : i64, scratch_operands = 3 : i64, tpu.core_type = #tpu.core_type<tc>} {
    %cst = arith.constant 0.000000e+00 : f32
    %0 = vector.broadcast %cst : f32 to vector<36x72xf32>
    %c0 = arith.constant 0 : index
    %c0_0 = arith.constant 0 : index
    %1 = vector.load %arg20[%c0, %c0_0] : memref<36x72xf32, #tpu.memory_space<vmem>>, vector<36x72xf32>
    tpu.vector_store %arg20[%c0, %c0_0], %0 {strides = array<i32>} : memref<36x72xf32, #tpu.memory_space<vmem>>, vector<36x72xf32>,
    %c0_1 = arith.constant 0 : index
    %c0_2 = arith.constant 0 : index
    %c0_3 = arith.constant 0 : index
    %c0_4 = arith.constant 0 : index
    %2 = vector.load %arg0[%c0_1, %c0_2, %c0_3, %c0_4] : memref<2x4x16x16xf32, #tpu.memory_space<vmem>>, vector<1x1x16x16xf32>
    %3 = vector.shape_cast %2 : vector<1x1x16x16xf32> to vector<16x16xf32>
    %c1 = arith.constant 1 : index
    %c1_5 = arith.constant 1 : index
    %4 = vector.load %arg20[%c1, %c1_5] : memref<36x72xf32, #tpu.memory_space<vmem>>, vector<16x16xf32>
    tpu.vector_store %arg20[%c1, %c1_5], %3 {strides = array<i32>} : memref<36x72xf32, #tpu.memory_space<vmem>>, vector<16x16xf32>,
    %c0_6 = arith.constant 0 : index
    %c1_7 = arith.constant 1 : index
    %c0_8 = arith.constant 0 : index
    %c0_9 = arith.constant 0 : index
    %5 = vector.load %arg0[%c0_6, %c1_7, %c0_8, %c0_9] : memref<2x4x16x16xf32, #tpu.memory_space<vmem>>, vector<1x1x16x16xf32>
    %6 = vector.shape_cast %5 : vector<1x1x16x16xf32> to vector<16x16xf32>
    %c1_10 = arith.constant 1 : index
    %c19 = arith.constant 19 : index
    %7 = vector.load %arg20[%c1_10, %c19] : memref<36x72xf32, #tpu.memory_space<vmem>>, vector<16x16xf32>
    tpu.vector_store %arg20[%c1_10, %c19], %6 {strides = array<i32>} : memref<36x72xf32, #tpu.memory_space<vmem>>, vector<16x16xf32>,
    %c0_11 = arith.constant 0 : index
    %c2 = arith.constant 2 : index
    %c0_12 = arith.constant 0 : index
    %c0_13 = arith.constant 0 : index
    %8 = vector.load %arg0[%c0_11, %c2, %c0_12, %c0_13] : memref<2x4x16x16xf32, #tpu.memory_space<vmem>>, vector<1x1x16x16xf32>
    %9 = vector.shape_cast %8 : vector<1x1x16x16xf32> to vector<16x16xf32>
    %c1_14 = arith.constant 1 : index
    %c37 = arith.constant 37 : index
    %10 = vector.load %arg20[%c1_14, %c37] : memref<36x72xf32, #tpu.memory_space<vmem>>, vector<16x16xf32>
    tpu.vector_store %arg20[%c1_14, %c37], %9 {strides = array<i32>} : memref<36x72xf32, #tpu.memory_space<vmem>>, vector<16x16xf32>,
    %c0_15 = arith.constant 0 : index
    %c3 = arith.constant 3 : index
    %c0_16 = arith.constant 0 : index
    %c0_17 = arith.constant 0 : index
    %11 = vector.load %arg0[%c0_15, %c3, %c0_16, %c0_17] : memref<2x4x16x16xf32, #tpu.memory_space<vmem>>, vector<1x1x16x16xf32>
    %12 = vector.shape_cast %11 : vector<1x1x16x16xf32> to vector<16x16xf32>
    %c1_18 = arith.constant 1 : index
    %c55 = arith.constant 55 : index
    %13 = vector.load %arg20[%c1_18, %c55] : memref<36x72xf32, #tpu.memory_space<vmem>>, vector<16x16xf32>
    tpu.vector_store %arg20[%c1_18, %c55], %12 {strides = array<i32>} : memref<36x72xf32, #tpu.memory_space<vmem>>, vector<16x16xf32>,
    %c1_19 = arith.constant 1 : index
    %c0_20 = arith.constant 0 : index
    %c0_21 = arith.constant 0 : index
    %c0_22 = arith.constant 0 : index
    %14 = vector.load %arg0[%c1_19, %c0_20, %c0_21, %c0_22] : memref<2x4x16x16xf32, #tpu.memory_space<vmem>>, vector<1x1x16x16xf32>
    %15 = vector.shape_cast %14 : vector<1x1x16x16xf32> to vector<16x16xf32>
    %c19_23 = arith.constant 19 : index
    %c1_24 = arith.constant 1 : index
    %16 = vector.load %arg20[%c19_23, %c1_24] : memref<36x72xf32, #tpu.memory_space<vmem>>, vector<16x16xf32>
    tpu.vector_store %arg20[%c19_23, %c1_24], %15 {strides = array<i32>} : memref<36x72xf32, #tpu.memory_space<vmem>>, vector<16x16xf32>,
    %c1_25 = arith.constant 1 : index
    %c1_26 = arith.constant 1 : index
    %c0_27 = arith.constant 0 : index
    %c0_28 = arith.constant 0 : index
    %17 = vector.load %arg0[%c1_25, %c1_26, %c0_27, %c0_28] : memref<2x4x16x16xf32, #tpu.memory_space<vmem>>, vector<1x1x16x16xf32>
    %18 = vector.shape_cast %17 : vector<1x1x16x16xf32> to vector<16x16xf32>
    %c19_29 = arith.constant 19 : index
    %c19_30 = arith.constant 19 : index
    %19 = vector.load %arg20[%c19_29, %c19_30] : memref<36x72xf32, #tpu.memory_space<vmem>>, vector<16x16xf32>
    tpu.vector_store %arg20[%c19_29, %c19_30], %18 {strides = array<i32>} : memref<36x72xf32, #tpu.memory_space<vmem>>, vector<16x16xf32>,
    %c1_31 = arith.constant 1 : index
    %c2_32 = arith.constant 2 : index
    %c0_33 = arith.constant 0 : index
    %c0_34 = arith.constant 0 : index
    %20 = vector.load %arg0[%c1_31, %c2_32, %c0_33, %c0_34] : memref<2x4x16x16xf32, #tpu.memory_space<vmem>>, vector<1x1x16x16xf32>
    %21 = vector.shape_cast %20 : vector<1x1x16x16xf32> to vector<16x16xf32>
    %c19_35 = arith.constant 19 : index
    %c37_36 = arith.constant 37 : index
    %22 = vector.load %arg20[%c19_35, %c37_36] : memref<36x72xf32, #tpu.memory_space<vmem>>, vector<16x16xf32>
    tpu.vector_store %arg20[%c19_35, %c37_36], %21 {strides = array<i32>} : memref<36x72xf32, #tpu.memory_space<vmem>>, vector<16x16xf32>,
    %c1_37 = arith.constant 1 : index
    %c3_38 = arith.constant 3 : index
    %c0_39 = arith.constant 0 : index
    %c0_40 = arith.constant 0 : index
    %23 = vector.load %arg0[%c1_37, %c3_38, %c0_39, %c0_40] : memref<2x4x16x16xf32, #tpu.memory_space<vmem>>, vector<1x1x16x16xf32>
    %24 = vector.shape_cast %23 : vector<1x1x16x16xf32> to vector<16x16xf32>
    %c19_41 = arith.constant 19 : index
    %c55_42 = arith.constant 55 : index
    %25 = vector.load %arg20[%c19_41, %c55_42] : memref<36x72xf32, #tpu.memory_space<vmem>>, vector<16x16xf32>
    tpu.vector_store %arg20[%c19_41, %c55_42], %24 {strides = array<i32>} : memref<36x72xf32, #tpu.memory_space<vmem>>, vector<16x16xf32>,
    %c0_43 = arith.constant 0 : index
    %c0_44 = arith.constant 0 : index
    %26 = vector.load %arg20[%c0_43, %c0_44] : memref<36x72xf32, #tpu.memory_space<vmem>>, vector<36x72xf32>
    %27 = arith.truncf %26 : vector<36x72xf32> to vector<36x72xbf16>
    %c0_45 = arith.constant 0 : index
    %c0_46 = arith.constant 0 : index
    %28 = vector.load %arg1[%c0_45, %c0_46] : memref<96x36xbf16, #tpu.memory_space<vmem>>, vector<96x36xbf16>
    %cst_47 = arith.constant dense<0.000000e+00> : vector<96x72xf32>
    %29 = tpu.matmul %28, %27, %cst_47 {dimension_numbers = #tpu.dot_dimension_numbers<[1], [0], [0], [1], [0, 0, 1, 1], [], []>} : vector<96x36xbf16>, vector<36x72xbf16>, vector<96x72xf32> -> vector<96x72xf32>
    %cst_48 = arith.constant 0.000000e+00 : f32
    %30 = vector.broadcast %cst_48 : f32 to vector<32x128xf32>
    %31 = vector.extract_strided_slice %29 {offsets = [0, 0], sizes = [32, 72], strides = [1, 1]} : vector<96x72xf32> to vector<32x72xf32>
    %32 = arith.truncf %31 : vector<32x72xf32> to vector<32x72xbf16>
    %c0_49 = arith.constant 0 : index
    %c0_50 = arith.constant 0 : index
    %c0_51 = arith.constant 0 : index
    %33 = vector.load %arg2[%c0_49, %c0_50, %c0_51] : memref<3x72x128xbf16, #tpu.memory_space<vmem>>, vector<1x72x128xbf16>
    %34 = vector.shape_cast %33 : vector<1x72x128xbf16> to vector<72x128xbf16>
    %cst_52 = arith.constant dense<0.000000e+00> : vector<32x128xf32>
    %35 = tpu.matmul %32, %34, %cst_52 {dimension_numbers = #tpu.dot_dimension_numbers<[1], [0], [0], [1], [0, 0, 1, 1], [], []>} : vector<32x72xbf16>, vector<72x128xbf16>, vector<32x128xf32> -> vector<32x128xf32>
    %36 = arith.addf %30, %35 : vector<32x128xf32>
    %37 = vector.extract_strided_slice %29 {offsets = [32, 0], sizes = [32, 72], strides = [1, 1]} : vector<96x72xf32> to vector<32x72xf32>
    %38 = arith.truncf %37 : vector<32x72xf32> to vector<32x72xbf16>
    %c1_53 = arith.constant 1 : index
    %c0_54 = arith.constant 0 : index
    %c0_55 = arith.constant 0 : index
    %39 = vector.load %arg2[%c1_53, %c0_54, %c0_55] : memref<3x72x128xbf16, #tpu.memory_space<vmem>>, vector<1x72x128xbf16>
    %40 = vector.shape_cast %39 : vector<1x72x128xbf16> to vector<72x128xbf16>
    %cst_56 = arith.constant dense<0.000000e+00> : vector<32x128xf32>
    %41 = tpu.matmul %38, %40, %cst_56 {dimension_numbers = #tpu.dot_dimension_numbers<[1], [0], [0], [1], [0, 0, 1, 1], [], []>} : vector<32x72xbf16>, vector<72x128xbf16>, vector<32x128xf32> -> vector<32x128xf32>
    %42 = arith.addf %36, %41 : vector<32x128xf32>
    %43 = vector.extract_strided_slice %29 {offsets = [64, 0], sizes = [32, 72], strides = [1, 1]} : vector<96x72xf32> to vector<32x72xf32>
    %44 = arith.truncf %43 : vector<32x72xf32> to vector<32x72xbf16>
    %c2_57 = arith.constant 2 : index
    %c0_58 = arith.constant 0 : index
    %c0_59 = arith.constant 0 : index
    %45 = vector.load %arg2[%c2_57, %c0_58, %c0_59] : memref<3x72x128xbf16, #tpu.memory_space<vmem>>, vector<1x72x128xbf16>
    %46 = vector.shape_cast %45 : vector<1x72x128xbf16> to vector<72x128xbf16>
    %cst_60 = arith.constant dense<0.000000e+00> : vector<32x128xf32>
    %47 = tpu.matmul %44, %46, %cst_60 {dimension_numbers = #tpu.dot_dimension_numbers<[1], [0], [0], [1], [0, 0, 1, 1], [], []>} : vector<32x72xbf16>, vector<72x128xbf16>, vector<32x128xf32> -> vector<32x128xf32>
    %48 = arith.addf %42, %47 : vector<32x128xf32>
    %cst_61 = arith.constant 1.000000e+00 : f32
    %49 = vector.broadcast %cst_61 : f32 to vector<1x32xf32>
    %cst_62 = arith.constant dense<0.000000e+00> : vector<1x128xf32>
    %50 = tpu.matmul %49, %48, %cst_62 {dimension_numbers = #tpu.dot_dimension_numbers<[1], [0], [0], [1], [0, 0, 1, 1], [], []>} : vector<1x32xf32>, vector<32x128xf32>, vector<1x128xf32> -> vector<1x128xf32>
    %c0_63 = arith.constant 0 : index
    %c0_64 = arith.constant 0 : index
    %51 = vector.load %arg3[%c0_63, %c0_64] : memref<128x128xf32, #tpu.memory_space<vmem>>, vector<128x128xf32>
    %cst_65 = arith.constant dense<0.000000e+00> : vector<1x128xf32>
    %52 = tpu.matmul %50, %51, %cst_65 {dimension_numbers = #tpu.dot_dimension_numbers<[1], [0], [0], [1], [0, 0, 1, 1], [], []>} : vector<1x128xf32>, vector<128x128xf32>, vector<1x128xf32> -> vector<1x128xf32>
    %53 = vector.broadcast %52 : vector<1x128xf32> to vector<32x128xf32>
    %54 = arith.subf %48, %53 : vector<32x128xf32>
    %55 = arith.mulf %54, %54 : vector<32x128xf32>
    %cst_66 = arith.constant dense<0.000000e+00> : vector<1x128xf32>
    %56 = tpu.matmul %49, %55, %cst_66 {dimension_numbers = #tpu.dot_dimension_numbers<[1], [0], [0], [1], [0, 0, 1, 1], [], []>} : vector<1x32xf32>, vector<32x128xf32>, vector<1x128xf32> -> vector<1x128xf32>
    %c0_67 = arith.constant 0 : index
    %c0_68 = arith.constant 0 : index
    %57 = vector.load %arg3[%c0_67, %c0_68] : memref<128x128xf32, #tpu.memory_space<vmem>>, vector<128x128xf32>
    %cst_69 = arith.constant dense<0.000000e+00> : vector<1x128xf32>
    %58 = tpu.matmul %56, %57, %cst_69 {dimension_numbers = #tpu.dot_dimension_numbers<[1], [0], [0], [1], [0, 0, 1, 1], [], []>} : vector<1x128xf32>, vector<128x128xf32>, vector<1x128xf32> -> vector<1x128xf32>
    %c0_70 = arith.constant 0 : index
    %c0_71 = arith.constant 0 : index
    %59 = vector.load %arg4[%c0_70, %c0_71] : memref<1x128xf32, #tpu.memory_space<vmem>>, vector<1x128xf32>
    %cst_72 = arith.constant 9.99999974E-6 : f32
    %60 = vector.broadcast %cst_72 : f32 to vector<1x128xf32>
    %61 = arith.addf %58, %60 : vector<1x128xf32>
    %62 = math.rsqrt %61 : vector<1x128xf32>
    %63 = arith.mulf %59, %62 : vector<1x128xf32>
    %64 = vector.broadcast %63 : vector<1x128xf32> to vector<32x128xf32>
    %65 = arith.mulf %54, %64 : vector<32x128xf32>
    %c0_73 = arith.constant 0 : index
    %c0_74 = arith.constant 0 : index
    %66 = vector.load %arg5[%c0_73, %c0_74] : memref<1x128xf32, #tpu.memory_space<vmem>>, vector<1x128xf32>
    %67 = vector.broadcast %66 : vector<1x128xf32> to vector<32x128xf32>
    %68 = arith.addf %65, %67 : vector<32x128xf32>
    %c0_75 = arith.constant 0 : index
    %69 = memref.load %arg16[%c0_75] : memref<3xf32, #tpu.memory_space<smem>>
    %cst_76 = arith.constant 0.000000e+00 : f32
    %70 = vector.broadcast %cst_76 : f32 to vector<32x128xf32>
    %71 = arith.cmpf ogt, %68, %70 : vector<32x128xf32>
    %72 = vector.broadcast %69 : f32 to vector<32x128xf32>
    %73 = arith.mulf %72, %68 : vector<32x128xf32>
    %74 = arith.select %71, %68, %73 : vector<32x128xi1>, vector<32x128xf32>
    %75 = vector.extract_strided_slice %74 {offsets = [0, 0], sizes = [16, 16], strides = [1, 1]} : vector<32x128xf32> to vector<16x16xf32>
    %c0_77 = arith.constant 0 : index
    %c0_78 = arith.constant 0 : index
    %c0_79 = arith.constant 0 : index
    %c0_80 = arith.constant 0 : index
    %76 = vector.load %arg17[%c0_77, %c0_78, %c0_79, %c0_80] : memref<2x8x16x16xf32, #tpu.memory_space<vmem>>, vector<1x1x16x16xf32>
    %77 = vector.shape_cast %76 : vector<1x1x16x16xf32> to vector<16x16xf32>
    %78 = vector.shape_cast %75 : vector<16x16xf32> to vector<1x1x16x16xf32>
    tpu.vector_store %arg17[%c0_77, %c0_78, %c0_79, %c0_80], %78 {strides = array<i32>} : memref<2x8x16x16xf32, #tpu.memory_space<vmem>>, vector<1x1x16x16xf32>,
    %79 = vector.extract_strided_slice %74 {offsets = [0, 16], sizes = [16, 16], strides = [1, 1]} : vector<32x128xf32> to vector<16x16xf32>
    %c0_81 = arith.constant 0 : index
    %c1_82 = arith.constant 1 : index
    %c0_83 = arith.constant 0 : index
    %c0_84 = arith.constant 0 : index
    %80 = vector.load %arg17[%c0_81, %c1_82, %c0_83, %c0_84] : memref<2x8x16x16xf32, #tpu.memory_space<vmem>>, vector<1x1x16x16xf32>
    %81 = vector.shape_cast %80 : vector<1x1x16x16xf32> to vector<16x16xf32>
    %82 = vector.shape_cast %79 : vector<16x16xf32> to vector<1x1x16x16xf32>
    tpu.vector_store %arg17[%c0_81, %c1_82, %c0_83, %c0_84], %82 {strides = array<i32>} : memref<2x8x16x16xf32, #tpu.memory_space<vmem>>, vector<1x1x16x16xf32>,
    %83 = vector.extract_strided_slice %74 {offsets = [0, 32], sizes = [16, 16], strides = [1, 1]} : vector<32x128xf32> to vector<16x16xf32>
    %c0_85 = arith.constant 0 : index
    %c2_86 = arith.constant 2 : index
    %c0_87 = arith.constant 0 : index
    %c0_88 = arith.constant 0 : index
    %84 = vector.load %arg17[%c0_85, %c2_86, %c0_87, %c0_88] : memref<2x8x16x16xf32, #tpu.memory_space<vmem>>, vector<1x1x16x16xf32>
    %85 = vector.shape_cast %84 : vector<1x1x16x16xf32> to vector<16x16xf32>
    %86 = vector.shape_cast %83 : vector<16x16xf32> to vector<1x1x16x16xf32>
    tpu.vector_store %arg17[%c0_85, %c2_86, %c0_87, %c0_88], %86 {strides = array<i32>} : memref<2x8x16x16xf32, #tpu.memory_space<vmem>>, vector<1x1x16x16xf32>,
    %87 = vector.extract_strided_slice %74 {offsets = [0, 48], sizes = [16, 16], strides = [1, 1]} : vector<32x128xf32> to vector<16x16xf32>
    %c0_89 = arith.constant 0 : index
    %c3_90 = arith.constant 3 : index
    %c0_91 = arith.constant 0 : index
    %c0_92 = arith.constant 0 : index
    %88 = vector.load %arg17[%c0_89, %c3_90, %c0_91, %c0_92] : memref<2x8x16x16xf32, #tpu.memory_space<vmem>>, vector<1x1x16x16xf32>
    %89 = vector.shape_cast %88 : vector<1x1x16x16xf32> to vector<16x16xf32>
    %90 = vector.shape_cast %87 : vector<16x16xf32> to vector<1x1x16x16xf32>
    tpu.vector_store %arg17[%c0_89, %c3_90, %c0_91, %c0_92], %90 {strides = array<i32>} : memref<2x8x16x16xf32, #tpu.memory_space<vmem>>, vector<1x1x16x16xf32>,
    %91 = vector.extract_strided_slice %74 {offsets = [0, 64], sizes = [16, 16], strides = [1, 1]} : vector<32x128xf32> to vector<16x16xf32>
    %c0_93 = arith.constant 0 : index
    %c4 = arith.constant 4 : index
    %c0_94 = arith.constant 0 : index
    %c0_95 = arith.constant 0 : index
    %92 = vector.load %arg17[%c0_93, %c4, %c0_94, %c0_95] : memref<2x8x16x16xf32, #tpu.memory_space<vmem>>, vector<1x1x16x16xf32>
    %93 = vector.shape_cast %92 : vector<1x1x16x16xf32> to vector<16x16xf32>
    %94 = vector.shape_cast %91 : vector<16x16xf32> to vector<1x1x16x16xf32>
    tpu.vector_store %arg17[%c0_93, %c4, %c0_94, %c0_95], %94 {strides = array<i32>} : memref<2x8x16x16xf32, #tpu.memory_space<vmem>>, vector<1x1x16x16xf32>,
    %95 = vector.extract_strided_slice %74 {offsets = [0, 80], sizes = [16, 16], strides = [1, 1]} : vector<32x128xf32> to vector<16x16xf32>
    %c0_96 = arith.constant 0 : index
    %c5 = arith.constant 5 : index
    %c0_97 = arith.constant 0 : index
    %c0_98 = arith.constant 0 : index
    %96 = vector.load %arg17[%c0_96, %c5, %c0_97, %c0_98] : memref<2x8x16x16xf32, #tpu.memory_space<vmem>>, vector<1x1x16x16xf32>
    %97 = vector.shape_cast %96 : vector<1x1x16x16xf32> to vector<16x16xf32>
    %98 = vector.shape_cast %95 : vector<16x16xf32> to vector<1x1x16x16xf32>
    tpu.vector_store %arg17[%c0_96, %c5, %c0_97, %c0_98], %98 {strides = array<i32>} : memref<2x8x16x16xf32, #tpu.memory_space<vmem>>, vector<1x1x16x16xf32>,
    %99 = vector.extract_strided_slice %74 {offsets = [0, 96], sizes = [16, 16], strides = [1, 1]} : vector<32x128xf32> to vector<16x16xf32>
    %c0_99 = arith.constant 0 : index
    %c6 = arith.constant 6 : index
    %c0_100 = arith.constant 0 : index
    %c0_101 = arith.constant 0 : index
    %100 = vector.load %arg17[%c0_99, %c6, %c0_100, %c0_101] : memref<2x8x16x16xf32, #tpu.memory_space<vmem>>, vector<1x1x16x16xf32>
    %101 = vector.shape_cast %100 : vector<1x1x16x16xf32> to vector<16x16xf32>
    %102 = vector.shape_cast %99 : vector<16x16xf32> to vector<1x1x16x16xf32>
    tpu.vector_store %arg17[%c0_99, %c6, %c0_100, %c0_101], %102 {strides = array<i32>} : memref<2x8x16x16xf32, #tpu.memory_space<vmem>>, vector<1x1x16x16xf32>,
    %103 = vector.extract_strided_slice %74 {offsets = [0, 112], sizes = [16, 16], strides = [1, 1]} : vector<32x128xf32> to vector<16x16xf32>
    %c0_102 = arith.constant 0 : index
    %c7 = arith.constant 7 : index
    %c0_103 = arith.constant 0 : index
    %c0_104 = arith.constant 0 : index
    %104 = vector.load %arg17[%c0_102, %c7, %c0_103, %c0_104] : memref<2x8x16x16xf32, #tpu.memory_space<vmem>>, vector<1x1x16x16xf32>
    %105 = vector.shape_cast %104 : vector<1x1x16x16xf32> to vector<16x16xf32>
    %106 = vector.shape_cast %103 : vector<16x16xf32> to vector<1x1x16x16xf32>
    tpu.vector_store %arg17[%c0_102, %c7, %c0_103, %c0_104], %106 {strides = array<i32>} : memref<2x8x16x16xf32, #tpu.memory_space<vmem>>, vector<1x1x16x16xf32>,
    %107 = vector.extract_strided_slice %74 {offsets = [16, 0], sizes = [16, 16], strides = [1, 1]} : vector<32x128xf32> to vector<16x16xf32>
    %c1_105 = arith.constant 1 : index
    %c0_106 = arith.constant 0 : index
    %c0_107 = arith.constant 0 : index
    %c0_108 = arith.constant 0 : index
    %108 = vector.load %arg17[%c1_105, %c0_106, %c0_107, %c0_108] : memref<2x8x16x16xf32, #tpu.memory_space<vmem>>, vector<1x1x16x16xf32>
    %109 = vector.shape_cast %108 : vector<1x1x16x16xf32> to vector<16x16xf32>
    %110 = vector.shape_cast %107 : vector<16x16xf32> to vector<1x1x16x16xf32>
    tpu.vector_store %arg17[%c1_105, %c0_106, %c0_107, %c0_108], %110 {strides = array<i32>} : memref<2x8x16x16xf32, #tpu.memory_space<vmem>>, vector<1x1x16x16xf32>,
    %111 = vector.extract_strided_slice %74 {offsets = [16, 16], sizes = [16, 16], strides = [1, 1]} : vector<32x128xf32> to vector<16x16xf32>
    %c1_109 = arith.constant 1 : index
    %c1_110 = arith.constant 1 : index
    %c0_111 = arith.constant 0 : index
    %c0_112 = arith.constant 0 : index
    %112 = vector.load %arg17[%c1_109, %c1_110, %c0_111, %c0_112] : memref<2x8x16x16xf32, #tpu.memory_space<vmem>>, vector<1x1x16x16xf32>
    %113 = vector.shape_cast %112 : vector<1x1x16x16xf32> to vector<16x16xf32>
    %114 = vector.shape_cast %111 : vector<16x16xf32> to vector<1x1x16x16xf32>
    tpu.vector_store %arg17[%c1_109, %c1_110, %c0_111, %c0_112], %114 {strides = array<i32>} : memref<2x8x16x16xf32, #tpu.memory_space<vmem>>, vector<1x1x16x16xf32>,
    %115 = vector.extract_strided_slice %74 {offsets = [16, 32], sizes = [16, 16], strides = [1, 1]} : vector<32x128xf32> to vector<16x16xf32>
    %c1_113 = arith.constant 1 : index
    %c2_114 = arith.constant 2 : index
    %c0_115 = arith.constant 0 : index
    %c0_116 = arith.constant 0 : index
    %116 = vector.load %arg17[%c1_113, %c2_114, %c0_115, %c0_116] : memref<2x8x16x16xf32, #tpu.memory_space<vmem>>, vector<1x1x16x16xf32>
    %117 = vector.shape_cast %116 : vector<1x1x16x16xf32> to vector<16x16xf32>
    %118 = vector.shape_cast %115 : vector<16x16xf32> to vector<1x1x16x16xf32>
    tpu.vector_store %arg17[%c1_113, %c2_114, %c0_115, %c0_116], %118 {strides = array<i32>} : memref<2x8x16x16xf32, #tpu.memory_space<vmem>>, vector<1x1x16x16xf32>,
    %119 = vector.extract_strided_slice %74 {offsets = [16, 48], sizes = [16, 16], strides = [1, 1]} : vector<32x128xf32> to vector<16x16xf32>
    %c1_117 = arith.constant 1 : index
    %c3_118 = arith.constant 3 : index
    %c0_119 = arith.constant 0 : index
    %c0_120 = arith.constant 0 : index
    %120 = vector.load %arg17[%c1_117, %c3_118, %c0_119, %c0_120] : memref<2x8x16x16xf32, #tpu.memory_space<vmem>>, vector<1x1x16x16xf32>
    %121 = vector.shape_cast %120 : vector<1x1x16x16xf32> to vector<16x16xf32>
    %122 = vector.shape_cast %119 : vector<16x16xf32> to vector<1x1x16x16xf32>
    tpu.vector_store %arg17[%c1_117, %c3_118, %c0_119, %c0_120], %122 {strides = array<i32>} : memref<2x8x16x16xf32, #tpu.memory_space<vmem>>, vector<1x1x16x16xf32>,
    %123 = vector.extract_strided_slice %74 {offsets = [16, 64], sizes = [16, 16], strides = [1, 1]} : vector<32x128xf32> to vector<16x16xf32>
    %c1_121 = arith.constant 1 : index
    %c4_122 = arith.constant 4 : index
    %c0_123 = arith.constant 0 : index
    %c0_124 = arith.constant 0 : index
    %124 = vector.load %arg17[%c1_121, %c4_122, %c0_123, %c0_124] : memref<2x8x16x16xf32, #tpu.memory_space<vmem>>, vector<1x1x16x16xf32>
    %125 = vector.shape_cast %124 : vector<1x1x16x16xf32> to vector<16x16xf32>
    %126 = vector.shape_cast %123 : vector<16x16xf32> to vector<1x1x16x16xf32>
    tpu.vector_store %arg17[%c1_121, %c4_122, %c0_123, %c0_124], %126 {strides = array<i32>} : memref<2x8x16x16xf32, #tpu.memory_space<vmem>>, vector<1x1x16x16xf32>,
    %127 = vector.extract_strided_slice %74 {offsets = [16, 80], sizes = [16, 16], strides = [1, 1]} : vector<32x128xf32> to vector<16x16xf32>
    %c1_125 = arith.constant 1 : index
    %c5_126 = arith.constant 5 : index
    %c0_127 = arith.constant 0 : index
    %c0_128 = arith.constant 0 : index
    %128 = vector.load %arg17[%c1_125, %c5_126, %c0_127, %c0_128] : memref<2x8x16x16xf32, #tpu.memory_space<vmem>>, vector<1x1x16x16xf32>
    %129 = vector.shape_cast %128 : vector<1x1x16x16xf32> to vector<16x16xf32>
    %130 = vector.shape_cast %127 : vector<16x16xf32> to vector<1x1x16x16xf32>
    tpu.vector_store %arg17[%c1_125, %c5_126, %c0_127, %c0_128], %130 {strides = array<i32>} : memref<2x8x16x16xf32, #tpu.memory_space<vmem>>, vector<1x1x16x16xf32>,
    %131 = vector.extract_strided_slice %74 {offsets = [16, 96], sizes = [16, 16], strides = [1, 1]} : vector<32x128xf32> to vector<16x16xf32>
    %c1_129 = arith.constant 1 : index
    %c6_130 = arith.constant 6 : index
    %c0_131 = arith.constant 0 : index
    %c0_132 = arith.constant 0 : index
    %132 = vector.load %arg17[%c1_129, %c6_130, %c0_131, %c0_132] : memref<2x8x16x16xf32, #tpu.memory_space<vmem>>, vector<1x1x16x16xf32>
    %133 = vector.shape_cast %132 : vector<1x1x16x16xf32> to vector<16x16xf32>
    %134 = vector.shape_cast %131 : vector<16x16xf32> to vector<1x1x16x16xf32>
    tpu.vector_store %arg17[%c1_129, %c6_130, %c0_131, %c0_132], %134 {strides = array<i32>} : memref<2x8x16x16xf32, #tpu.memory_space<vmem>>, vector<1x1x16x16xf32>,
    %135 = vector.extract_strided_slice %74 {offsets = [16, 112], sizes = [16, 16], strides = [1, 1]} : vector<32x128xf32> to vector<16x16xf32>
    %c1_133 = arith.constant 1 : index
    %c7_134 = arith.constant 7 : index
    %c0_135 = arith.constant 0 : index
    %c0_136 = arith.constant 0 : index
    %136 = vector.load %arg17[%c1_133, %c7_134, %c0_135, %c0_136] : memref<2x8x16x16xf32, #tpu.memory_space<vmem>>, vector<1x1x16x16xf32>
    %137 = vector.shape_cast %136 : vector<1x1x16x16xf32> to vector<16x16xf32>
    %138 = vector.shape_cast %135 : vector<16x16xf32> to vector<1x1x16x16xf32>
    tpu.vector_store %arg17[%c1_133, %c7_134, %c0_135, %c0_136], %138 {strides = array<i32>} : memref<2x8x16x16xf32, #tpu.memory_space<vmem>>, vector<1x1x16x16xf32>,
    %cst_137 = arith.constant 0.000000e+00 : f32
    %139 = vector.broadcast %cst_137 : f32 to vector<36x144xf32>
    %c0_138 = arith.constant 0 : index
    %c0_139 = arith.constant 0 : index
    %140 = vector.load %arg21[%c0_138, %c0_139] : memref<36x144xf32, #tpu.memory_space<vmem>>, vector<36x144xf32>
    tpu.vector_store %arg21[%c0_138, %c0_139], %139 {strides = array<i32>} : memref<36x144xf32, #tpu.memory_space<vmem>>, vector<36x144xf32>,
    %141 = vector.extract_strided_slice %74 {offsets = [0, 0], sizes = [16, 16], strides = [1, 1]} : vector<32x128xf32> to vector<16x16xf32>
    %c1_140 = arith.constant 1 : index
    %c1_141 = arith.constant 1 : index
    %142 = vector.load %arg21[%c1_140, %c1_141] : memref<36x144xf32, #tpu.memory_space<vmem>>, vector<16x16xf32>
    tpu.vector_store %arg21[%c1_140, %c1_141], %141 {strides = array<i32>} : memref<36x144xf32, #tpu.memory_space<vmem>>, vector<16x16xf32>,
    %143 = vector.extract_strided_slice %74 {offsets = [0, 16], sizes = [16, 16], strides = [1, 1]} : vector<32x128xf32> to vector<16x16xf32>
    %c1_142 = arith.constant 1 : index
    %c19_143 = arith.constant 19 : index
    %144 = vector.load %arg21[%c1_142, %c19_143] : memref<36x144xf32, #tpu.memory_space<vmem>>, vector<16x16xf32>
    tpu.vector_store %arg21[%c1_142, %c19_143], %143 {strides = array<i32>} : memref<36x144xf32, #tpu.memory_space<vmem>>, vector<16x16xf32>,
    %145 = vector.extract_strided_slice %74 {offsets = [0, 32], sizes = [16, 16], strides = [1, 1]} : vector<32x128xf32> to vector<16x16xf32>
    %c1_144 = arith.constant 1 : index
    %c37_145 = arith.constant 37 : index
    %146 = vector.load %arg21[%c1_144, %c37_145] : memref<36x144xf32, #tpu.memory_space<vmem>>, vector<16x16xf32>
    tpu.vector_store %arg21[%c1_144, %c37_145], %145 {strides = array<i32>} : memref<36x144xf32, #tpu.memory_space<vmem>>, vector<16x16xf32>,
    %147 = vector.extract_strided_slice %74 {offsets = [0, 48], sizes = [16, 16], strides = [1, 1]} : vector<32x128xf32> to vector<16x16xf32>
    %c1_146 = arith.constant 1 : index
    %c55_147 = arith.constant 55 : index
    %148 = vector.load %arg21[%c1_146, %c55_147] : memref<36x144xf32, #tpu.memory_space<vmem>>, vector<16x16xf32>
    tpu.vector_store %arg21[%c1_146, %c55_147], %147 {strides = array<i32>} : memref<36x144xf32, #tpu.memory_space<vmem>>, vector<16x16xf32>,
    %149 = vector.extract_strided_slice %74 {offsets = [0, 64], sizes = [16, 16], strides = [1, 1]} : vector<32x128xf32> to vector<16x16xf32>
    %c1_148 = arith.constant 1 : index
    %c73 = arith.constant 73 : index
    %150 = vector.load %arg21[%c1_148, %c73] : memref<36x144xf32, #tpu.memory_space<vmem>>, vector<16x16xf32>
    tpu.vector_store %arg21[%c1_148, %c73], %149 {strides = array<i32>} : memref<36x144xf32, #tpu.memory_space<vmem>>, vector<16x16xf32>,
    %151 = vector.extract_strided_slice %74 {offsets = [0, 80], sizes = [16, 16], strides = [1, 1]} : vector<32x128xf32> to vector<16x16xf32>
    %c1_149 = arith.constant 1 : index
    %c91 = arith.constant 91 : index
    %152 = vector.load %arg21[%c1_149, %c91] : memref<36x144xf32, #tpu.memory_space<vmem>>, vector<16x16xf32>
    tpu.vector_store %arg21[%c1_149, %c91], %151 {strides = array<i32>} : memref<36x144xf32, #tpu.memory_space<vmem>>, vector<16x16xf32>,
    %153 = vector.extract_strided_slice %74 {offsets = [0, 96], sizes = [16, 16], strides = [1, 1]} : vector<32x128xf32> to vector<16x16xf32>
    %c1_150 = arith.constant 1 : index
    %c109 = arith.constant 109 : index
    %154 = vector.load %arg21[%c1_150, %c109] : memref<36x144xf32, #tpu.memory_space<vmem>>, vector<16x16xf32>
    tpu.vector_store %arg21[%c1_150, %c109], %153 {strides = array<i32>} : memref<36x144xf32, #tpu.memory_space<vmem>>, vector<16x16xf32>,
    %155 = vector.extract_strided_slice %74 {offsets = [0, 112], sizes = [16, 16], strides = [1, 1]} : vector<32x128xf32> to vector<16x16xf32>
    %c1_151 = arith.constant 1 : index
    %c127 = arith.constant 127 : index
    %156 = vector.load %arg21[%c1_151, %c127] : memref<36x144xf32, #tpu.memory_space<vmem>>, vector<16x16xf32>
    tpu.vector_store %arg21[%c1_151, %c127], %155 {strides = array<i32>} : memref<36x144xf32, #tpu.memory_space<vmem>>, vector<16x16xf32>,
    %157 = vector.extract_strided_slice %74 {offsets = [16, 0], sizes = [16, 16], strides = [1, 1]} : vector<32x128xf32> to vector<16x16xf32>
    %c19_152 = arith.constant 19 : index
    %c1_153 = arith.constant 1 : index
    %158 = vector.load %arg21[%c19_152, %c1_153] : memref<36x144xf32, #tpu.memory_space<vmem>>, vector<16x16xf32>
    tpu.vector_store %arg21[%c19_152, %c1_153], %157 {strides = array<i32>} : memref<36x144xf32, #tpu.memory_space<vmem>>, vector<16x16xf32>,
    %159 = vector.extract_strided_slice %74 {offsets = [16, 16], sizes = [16, 16], strides = [1, 1]} : vector<32x128xf32> to vector<16x16xf32>
    %c19_154 = arith.constant 19 : index
    %c19_155 = arith.constant 19 : index
    %160 = vector.load %arg21[%c19_154, %c19_155] : memref<36x144xf32, #tpu.memory_space<vmem>>, vector<16x16xf32>
    tpu.vector_store %arg21[%c19_154, %c19_155], %159 {strides = array<i32>} : memref<36x144xf32, #tpu.memory_space<vmem>>, vector<16x16xf32>,
    %161 = vector.extract_strided_slice %74 {offsets = [16, 32], sizes = [16, 16], strides = [1, 1]} : vector<32x128xf32> to vector<16x16xf32>
    %c19_156 = arith.constant 19 : index
    %c37_157 = arith.constant 37 : index
    %162 = vector.load %arg21[%c19_156, %c37_157] : memref<36x144xf32, #tpu.memory_space<vmem>>, vector<16x16xf32>
    tpu.vector_store %arg21[%c19_156, %c37_157], %161 {strides = array<i32>} : memref<36x144xf32, #tpu.memory_space<vmem>>, vector<16x16xf32>,
    %163 = vector.extract_strided_slice %74 {offsets = [16, 48], sizes = [16, 16], strides = [1, 1]} : vector<32x128xf32> to vector<16x16xf32>
    %c19_158 = arith.constant 19 : index
    %c55_159 = arith.constant 55 : index
    %164 = vector.load %arg21[%c19_158, %c55_159] : memref<36x144xf32, #tpu.memory_space<vmem>>, vector<16x16xf32>
    tpu.vector_store %arg21[%c19_158, %c55_159], %163 {strides = array<i32>} : memref<36x144xf32, #tpu.memory_space<vmem>>, vector<16x16xf32>,
    %165 = vector.extract_strided_slice %74 {offsets = [16, 64], sizes = [16, 16], strides = [1, 1]} : vector<32x128xf32> to vector<16x16xf32>
    %c19_160 = arith.constant 19 : index
    %c73_161 = arith.constant 73 : index
    %166 = vector.load %arg21[%c19_160, %c73_161] : memref<36x144xf32, #tpu.memory_space<vmem>>, vector<16x16xf32>
    tpu.vector_store %arg21[%c19_160, %c73_161], %165 {strides = array<i32>} : memref<36x144xf32, #tpu.memory_space<vmem>>, vector<16x16xf32>,
    %167 = vector.extract_strided_slice %74 {offsets = [16, 80], sizes = [16, 16], strides = [1, 1]} : vector<32x128xf32> to vector<16x16xf32>
    %c19_162 = arith.constant 19 : index
    %c91_163 = arith.constant 91 : index
    %168 = vector.load %arg21[%c19_162, %c91_163] : memref<36x144xf32, #tpu.memory_space<vmem>>, vector<16x16xf32>
    tpu.vector_store %arg21[%c19_162, %c91_163], %167 {strides = array<i32>} : memref<36x144xf32, #tpu.memory_space<vmem>>, vector<16x16xf32>,
    %169 = vector.extract_strided_slice %74 {offsets = [16, 96], sizes = [16, 16], strides = [1, 1]} : vector<32x128xf32> to vector<16x16xf32>
    %c19_164 = arith.constant 19 : index
    %c109_165 = arith.constant 109 : index
    %170 = vector.load %arg21[%c19_164, %c109_165] : memref<36x144xf32, #tpu.memory_space<vmem>>, vector<16x16xf32>
    tpu.vector_store %arg21[%c19_164, %c109_165], %169 {strides = array<i32>} : memref<36x144xf32, #tpu.memory_space<vmem>>, vector<16x16xf32>,
    %171 = vector.extract_strided_slice %74 {offsets = [16, 112], sizes = [16, 16], strides = [1, 1]} : vector<32x128xf32> to vector<16x16xf32>
    %c19_166 = arith.constant 19 : index
    %c127_167 = arith.constant 127 : index
    %172 = vector.load %arg21[%c19_166, %c127_167] : memref<36x144xf32, #tpu.memory_space<vmem>>, vector<16x16xf32>
    tpu.vector_store %arg21[%c19_166, %c127_167], %171 {strides = array<i32>} : memref<36x144xf32, #tpu.memory_space<vmem>>, vector<16x16xf32>,
    %c0_168 = arith.constant 0 : index
    %c0_169 = arith.constant 0 : index
    %173 = vector.load %arg21[%c0_168, %c0_169] : memref<36x144xf32, #tpu.memory_space<vmem>>, vector<36x144xf32>
    %174 = arith.truncf %173 : vector<36x144xf32> to vector<36x144xbf16>
    %c0_170 = arith.constant 0 : index
    %c0_171 = arith.constant 0 : index
    %175 = vector.load %arg6[%c0_170, %c0_171] : memref<48x36xbf16, #tpu.memory_space<vmem>>, vector<48x36xbf16>
    %cst_172 = arith.constant dense<0.000000e+00> : vector<48x144xf32>
    %176 = tpu.matmul %175, %174, %cst_172 {dimension_numbers = #tpu.dot_dimension_numbers<[1], [0], [0], [1], [0, 0, 1, 1], [], []>} : vector<48x36xbf16>, vector<36x144xbf16>, vector<48x144xf32> -> vector<48x144xf32>
    %cst_173 = arith.constant 0.000000e+00 : f32
    %177 = vector.broadcast %cst_173 : f32 to vector<16x128xf32>
    %178 = vector.extract_strided_slice %176 {offsets = [0, 0], sizes = [16, 144], strides = [1, 1]} : vector<48x144xf32> to vector<16x144xf32>
    %179 = arith.truncf %178 : vector<16x144xf32> to vector<16x144xbf16>
    %c0_174 = arith.constant 0 : index
    %c0_175 = arith.constant 0 : index
    %c0_176 = arith.constant 0 : index
    %180 = vector.load %arg7[%c0_174, %c0_175, %c0_176] : memref<3x144x128xbf16, #tpu.memory_space<vmem>>, vector<1x144x128xbf16>
    %181 = vector.shape_cast %180 : vector<1x144x128xbf16> to vector<144x128xbf16>
    %cst_177 = arith.constant dense<0.000000e+00> : vector<16x128xf32>
    %182 = tpu.matmul %179, %181, %cst_177 {dimension_numbers = #tpu.dot_dimension_numbers<[1], [0], [0], [1], [0, 0, 1, 1], [], []>} : vector<16x144xbf16>, vector<144x128xbf16>, vector<16x128xf32> -> vector<16x128xf32>
    %183 = arith.addf %177, %182 : vector<16x128xf32>
    %184 = vector.extract_strided_slice %176 {offsets = [16, 0], sizes = [16, 144], strides = [1, 1]} : vector<48x144xf32> to vector<16x144xf32>
    %185 = arith.truncf %184 : vector<16x144xf32> to vector<16x144xbf16>
    %c1_178 = arith.constant 1 : index
    %c0_179 = arith.constant 0 : index
    %c0_180 = arith.constant 0 : index
    %186 = vector.load %arg7[%c1_178, %c0_179, %c0_180] : memref<3x144x128xbf16, #tpu.memory_space<vmem>>, vector<1x144x128xbf16>
    %187 = vector.shape_cast %186 : vector<1x144x128xbf16> to vector<144x128xbf16>
    %cst_181 = arith.constant dense<0.000000e+00> : vector<16x128xf32>
    %188 = tpu.matmul %185, %187, %cst_181 {dimension_numbers = #tpu.dot_dimension_numbers<[1], [0], [0], [1], [0, 0, 1, 1], [], []>} : vector<16x144xbf16>, vector<144x128xbf16>, vector<16x128xf32> -> vector<16x128xf32>
    %189 = arith.addf %183, %188 : vector<16x128xf32>
    %190 = vector.extract_strided_slice %176 {offsets = [32, 0], sizes = [16, 144], strides = [1, 1]} : vector<48x144xf32> to vector<16x144xf32>
    %191 = arith.truncf %190 : vector<16x144xf32> to vector<16x144xbf16>
    %c2_182 = arith.constant 2 : index
    %c0_183 = arith.constant 0 : index
    %c0_184 = arith.constant 0 : index
    %192 = vector.load %arg7[%c2_182, %c0_183, %c0_184] : memref<3x144x128xbf16, #tpu.memory_space<vmem>>, vector<1x144x128xbf16>
    %193 = vector.shape_cast %192 : vector<1x144x128xbf16> to vector<144x128xbf16>
    %cst_185 = arith.constant dense<0.000000e+00> : vector<16x128xf32>
    %194 = tpu.matmul %191, %193, %cst_185 {dimension_numbers = #tpu.dot_dimension_numbers<[1], [0], [0], [1], [0, 0, 1, 1], [], []>} : vector<16x144xbf16>, vector<144x128xbf16>, vector<16x128xf32> -> vector<16x128xf32>
    %195 = arith.addf %189, %194 : vector<16x128xf32>
    %cst_186 = arith.constant 1.000000e+00 : f32
    %196 = vector.broadcast %cst_186 : f32 to vector<1x16xf32>
    %cst_187 = arith.constant dense<0.000000e+00> : vector<1x128xf32>
    %197 = tpu.matmul %196, %195, %cst_187 {dimension_numbers = #tpu.dot_dimension_numbers<[1], [0], [0], [1], [0, 0, 1, 1], [], []>} : vector<1x16xf32>, vector<16x128xf32>, vector<1x128xf32> -> vector<1x128xf32>
    %c0_188 = arith.constant 0 : index
    %c0_189 = arith.constant 0 : index
    %198 = vector.load %arg8[%c0_188, %c0_189] : memref<128x128xf32, #tpu.memory_space<vmem>>, vector<128x128xf32>
    %cst_190 = arith.constant dense<0.000000e+00> : vector<1x128xf32>
    %199 = tpu.matmul %197, %198, %cst_190 {dimension_numbers = #tpu.dot_dimension_numbers<[1], [0], [0], [1], [0, 0, 1, 1], [], []>} : vector<1x128xf32>, vector<128x128xf32>, vector<1x128xf32> -> vector<1x128xf32>
    %200 = vector.broadcast %199 : vector<1x128xf32> to vector<16x128xf32>
    %201 = arith.subf %195, %200 : vector<16x128xf32>
    %202 = arith.mulf %201, %201 : vector<16x128xf32>
    %cst_191 = arith.constant dense<0.000000e+00> : vector<1x128xf32>
    %203 = tpu.matmul %196, %202, %cst_191 {dimension_numbers = #tpu.dot_dimension_numbers<[1], [0], [0], [1], [0, 0, 1, 1], [], []>} : vector<1x16xf32>, vector<16x128xf32>, vector<1x128xf32> -> vector<1x128xf32>
    %c0_192 = arith.constant 0 : index
    %c0_193 = arith.constant 0 : index
    %204 = vector.load %arg8[%c0_192, %c0_193] : memref<128x128xf32, #tpu.memory_space<vmem>>, vector<128x128xf32>
    %cst_194 = arith.constant dense<0.000000e+00> : vector<1x128xf32>
    %205 = tpu.matmul %203, %204, %cst_194 {dimension_numbers = #tpu.dot_dimension_numbers<[1], [0], [0], [1], [0, 0, 1, 1], [], []>} : vector<1x128xf32>, vector<128x128xf32>, vector<1x128xf32> -> vector<1x128xf32>
    %c0_195 = arith.constant 0 : index
    %c0_196 = arith.constant 0 : index
    %206 = vector.load %arg9[%c0_195, %c0_196] : memref<1x128xf32, #tpu.memory_space<vmem>>, vector<1x128xf32>
    %cst_197 = arith.constant 9.99999974E-6 : f32
    %207 = vector.broadcast %cst_197 : f32 to vector<1x128xf32>
    %208 = arith.addf %205, %207 : vector<1x128xf32>
    %209 = math.rsqrt %208 : vector<1x128xf32>
    %210 = arith.mulf %206, %209 : vector<1x128xf32>
    %211 = vector.broadcast %210 : vector<1x128xf32> to vector<16x128xf32>
    %212 = arith.mulf %201, %211 : vector<16x128xf32>
    %c0_198 = arith.constant 0 : index
    %c0_199 = arith.constant 0 : index
    %213 = vector.load %arg10[%c0_198, %c0_199] : memref<1x128xf32, #tpu.memory_space<vmem>>, vector<1x128xf32>
    %214 = vector.broadcast %213 : vector<1x128xf32> to vector<16x128xf32>
    %215 = arith.addf %212, %214 : vector<16x128xf32>
    %c1_200 = arith.constant 1 : index
    %216 = memref.load %arg16[%c1_200] : memref<3xf32, #tpu.memory_space<smem>>
    %cst_201 = arith.constant 0.000000e+00 : f32
    %217 = vector.broadcast %cst_201 : f32 to vector<16x128xf32>
    %218 = arith.cmpf ogt, %215, %217 : vector<16x128xf32>
    %219 = vector.broadcast %216 : f32 to vector<16x128xf32>
    %220 = arith.mulf %219, %215 : vector<16x128xf32>
    %221 = arith.select %218, %215, %220 : vector<16x128xi1>, vector<16x128xf32>
    %222 = vector.extract_strided_slice %221 {offsets = [0, 0], sizes = [8, 8], strides = [1, 1]} : vector<16x128xf32> to vector<8x8xf32>
    %c0_202 = arith.constant 0 : index
    %c0_203 = arith.constant 0 : index
    %c0_204 = arith.constant 0 : index
    %c0_205 = arith.constant 0 : index
    %223 = vector.load %arg18[%c0_202, %c0_203, %c0_204, %c0_205] : memref<2x16x8x8xf32, #tpu.memory_space<vmem>>, vector<1x1x8x8xf32>
    %224 = vector.shape_cast %223 : vector<1x1x8x8xf32> to vector<8x8xf32>
    %225 = vector.shape_cast %222 : vector<8x8xf32> to vector<1x1x8x8xf32>
    tpu.vector_store %arg18[%c0_202, %c0_203, %c0_204, %c0_205], %225 {strides = array<i32>} : memref<2x16x8x8xf32, #tpu.memory_space<vmem>>, vector<1x1x8x8xf32>,
    %226 = vector.extract_strided_slice %221 {offsets = [0, 8], sizes = [8, 8], strides = [1, 1]} : vector<16x128xf32> to vector<8x8xf32>
    %c0_206 = arith.constant 0 : index
    %c1_207 = arith.constant 1 : index
    %c0_208 = arith.constant 0 : index
    %c0_209 = arith.constant 0 : index
    %227 = vector.load %arg18[%c0_206, %c1_207, %c0_208, %c0_209] : memref<2x16x8x8xf32, #tpu.memory_space<vmem>>, vector<1x1x8x8xf32>
    %228 = vector.shape_cast %227 : vector<1x1x8x8xf32> to vector<8x8xf32>
    %229 = vector.shape_cast %226 : vector<8x8xf32> to vector<1x1x8x8xf32>
    tpu.vector_store %arg18[%c0_206, %c1_207, %c0_208, %c0_209], %229 {strides = array<i32>} : memref<2x16x8x8xf32, #tpu.memory_space<vmem>>, vector<1x1x8x8xf32>,
    %230 = vector.extract_strided_slice %221 {offsets = [0, 16], sizes = [8, 8], strides = [1, 1]} : vector<16x128xf32> to vector<8x8xf32>
    %c0_210 = arith.constant 0 : index
    %c2_211 = arith.constant 2 : index
    %c0_212 = arith.constant 0 : index
    %c0_213 = arith.constant 0 : index
    %231 = vector.load %arg18[%c0_210, %c2_211, %c0_212, %c0_213] : memref<2x16x8x8xf32, #tpu.memory_space<vmem>>, vector<1x1x8x8xf32>
    %232 = vector.shape_cast %231 : vector<1x1x8x8xf32> to vector<8x8xf32>
    %233 = vector.shape_cast %230 : vector<8x8xf32> to vector<1x1x8x8xf32>
    tpu.vector_store %arg18[%c0_210, %c2_211, %c0_212, %c0_213], %233 {strides = array<i32>} : memref<2x16x8x8xf32, #tpu.memory_space<vmem>>, vector<1x1x8x8xf32>,
    %234 = vector.extract_strided_slice %221 {offsets = [0, 24], sizes = [8, 8], strides = [1, 1]} : vector<16x128xf32> to vector<8x8xf32>
    %c0_214 = arith.constant 0 : index
    %c3_215 = arith.constant 3 : index
    %c0_216 = arith.constant 0 : index
    %c0_217 = arith.constant 0 : index
    %235 = vector.load %arg18[%c0_214, %c3_215, %c0_216, %c0_217] : memref<2x16x8x8xf32, #tpu.memory_space<vmem>>, vector<1x1x8x8xf32>
    %236 = vector.shape_cast %235 : vector<1x1x8x8xf32> to vector<8x8xf32>
    %237 = vector.shape_cast %234 : vector<8x8xf32> to vector<1x1x8x8xf32>
    tpu.vector_store %arg18[%c0_214, %c3_215, %c0_216, %c0_217], %237 {strides = array<i32>} : memref<2x16x8x8xf32, #tpu.memory_space<vmem>>, vector<1x1x8x8xf32>,
    %238 = vector.extract_strided_slice %221 {offsets = [0, 32], sizes = [8, 8], strides = [1, 1]} : vector<16x128xf32> to vector<8x8xf32>
    %c0_218 = arith.constant 0 : index
    %c4_219 = arith.constant 4 : index
    %c0_220 = arith.constant 0 : index
    %c0_221 = arith.constant 0 : index
    %239 = vector.load %arg18[%c0_218, %c4_219, %c0_220, %c0_221] : memref<2x16x8x8xf32, #tpu.memory_space<vmem>>, vector<1x1x8x8xf32>
    %240 = vector.shape_cast %239 : vector<1x1x8x8xf32> to vector<8x8xf32>
    %241 = vector.shape_cast %238 : vector<8x8xf32> to vector<1x1x8x8xf32>
    tpu.vector_store %arg18[%c0_218, %c4_219, %c0_220, %c0_221], %241 {strides = array<i32>} : memref<2x16x8x8xf32, #tpu.memory_space<vmem>>, vector<1x1x8x8xf32>,
    %242 = vector.extract_strided_slice %221 {offsets = [0, 40], sizes = [8, 8], strides = [1, 1]} : vector<16x128xf32> to vector<8x8xf32>
    %c0_222 = arith.constant 0 : index
    %c5_223 = arith.constant 5 : index
    %c0_224 = arith.constant 0 : index
    %c0_225 = arith.constant 0 : index
    %243 = vector.load %arg18[%c0_222, %c5_223, %c0_224, %c0_225] : memref<2x16x8x8xf32, #tpu.memory_space<vmem>>, vector<1x1x8x8xf32>
    %244 = vector.shape_cast %243 : vector<1x1x8x8xf32> to vector<8x8xf32>
    %245 = vector.shape_cast %242 : vector<8x8xf32> to vector<1x1x8x8xf32>
    tpu.vector_store %arg18[%c0_222, %c5_223, %c0_224, %c0_225], %245 {strides = array<i32>} : memref<2x16x8x8xf32, #tpu.memory_space<vmem>>, vector<1x1x8x8xf32>,
    %246 = vector.extract_strided_slice %221 {offsets = [0, 48], sizes = [8, 8], strides = [1, 1]} : vector<16x128xf32> to vector<8x8xf32>
    %c0_226 = arith.constant 0 : index
    %c6_227 = arith.constant 6 : index
    %c0_228 = arith.constant 0 : index
    %c0_229 = arith.constant 0 : index
    %247 = vector.load %arg18[%c0_226, %c6_227, %c0_228, %c0_229] : memref<2x16x8x8xf32, #tpu.memory_space<vmem>>, vector<1x1x8x8xf32>
    %248 = vector.shape_cast %247 : vector<1x1x8x8xf32> to vector<8x8xf32>
    %249 = vector.shape_cast %246 : vector<8x8xf32> to vector<1x1x8x8xf32>
    tpu.vector_store %arg18[%c0_226, %c6_227, %c0_228, %c0_229], %249 {strides = array<i32>} : memref<2x16x8x8xf32, #tpu.memory_space<vmem>>, vector<1x1x8x8xf32>,
    %250 = vector.extract_strided_slice %221 {offsets = [0, 56], sizes = [8, 8], strides = [1, 1]} : vector<16x128xf32> to vector<8x8xf32>
    %c0_230 = arith.constant 0 : index
    %c7_231 = arith.constant 7 : index
    %c0_232 = arith.constant 0 : index
    %c0_233 = arith.constant 0 : index
    %251 = vector.load %arg18[%c0_230, %c7_231, %c0_232, %c0_233] : memref<2x16x8x8xf32, #tpu.memory_space<vmem>>, vector<1x1x8x8xf32>
    %252 = vector.shape_cast %251 : vector<1x1x8x8xf32> to vector<8x8xf32>
    %253 = vector.shape_cast %250 : vector<8x8xf32> to vector<1x1x8x8xf32>
    tpu.vector_store %arg18[%c0_230, %c7_231, %c0_232, %c0_233], %253 {strides = array<i32>} : memref<2x16x8x8xf32, #tpu.memory_space<vmem>>, vector<1x1x8x8xf32>,
    %254 = vector.extract_strided_slice %221 {offsets = [0, 64], sizes = [8, 8], strides = [1, 1]} : vector<16x128xf32> to vector<8x8xf32>
    %c0_234 = arith.constant 0 : index
    %c8 = arith.constant 8 : index
    %c0_235 = arith.constant 0 : index
    %c0_236 = arith.constant 0 : index
    %255 = vector.load %arg18[%c0_234, %c8, %c0_235, %c0_236] : memref<2x16x8x8xf32, #tpu.memory_space<vmem>>, vector<1x1x8x8xf32>
    %256 = vector.shape_cast %255 : vector<1x1x8x8xf32> to vector<8x8xf32>
    %257 = vector.shape_cast %254 : vector<8x8xf32> to vector<1x1x8x8xf32>
    tpu.vector_store %arg18[%c0_234, %c8, %c0_235, %c0_236], %257 {strides = array<i32>} : memref<2x16x8x8xf32, #tpu.memory_space<vmem>>, vector<1x1x8x8xf32>,
    %258 = vector.extract_strided_slice %221 {offsets = [0, 72], sizes = [8, 8], strides = [1, 1]} : vector<16x128xf32> to vector<8x8xf32>
    %c0_237 = arith.constant 0 : index
    %c9 = arith.constant 9 : index
    %c0_238 = arith.constant 0 : index
    %c0_239 = arith.constant 0 : index
    %259 = vector.load %arg18[%c0_237, %c9, %c0_238, %c0_239] : memref<2x16x8x8xf32, #tpu.memory_space<vmem>>, vector<1x1x8x8xf32>
    %260 = vector.shape_cast %259 : vector<1x1x8x8xf32> to vector<8x8xf32>
    %261 = vector.shape_cast %258 : vector<8x8xf32> to vector<1x1x8x8xf32>
    tpu.vector_store %arg18[%c0_237, %c9, %c0_238, %c0_239], %261 {strides = array<i32>} : memref<2x16x8x8xf32, #tpu.memory_space<vmem>>, vector<1x1x8x8xf32>,
    %262 = vector.extract_strided_slice %221 {offsets = [0, 80], sizes = [8, 8], strides = [1, 1]} : vector<16x128xf32> to vector<8x8xf32>
    %c0_240 = arith.constant 0 : index
    %c10 = arith.constant 10 : index
    %c0_241 = arith.constant 0 : index
    %c0_242 = arith.constant 0 : index
    %263 = vector.load %arg18[%c0_240, %c10, %c0_241, %c0_242] : memref<2x16x8x8xf32, #tpu.memory_space<vmem>>, vector<1x1x8x8xf32>
    %264 = vector.shape_cast %263 : vector<1x1x8x8xf32> to vector<8x8xf32>
    %265 = vector.shape_cast %262 : vector<8x8xf32> to vector<1x1x8x8xf32>
    tpu.vector_store %arg18[%c0_240, %c10, %c0_241, %c0_242], %265 {strides = array<i32>} : memref<2x16x8x8xf32, #tpu.memory_space<vmem>>, vector<1x1x8x8xf32>,
    %266 = vector.extract_strided_slice %221 {offsets = [0, 88], sizes = [8, 8], strides = [1, 1]} : vector<16x128xf32> to vector<8x8xf32>
    %c0_243 = arith.constant 0 : index
    %c11 = arith.constant 11 : index
    %c0_244 = arith.constant 0 : index
    %c0_245 = arith.constant 0 : index
    %267 = vector.load %arg18[%c0_243, %c11, %c0_244, %c0_245] : memref<2x16x8x8xf32, #tpu.memory_space<vmem>>, vector<1x1x8x8xf32>
    %268 = vector.shape_cast %267 : vector<1x1x8x8xf32> to vector<8x8xf32>
    %269 = vector.shape_cast %266 : vector<8x8xf32> to vector<1x1x8x8xf32>
    tpu.vector_store %arg18[%c0_243, %c11, %c0_244, %c0_245], %269 {strides = array<i32>} : memref<2x16x8x8xf32, #tpu.memory_space<vmem>>, vector<1x1x8x8xf32>,
    %270 = vector.extract_strided_slice %221 {offsets = [0, 96], sizes = [8, 8], strides = [1, 1]} : vector<16x128xf32> to vector<8x8xf32>
    %c0_246 = arith.constant 0 : index
    %c12 = arith.constant 12 : index
    %c0_247 = arith.constant 0 : index
    %c0_248 = arith.constant 0 : index
    %271 = vector.load %arg18[%c0_246, %c12, %c0_247, %c0_248] : memref<2x16x8x8xf32, #tpu.memory_space<vmem>>, vector<1x1x8x8xf32>
    %272 = vector.shape_cast %271 : vector<1x1x8x8xf32> to vector<8x8xf32>
    %273 = vector.shape_cast %270 : vector<8x8xf32> to vector<1x1x8x8xf32>
    tpu.vector_store %arg18[%c0_246, %c12, %c0_247, %c0_248], %273 {strides = array<i32>} : memref<2x16x8x8xf32, #tpu.memory_space<vmem>>, vector<1x1x8x8xf32>,
    %274 = vector.extract_strided_slice %221 {offsets = [0, 104], sizes = [8, 8], strides = [1, 1]} : vector<16x128xf32> to vector<8x8xf32>
    %c0_249 = arith.constant 0 : index
    %c13 = arith.constant 13 : index
    %c0_250 = arith.constant 0 : index
    %c0_251 = arith.constant 0 : index
    %275 = vector.load %arg18[%c0_249, %c13, %c0_250, %c0_251] : memref<2x16x8x8xf32, #tpu.memory_space<vmem>>, vector<1x1x8x8xf32>
    %276 = vector.shape_cast %275 : vector<1x1x8x8xf32> to vector<8x8xf32>
    %277 = vector.shape_cast %274 : vector<8x8xf32> to vector<1x1x8x8xf32>
    tpu.vector_store %arg18[%c0_249, %c13, %c0_250, %c0_251], %277 {strides = array<i32>} : memref<2x16x8x8xf32, #tpu.memory_space<vmem>>, vector<1x1x8x8xf32>,
    %278 = vector.extract_strided_slice %221 {offsets = [0, 112], sizes = [8, 8], strides = [1, 1]} : vector<16x128xf32> to vector<8x8xf32>
    %c0_252 = arith.constant 0 : index
    %c14 = arith.constant 14 : index
    %c0_253 = arith.constant 0 : index
    %c0_254 = arith.constant 0 : index
    %279 = vector.load %arg18[%c0_252, %c14, %c0_253, %c0_254] : memref<2x16x8x8xf32, #tpu.memory_space<vmem>>, vector<1x1x8x8xf32>
    %280 = vector.shape_cast %279 : vector<1x1x8x8xf32> to vector<8x8xf32>
    %281 = vector.shape_cast %278 : vector<8x8xf32> to vector<1x1x8x8xf32>
    tpu.vector_store %arg18[%c0_252, %c14, %c0_253, %c0_254], %281 {strides = array<i32>} : memref<2x16x8x8xf32, #tpu.memory_space<vmem>>, vector<1x1x8x8xf32>,
    %282 = vector.extract_strided_slice %221 {offsets = [0, 120], sizes = [8, 8], strides = [1, 1]} : vector<16x128xf32> to vector<8x8xf32>
    %c0_255 = arith.constant 0 : index
    %c15 = arith.constant 15 : index
    %c0_256 = arith.constant 0 : index
    %c0_257 = arith.constant 0 : index
    %283 = vector.load %arg18[%c0_255, %c15, %c0_256, %c0_257] : memref<2x16x8x8xf32, #tpu.memory_space<vmem>>, vector<1x1x8x8xf32>
    %284 = vector.shape_cast %283 : vector<1x1x8x8xf32> to vector<8x8xf32>
    %285 = vector.shape_cast %282 : vector<8x8xf32> to vector<1x1x8x8xf32>
    tpu.vector_store %arg18[%c0_255, %c15, %c0_256, %c0_257], %285 {strides = array<i32>} : memref<2x16x8x8xf32, #tpu.memory_space<vmem>>, vector<1x1x8x8xf32>,
    %286 = vector.extract_strided_slice %221 {offsets = [8, 0], sizes = [8, 8], strides = [1, 1]} : vector<16x128xf32> to vector<8x8xf32>
    %c1_258 = arith.constant 1 : index
    %c0_259 = arith.constant 0 : index
    %c0_260 = arith.constant 0 : index
    %c0_261 = arith.constant 0 : index
    %287 = vector.load %arg18[%c1_258, %c0_259, %c0_260, %c0_261] : memref<2x16x8x8xf32, #tpu.memory_space<vmem>>, vector<1x1x8x8xf32>
    %288 = vector.shape_cast %287 : vector<1x1x8x8xf32> to vector<8x8xf32>
    %289 = vector.shape_cast %286 : vector<8x8xf32> to vector<1x1x8x8xf32>
    tpu.vector_store %arg18[%c1_258, %c0_259, %c0_260, %c0_261], %289 {strides = array<i32>} : memref<2x16x8x8xf32, #tpu.memory_space<vmem>>, vector<1x1x8x8xf32>,
    %290 = vector.extract_strided_slice %221 {offsets = [8, 8], sizes = [8, 8], strides = [1, 1]} : vector<16x128xf32> to vector<8x8xf32>
    %c1_262 = arith.constant 1 : index
    %c1_263 = arith.constant 1 : index
    %c0_264 = arith.constant 0 : index
    %c0_265 = arith.constant 0 : index
    %291 = vector.load %arg18[%c1_262, %c1_263, %c0_264, %c0_265] : memref<2x16x8x8xf32, #tpu.memory_space<vmem>>, vector<1x1x8x8xf32>
    %292 = vector.shape_cast %291 : vector<1x1x8x8xf32> to vector<8x8xf32>
    %293 = vector.shape_cast %290 : vector<8x8xf32> to vector<1x1x8x8xf32>
    tpu.vector_store %arg18[%c1_262, %c1_263, %c0_264, %c0_265], %293 {strides = array<i32>} : memref<2x16x8x8xf32, #tpu.memory_space<vmem>>, vector<1x1x8x8xf32>,
    %294 = vector.extract_strided_slice %221 {offsets = [8, 16], sizes = [8, 8], strides = [1, 1]} : vector<16x128xf32> to vector<8x8xf32>
    %c1_266 = arith.constant 1 : index
    %c2_267 = arith.constant 2 : index
    %c0_268 = arith.constant 0 : index
    %c0_269 = arith.constant 0 : index
    %295 = vector.load %arg18[%c1_266, %c2_267, %c0_268, %c0_269] : memref<2x16x8x8xf32, #tpu.memory_space<vmem>>, vector<1x1x8x8xf32>
    %296 = vector.shape_cast %295 : vector<1x1x8x8xf32> to vector<8x8xf32>
    %297 = vector.shape_cast %294 : vector<8x8xf32> to vector<1x1x8x8xf32>
    tpu.vector_store %arg18[%c1_266, %c2_267, %c0_268, %c0_269], %297 {strides = array<i32>} : memref<2x16x8x8xf32, #tpu.memory_space<vmem>>, vector<1x1x8x8xf32>,
    %298 = vector.extract_strided_slice %221 {offsets = [8, 24], sizes = [8, 8], strides = [1, 1]} : vector<16x128xf32> to vector<8x8xf32>
    %c1_270 = arith.constant 1 : index
    %c3_271 = arith.constant 3 : index
    %c0_272 = arith.constant 0 : index
    %c0_273 = arith.constant 0 : index
    %299 = vector.load %arg18[%c1_270, %c3_271, %c0_272, %c0_273] : memref<2x16x8x8xf32, #tpu.memory_space<vmem>>, vector<1x1x8x8xf32>
    %300 = vector.shape_cast %299 : vector<1x1x8x8xf32> to vector<8x8xf32>
    %301 = vector.shape_cast %298 : vector<8x8xf32> to vector<1x1x8x8xf32>
    tpu.vector_store %arg18[%c1_270, %c3_271, %c0_272, %c0_273], %301 {strides = array<i32>} : memref<2x16x8x8xf32, #tpu.memory_space<vmem>>, vector<1x1x8x8xf32>,
    %302 = vector.extract_strided_slice %221 {offsets = [8, 32], sizes = [8, 8], strides = [1, 1]} : vector<16x128xf32> to vector<8x8xf32>
    %c1_274 = arith.constant 1 : index
    %c4_275 = arith.constant 4 : index
    %c0_276 = arith.constant 0 : index
    %c0_277 = arith.constant 0 : index
    %303 = vector.load %arg18[%c1_274, %c4_275, %c0_276, %c0_277] : memref<2x16x8x8xf32, #tpu.memory_space<vmem>>, vector<1x1x8x8xf32>
    %304 = vector.shape_cast %303 : vector<1x1x8x8xf32> to vector<8x8xf32>
    %305 = vector.shape_cast %302 : vector<8x8xf32> to vector<1x1x8x8xf32>
    tpu.vector_store %arg18[%c1_274, %c4_275, %c0_276, %c0_277], %305 {strides = array<i32>} : memref<2x16x8x8xf32, #tpu.memory_space<vmem>>, vector<1x1x8x8xf32>,
    %306 = vector.extract_strided_slice %221 {offsets = [8, 40], sizes = [8, 8], strides = [1, 1]} : vector<16x128xf32> to vector<8x8xf32>
    %c1_278 = arith.constant 1 : index
    %c5_279 = arith.constant 5 : index
    %c0_280 = arith.constant 0 : index
    %c0_281 = arith.constant 0 : index
    %307 = vector.load %arg18[%c1_278, %c5_279, %c0_280, %c0_281] : memref<2x16x8x8xf32, #tpu.memory_space<vmem>>, vector<1x1x8x8xf32>
    %308 = vector.shape_cast %307 : vector<1x1x8x8xf32> to vector<8x8xf32>
    %309 = vector.shape_cast %306 : vector<8x8xf32> to vector<1x1x8x8xf32>
    tpu.vector_store %arg18[%c1_278, %c5_279, %c0_280, %c0_281], %309 {strides = array<i32>} : memref<2x16x8x8xf32, #tpu.memory_space<vmem>>, vector<1x1x8x8xf32>,
    %310 = vector.extract_strided_slice %221 {offsets = [8, 48], sizes = [8, 8], strides = [1, 1]} : vector<16x128xf32> to vector<8x8xf32>
    %c1_282 = arith.constant 1 : index
    %c6_283 = arith.constant 6 : index
    %c0_284 = arith.constant 0 : index
    %c0_285 = arith.constant 0 : index
    %311 = vector.load %arg18[%c1_282, %c6_283, %c0_284, %c0_285] : memref<2x16x8x8xf32, #tpu.memory_space<vmem>>, vector<1x1x8x8xf32>
    %312 = vector.shape_cast %311 : vector<1x1x8x8xf32> to vector<8x8xf32>
    %313 = vector.shape_cast %310 : vector<8x8xf32> to vector<1x1x8x8xf32>
    tpu.vector_store %arg18[%c1_282, %c6_283, %c0_284, %c0_285], %313 {strides = array<i32>} : memref<2x16x8x8xf32, #tpu.memory_space<vmem>>, vector<1x1x8x8xf32>,
    %314 = vector.extract_strided_slice %221 {offsets = [8, 56], sizes = [8, 8], strides = [1, 1]} : vector<16x128xf32> to vector<8x8xf32>
    %c1_286 = arith.constant 1 : index
    %c7_287 = arith.constant 7 : index
    %c0_288 = arith.constant 0 : index
    %c0_289 = arith.constant 0 : index
    %315 = vector.load %arg18[%c1_286, %c7_287, %c0_288, %c0_289] : memref<2x16x8x8xf32, #tpu.memory_space<vmem>>, vector<1x1x8x8xf32>
    %316 = vector.shape_cast %315 : vector<1x1x8x8xf32> to vector<8x8xf32>
    %317 = vector.shape_cast %314 : vector<8x8xf32> to vector<1x1x8x8xf32>
    tpu.vector_store %arg18[%c1_286, %c7_287, %c0_288, %c0_289], %317 {strides = array<i32>} : memref<2x16x8x8xf32, #tpu.memory_space<vmem>>, vector<1x1x8x8xf32>,
    %318 = vector.extract_strided_slice %221 {offsets = [8, 64], sizes = [8, 8], strides = [1, 1]} : vector<16x128xf32> to vector<8x8xf32>
    %c1_290 = arith.constant 1 : index
    %c8_291 = arith.constant 8 : index
    %c0_292 = arith.constant 0 : index
    %c0_293 = arith.constant 0 : index
    %319 = vector.load %arg18[%c1_290, %c8_291, %c0_292, %c0_293] : memref<2x16x8x8xf32, #tpu.memory_space<vmem>>, vector<1x1x8x8xf32>
    %320 = vector.shape_cast %319 : vector<1x1x8x8xf32> to vector<8x8xf32>
    %321 = vector.shape_cast %318 : vector<8x8xf32> to vector<1x1x8x8xf32>
    tpu.vector_store %arg18[%c1_290, %c8_291, %c0_292, %c0_293], %321 {strides = array<i32>} : memref<2x16x8x8xf32, #tpu.memory_space<vmem>>, vector<1x1x8x8xf32>,
    %322 = vector.extract_strided_slice %221 {offsets = [8, 72], sizes = [8, 8], strides = [1, 1]} : vector<16x128xf32> to vector<8x8xf32>
    %c1_294 = arith.constant 1 : index
    %c9_295 = arith.constant 9 : index
    %c0_296 = arith.constant 0 : index
    %c0_297 = arith.constant 0 : index
    %323 = vector.load %arg18[%c1_294, %c9_295, %c0_296, %c0_297] : memref<2x16x8x8xf32, #tpu.memory_space<vmem>>, vector<1x1x8x8xf32>
    %324 = vector.shape_cast %323 : vector<1x1x8x8xf32> to vector<8x8xf32>
    %325 = vector.shape_cast %322 : vector<8x8xf32> to vector<1x1x8x8xf32>
    tpu.vector_store %arg18[%c1_294, %c9_295, %c0_296, %c0_297], %325 {strides = array<i32>} : memref<2x16x8x8xf32, #tpu.memory_space<vmem>>, vector<1x1x8x8xf32>,
    %326 = vector.extract_strided_slice %221 {offsets = [8, 80], sizes = [8, 8], strides = [1, 1]} : vector<16x128xf32> to vector<8x8xf32>
    %c1_298 = arith.constant 1 : index
    %c10_299 = arith.constant 10 : index
    %c0_300 = arith.constant 0 : index
    %c0_301 = arith.constant 0 : index
    %327 = vector.load %arg18[%c1_298, %c10_299, %c0_300, %c0_301] : memref<2x16x8x8xf32, #tpu.memory_space<vmem>>, vector<1x1x8x8xf32>
    %328 = vector.shape_cast %327 : vector<1x1x8x8xf32> to vector<8x8xf32>
    %329 = vector.shape_cast %326 : vector<8x8xf32> to vector<1x1x8x8xf32>
    tpu.vector_store %arg18[%c1_298, %c10_299, %c0_300, %c0_301], %329 {strides = array<i32>} : memref<2x16x8x8xf32, #tpu.memory_space<vmem>>, vector<1x1x8x8xf32>,
    %330 = vector.extract_strided_slice %221 {offsets = [8, 88], sizes = [8, 8], strides = [1, 1]} : vector<16x128xf32> to vector<8x8xf32>
    %c1_302 = arith.constant 1 : index
    %c11_303 = arith.constant 11 : index
    %c0_304 = arith.constant 0 : index
    %c0_305 = arith.constant 0 : index
    %331 = vector.load %arg18[%c1_302, %c11_303, %c0_304, %c0_305] : memref<2x16x8x8xf32, #tpu.memory_space<vmem>>, vector<1x1x8x8xf32>
    %332 = vector.shape_cast %331 : vector<1x1x8x8xf32> to vector<8x8xf32>
    %333 = vector.shape_cast %330 : vector<8x8xf32> to vector<1x1x8x8xf32>
    tpu.vector_store %arg18[%c1_302, %c11_303, %c0_304, %c0_305], %333 {strides = array<i32>} : memref<2x16x8x8xf32, #tpu.memory_space<vmem>>, vector<1x1x8x8xf32>,
    %334 = vector.extract_strided_slice %221 {offsets = [8, 96], sizes = [8, 8], strides = [1, 1]} : vector<16x128xf32> to vector<8x8xf32>
    %c1_306 = arith.constant 1 : index
    %c12_307 = arith.constant 12 : index
    %c0_308 = arith.constant 0 : index
    %c0_309 = arith.constant 0 : index
    %335 = vector.load %arg18[%c1_306, %c12_307, %c0_308, %c0_309] : memref<2x16x8x8xf32, #tpu.memory_space<vmem>>, vector<1x1x8x8xf32>
    %336 = vector.shape_cast %335 : vector<1x1x8x8xf32> to vector<8x8xf32>
    %337 = vector.shape_cast %334 : vector<8x8xf32> to vector<1x1x8x8xf32>
    tpu.vector_store %arg18[%c1_306, %c12_307, %c0_308, %c0_309], %337 {strides = array<i32>} : memref<2x16x8x8xf32, #tpu.memory_space<vmem>>, vector<1x1x8x8xf32>,
    %338 = vector.extract_strided_slice %221 {offsets = [8, 104], sizes = [8, 8], strides = [1, 1]} : vector<16x128xf32> to vector<8x8xf32>
    %c1_310 = arith.constant 1 : index
    %c13_311 = arith.constant 13 : index
    %c0_312 = arith.constant 0 : index
    %c0_313 = arith.constant 0 : index
    %339 = vector.load %arg18[%c1_310, %c13_311, %c0_312, %c0_313] : memref<2x16x8x8xf32, #tpu.memory_space<vmem>>, vector<1x1x8x8xf32>
    %340 = vector.shape_cast %339 : vector<1x1x8x8xf32> to vector<8x8xf32>
    %341 = vector.shape_cast %338 : vector<8x8xf32> to vector<1x1x8x8xf32>
    tpu.vector_store %arg18[%c1_310, %c13_311, %c0_312, %c0_313], %341 {strides = array<i32>} : memref<2x16x8x8xf32, #tpu.memory_space<vmem>>, vector<1x1x8x8xf32>,
    %342 = vector.extract_strided_slice %221 {offsets = [8, 112], sizes = [8, 8], strides = [1, 1]} : vector<16x128xf32> to vector<8x8xf32>
    %c1_314 = arith.constant 1 : index
    %c14_315 = arith.constant 14 : index
    %c0_316 = arith.constant 0 : index
    %c0_317 = arith.constant 0 : index
    %343 = vector.load %arg18[%c1_314, %c14_315, %c0_316, %c0_317] : memref<2x16x8x8xf32, #tpu.memory_space<vmem>>, vector<1x1x8x8xf32>
    %344 = vector.shape_cast %343 : vector<1x1x8x8xf32> to vector<8x8xf32>
    %345 = vector.shape_cast %342 : vector<8x8xf32> to vector<1x1x8x8xf32>
    tpu.vector_store %arg18[%c1_314, %c14_315, %c0_316, %c0_317], %345 {strides = array<i32>} : memref<2x16x8x8xf32, #tpu.memory_space<vmem>>, vector<1x1x8x8xf32>,
    %346 = vector.extract_strided_slice %221 {offsets = [8, 120], sizes = [8, 8], strides = [1, 1]} : vector<16x128xf32> to vector<8x8xf32>
    %c1_318 = arith.constant 1 : index
    %c15_319 = arith.constant 15 : index
    %c0_320 = arith.constant 0 : index
    %c0_321 = arith.constant 0 : index
    %347 = vector.load %arg18[%c1_318, %c15_319, %c0_320, %c0_321] : memref<2x16x8x8xf32, #tpu.memory_space<vmem>>, vector<1x1x8x8xf32>
    %348 = vector.shape_cast %347 : vector<1x1x8x8xf32> to vector<8x8xf32>
    %349 = vector.shape_cast %346 : vector<8x8xf32> to vector<1x1x8x8xf32>
    tpu.vector_store %arg18[%c1_318, %c15_319, %c0_320, %c0_321], %349 {strides = array<i32>} : memref<2x16x8x8xf32, #tpu.memory_space<vmem>>, vector<1x1x8x8xf32>,
    %cst_322 = arith.constant 0.000000e+00 : f32
    %350 = vector.broadcast %cst_322 : f32 to vector<20x160xf32>
    %c0_323 = arith.constant 0 : index
    %c0_324 = arith.constant 0 : index
    %351 = vector.load %arg22[%c0_323, %c0_324] : memref<20x160xf32, #tpu.memory_space<vmem>>, vector<20x160xf32>
    tpu.vector_store %arg22[%c0_323, %c0_324], %350 {strides = array<i32>} : memref<20x160xf32, #tpu.memory_space<vmem>>, vector<20x160xf32>,
    %352 = vector.extract_strided_slice %221 {offsets = [0, 0], sizes = [8, 8], strides = [1, 1]} : vector<16x128xf32> to vector<8x8xf32>
    %c1_325 = arith.constant 1 : index
    %c1_326 = arith.constant 1 : index
    %353 = vector.load %arg22[%c1_325, %c1_326] : memref<20x160xf32, #tpu.memory_space<vmem>>, vector<8x8xf32>
    tpu.vector_store %arg22[%c1_325, %c1_326], %352 {strides = array<i32>} : memref<20x160xf32, #tpu.memory_space<vmem>>, vector<8x8xf32>,
    %354 = vector.extract_strided_slice %221 {offsets = [0, 8], sizes = [8, 8], strides = [1, 1]} : vector<16x128xf32> to vector<8x8xf32>
    %c1_327 = arith.constant 1 : index
    %c11_328 = arith.constant 11 : index
    %355 = vector.load %arg22[%c1_327, %c11_328] : memref<20x160xf32, #tpu.memory_space<vmem>>, vector<8x8xf32>
    tpu.vector_store %arg22[%c1_327, %c11_328], %354 {strides = array<i32>} : memref<20x160xf32, #tpu.memory_space<vmem>>, vector<8x8xf32>,
    %356 = vector.extract_strided_slice %221 {offsets = [0, 16], sizes = [8, 8], strides = [1, 1]} : vector<16x128xf32> to vector<8x8xf32>
    %c1_329 = arith.constant 1 : index
    %c21 = arith.constant 21 : index
    %357 = vector.load %arg22[%c1_329, %c21] : memref<20x160xf32, #tpu.memory_space<vmem>>, vector<8x8xf32>
    tpu.vector_store %arg22[%c1_329, %c21], %356 {strides = array<i32>} : memref<20x160xf32, #tpu.memory_space<vmem>>, vector<8x8xf32>,
    %358 = vector.extract_strided_slice %221 {offsets = [0, 24], sizes = [8, 8], strides = [1, 1]} : vector<16x128xf32> to vector<8x8xf32>
    %c1_330 = arith.constant 1 : index
    %c31 = arith.constant 31 : index
    %359 = vector.load %arg22[%c1_330, %c31] : memref<20x160xf32, #tpu.memory_space<vmem>>, vector<8x8xf32>
    tpu.vector_store %arg22[%c1_330, %c31], %358 {strides = array<i32>} : memref<20x160xf32, #tpu.memory_space<vmem>>, vector<8x8xf32>,
    %360 = vector.extract_strided_slice %221 {offsets = [0, 32], sizes = [8, 8], strides = [1, 1]} : vector<16x128xf32> to vector<8x8xf32>
    %c1_331 = arith.constant 1 : index
    %c41 = arith.constant 41 : index
    %361 = vector.load %arg22[%c1_331, %c41] : memref<20x160xf32, #tpu.memory_space<vmem>>, vector<8x8xf32>
    tpu.vector_store %arg22[%c1_331, %c41], %360 {strides = array<i32>} : memref<20x160xf32, #tpu.memory_space<vmem>>, vector<8x8xf32>,
    %362 = vector.extract_strided_slice %221 {offsets = [0, 40], sizes = [8, 8], strides = [1, 1]} : vector<16x128xf32> to vector<8x8xf32>
    %c1_332 = arith.constant 1 : index
    %c51 = arith.constant 51 : index
    %363 = vector.load %arg22[%c1_332, %c51] : memref<20x160xf32, #tpu.memory_space<vmem>>, vector<8x8xf32>
    tpu.vector_store %arg22[%c1_332, %c51], %362 {strides = array<i32>} : memref<20x160xf32, #tpu.memory_space<vmem>>, vector<8x8xf32>,
    %364 = vector.extract_strided_slice %221 {offsets = [0, 48], sizes = [8, 8], strides = [1, 1]} : vector<16x128xf32> to vector<8x8xf32>
    %c1_333 = arith.constant 1 : index
    %c61 = arith.constant 61 : index
    %365 = vector.load %arg22[%c1_333, %c61] : memref<20x160xf32, #tpu.memory_space<vmem>>, vector<8x8xf32>
    tpu.vector_store %arg22[%c1_333, %c61], %364 {strides = array<i32>} : memref<20x160xf32, #tpu.memory_space<vmem>>, vector<8x8xf32>,
    %366 = vector.extract_strided_slice %221 {offsets = [0, 56], sizes = [8, 8], strides = [1, 1]} : vector<16x128xf32> to vector<8x8xf32>
    %c1_334 = arith.constant 1 : index
    %c71 = arith.constant 71 : index
    %367 = vector.load %arg22[%c1_334, %c71] : memref<20x160xf32, #tpu.memory_space<vmem>>, vector<8x8xf32>
    tpu.vector_store %arg22[%c1_334, %c71], %366 {strides = array<i32>} : memref<20x160xf32, #tpu.memory_space<vmem>>, vector<8x8xf32>,
    %368 = vector.extract_strided_slice %221 {offsets = [0, 64], sizes = [8, 8], strides = [1, 1]} : vector<16x128xf32> to vector<8x8xf32>
    %c1_335 = arith.constant 1 : index
    %c81 = arith.constant 81 : index
    %369 = vector.load %arg22[%c1_335, %c81] : memref<20x160xf32, #tpu.memory_space<vmem>>, vector<8x8xf32>
    tpu.vector_store %arg22[%c1_335, %c81], %368 {strides = array<i32>} : memref<20x160xf32, #tpu.memory_space<vmem>>, vector<8x8xf32>,
    %370 = vector.extract_strided_slice %221 {offsets = [0, 72], sizes = [8, 8], strides = [1, 1]} : vector<16x128xf32> to vector<8x8xf32>
    %c1_336 = arith.constant 1 : index
    %c91_337 = arith.constant 91 : index
    %371 = vector.load %arg22[%c1_336, %c91_337] : memref<20x160xf32, #tpu.memory_space<vmem>>, vector<8x8xf32>
    tpu.vector_store %arg22[%c1_336, %c91_337], %370 {strides = array<i32>} : memref<20x160xf32, #tpu.memory_space<vmem>>, vector<8x8xf32>,
    %372 = vector.extract_strided_slice %221 {offsets = [0, 80], sizes = [8, 8], strides = [1, 1]} : vector<16x128xf32> to vector<8x8xf32>
    %c1_338 = arith.constant 1 : index
    %c101 = arith.constant 101 : index
    %373 = vector.load %arg22[%c1_338, %c101] : memref<20x160xf32, #tpu.memory_space<vmem>>, vector<8x8xf32>
    tpu.vector_store %arg22[%c1_338, %c101], %372 {strides = array<i32>} : memref<20x160xf32, #tpu.memory_space<vmem>>, vector<8x8xf32>,
    %374 = vector.extract_strided_slice %221 {offsets = [0, 88], sizes = [8, 8], strides = [1, 1]} : vector<16x128xf32> to vector<8x8xf32>
    %c1_339 = arith.constant 1 : index
    %c111 = arith.constant 111 : index
    %375 = vector.load %arg22[%c1_339, %c111] : memref<20x160xf32, #tpu.memory_space<vmem>>, vector<8x8xf32>
    tpu.vector_store %arg22[%c1_339, %c111], %374 {strides = array<i32>} : memref<20x160xf32, #tpu.memory_space<vmem>>, vector<8x8xf32>,
    %376 = vector.extract_strided_slice %221 {offsets = [0, 96], sizes = [8, 8], strides = [1, 1]} : vector<16x128xf32> to vector<8x8xf32>
    %c1_340 = arith.constant 1 : index
    %c121 = arith.constant 121 : index
    %377 = vector.load %arg22[%c1_340, %c121] : memref<20x160xf32, #tpu.memory_space<vmem>>, vector<8x8xf32>
    tpu.vector_store %arg22[%c1_340, %c121], %376 {strides = array<i32>} : memref<20x160xf32, #tpu.memory_space<vmem>>, vector<8x8xf32>,
    %378 = vector.extract_strided_slice %221 {offsets = [0, 104], sizes = [8, 8], strides = [1, 1]} : vector<16x128xf32> to vector<8x8xf32>
    %c1_341 = arith.constant 1 : index
    %c131 = arith.constant 131 : index
    %379 = vector.load %arg22[%c1_341, %c131] : memref<20x160xf32, #tpu.memory_space<vmem>>, vector<8x8xf32>
    tpu.vector_store %arg22[%c1_341, %c131], %378 {strides = array<i32>} : memref<20x160xf32, #tpu.memory_space<vmem>>, vector<8x8xf32>,
    %380 = vector.extract_strided_slice %221 {offsets = [0, 112], sizes = [8, 8], strides = [1, 1]} : vector<16x128xf32> to vector<8x8xf32>
    %c1_342 = arith.constant 1 : index
    %c141 = arith.constant 141 : index
    %381 = vector.load %arg22[%c1_342, %c141] : memref<20x160xf32, #tpu.memory_space<vmem>>, vector<8x8xf32>
    tpu.vector_store %arg22[%c1_342, %c141], %380 {strides = array<i32>} : memref<20x160xf32, #tpu.memory_space<vmem>>, vector<8x8xf32>,
    %382 = vector.extract_strided_slice %221 {offsets = [0, 120], sizes = [8, 8], strides = [1, 1]} : vector<16x128xf32> to vector<8x8xf32>
    %c1_343 = arith.constant 1 : index
    %c151 = arith.constant 151 : index
    %383 = vector.load %arg22[%c1_343, %c151] : memref<20x160xf32, #tpu.memory_space<vmem>>, vector<8x8xf32>
    tpu.vector_store %arg22[%c1_343, %c151], %382 {strides = array<i32>} : memref<20x160xf32, #tpu.memory_space<vmem>>, vector<8x8xf32>,
    %384 = vector.extract_strided_slice %221 {offsets = [8, 0], sizes = [8, 8], strides = [1, 1]} : vector<16x128xf32> to vector<8x8xf32>
    %c11_344 = arith.constant 11 : index
    %c1_345 = arith.constant 1 : index
    %385 = vector.load %arg22[%c11_344, %c1_345] : memref<20x160xf32, #tpu.memory_space<vmem>>, vector<8x8xf32>
    tpu.vector_store %arg22[%c11_344, %c1_345], %384 {strides = array<i32>} : memref<20x160xf32, #tpu.memory_space<vmem>>, vector<8x8xf32>,
    %386 = vector.extract_strided_slice %221 {offsets = [8, 8], sizes = [8, 8], strides = [1, 1]} : vector<16x128xf32> to vector<8x8xf32>
    %c11_346 = arith.constant 11 : index
    %c11_347 = arith.constant 11 : index
    %387 = vector.load %arg22[%c11_346, %c11_347] : memref<20x160xf32, #tpu.memory_space<vmem>>, vector<8x8xf32>
    tpu.vector_store %arg22[%c11_346, %c11_347], %386 {strides = array<i32>} : memref<20x160xf32, #tpu.memory_space<vmem>>, vector<8x8xf32>,
    %388 = vector.extract_strided_slice %221 {offsets = [8, 16], sizes = [8, 8], strides = [1, 1]} : vector<16x128xf32> to vector<8x8xf32>
    %c11_348 = arith.constant 11 : index
    %c21_349 = arith.constant 21 : index
    %389 = vector.load %arg22[%c11_348, %c21_349] : memref<20x160xf32, #tpu.memory_space<vmem>>, vector<8x8xf32>
    tpu.vector_store %arg22[%c11_348, %c21_349], %388 {strides = array<i32>} : memref<20x160xf32, #tpu.memory_space<vmem>>, vector<8x8xf32>,
    %390 = vector.extract_strided_slice %221 {offsets = [8, 24], sizes = [8, 8], strides = [1, 1]} : vector<16x128xf32> to vector<8x8xf32>
    %c11_350 = arith.constant 11 : index
    %c31_351 = arith.constant 31 : index
    %391 = vector.load %arg22[%c11_350, %c31_351] : memref<20x160xf32, #tpu.memory_space<vmem>>, vector<8x8xf32>
    tpu.vector_store %arg22[%c11_350, %c31_351], %390 {strides = array<i32>} : memref<20x160xf32, #tpu.memory_space<vmem>>, vector<8x8xf32>,
    %392 = vector.extract_strided_slice %221 {offsets = [8, 32], sizes = [8, 8], strides = [1, 1]} : vector<16x128xf32> to vector<8x8xf32>
    %c11_352 = arith.constant 11 : index
    %c41_353 = arith.constant 41 : index
    %393 = vector.load %arg22[%c11_352, %c41_353] : memref<20x160xf32, #tpu.memory_space<vmem>>, vector<8x8xf32>
    tpu.vector_store %arg22[%c11_352, %c41_353], %392 {strides = array<i32>} : memref<20x160xf32, #tpu.memory_space<vmem>>, vector<8x8xf32>,
    %394 = vector.extract_strided_slice %221 {offsets = [8, 40], sizes = [8, 8], strides = [1, 1]} : vector<16x128xf32> to vector<8x8xf32>
    %c11_354 = arith.constant 11 : index
    %c51_355 = arith.constant 51 : index
    %395 = vector.load %arg22[%c11_354, %c51_355] : memref<20x160xf32, #tpu.memory_space<vmem>>, vector<8x8xf32>
    tpu.vector_store %arg22[%c11_354, %c51_355], %394 {strides = array<i32>} : memref<20x160xf32, #tpu.memory_space<vmem>>, vector<8x8xf32>,
    %396 = vector.extract_strided_slice %221 {offsets = [8, 48], sizes = [8, 8], strides = [1, 1]} : vector<16x128xf32> to vector<8x8xf32>
    %c11_356 = arith.constant 11 : index
    %c61_357 = arith.constant 61 : index
    %397 = vector.load %arg22[%c11_356, %c61_357] : memref<20x160xf32, #tpu.memory_space<vmem>>, vector<8x8xf32>
    tpu.vector_store %arg22[%c11_356, %c61_357], %396 {strides = array<i32>} : memref<20x160xf32, #tpu.memory_space<vmem>>, vector<8x8xf32>,
    %398 = vector.extract_strided_slice %221 {offsets = [8, 56], sizes = [8, 8], strides = [1, 1]} : vector<16x128xf32> to vector<8x8xf32>
    %c11_358 = arith.constant 11 : index
    %c71_359 = arith.constant 71 : index
    %399 = vector.load %arg22[%c11_358, %c71_359] : memref<20x160xf32, #tpu.memory_space<vmem>>, vector<8x8xf32>
    tpu.vector_store %arg22[%c11_358, %c71_359], %398 {strides = array<i32>} : memref<20x160xf32, #tpu.memory_space<vmem>>, vector<8x8xf32>,
    %400 = vector.extract_strided_slice %221 {offsets = [8, 64], sizes = [8, 8], strides = [1, 1]} : vector<16x128xf32> to vector<8x8xf32>
    %c11_360 = arith.constant 11 : index
    %c81_361 = arith.constant 81 : index
    %401 = vector.load %arg22[%c11_360, %c81_361] : memref<20x160xf32, #tpu.memory_space<vmem>>, vector<8x8xf32>
    tpu.vector_store %arg22[%c11_360, %c81_361], %400 {strides = array<i32>} : memref<20x160xf32, #tpu.memory_space<vmem>>, vector<8x8xf32>,
    %402 = vector.extract_strided_slice %221 {offsets = [8, 72], sizes = [8, 8], strides = [1, 1]} : vector<16x128xf32> to vector<8x8xf32>
    %c11_362 = arith.constant 11 : index
    %c91_363 = arith.constant 91 : index
    %403 = vector.load %arg22[%c11_362, %c91_363] : memref<20x160xf32, #tpu.memory_space<vmem>>, vector<8x8xf32>
    tpu.vector_store %arg22[%c11_362, %c91_363], %402 {strides = array<i32>} : memref<20x160xf32, #tpu.memory_space<vmem>>, vector<8x8xf32>,
    %404 = vector.extract_strided_slice %221 {offsets = [8, 80], sizes = [8, 8], strides = [1, 1]} : vector<16x128xf32> to vector<8x8xf32>
    %c11_364 = arith.constant 11 : index
    %c101_365 = arith.constant 101 : index
    %405 = vector.load %arg22[%c11_364, %c101_365] : memref<20x160xf32, #tpu.memory_space<vmem>>, vector<8x8xf32>
    tpu.vector_store %arg22[%c11_364, %c101_365], %404 {strides = array<i32>} : memref<20x160xf32, #tpu.memory_space<vmem>>, vector<8x8xf32>,
    %406 = vector.extract_strided_slice %221 {offsets = [8, 88], sizes = [8, 8], strides = [1, 1]} : vector<16x128xf32> to vector<8x8xf32>
    %c11_366 = arith.constant 11 : index
    %c111_367 = arith.constant 111 : index
    %407 = vector.load %arg22[%c11_366, %c111_367] : memref<20x160xf32, #tpu.memory_space<vmem>>, vector<8x8xf32>
    tpu.vector_store %arg22[%c11_366, %c111_367], %406 {strides = array<i32>} : memref<20x160xf32, #tpu.memory_space<vmem>>, vector<8x8xf32>,
    %408 = vector.extract_strided_slice %221 {offsets = [8, 96], sizes = [8, 8], strides = [1, 1]} : vector<16x128xf32> to vector<8x8xf32>
    %c11_368 = arith.constant 11 : index
    %c121_369 = arith.constant 121 : index
    %409 = vector.load %arg22[%c11_368, %c121_369] : memref<20x160xf32, #tpu.memory_space<vmem>>, vector<8x8xf32>
    tpu.vector_store %arg22[%c11_368, %c121_369], %408 {strides = array<i32>} : memref<20x160xf32, #tpu.memory_space<vmem>>, vector<8x8xf32>,
    %410 = vector.extract_strided_slice %221 {offsets = [8, 104], sizes = [8, 8], strides = [1, 1]} : vector<16x128xf32> to vector<8x8xf32>
    %c11_370 = arith.constant 11 : index
    %c131_371 = arith.constant 131 : index
    %411 = vector.load %arg22[%c11_370, %c131_371] : memref<20x160xf32, #tpu.memory_space<vmem>>, vector<8x8xf32>
    tpu.vector_store %arg22[%c11_370, %c131_371], %410 {strides = array<i32>} : memref<20x160xf32, #tpu.memory_space<vmem>>, vector<8x8xf32>,
    %412 = vector.extract_strided_slice %221 {offsets = [8, 112], sizes = [8, 8], strides = [1, 1]} : vector<16x128xf32> to vector<8x8xf32>
    %c11_372 = arith.constant 11 : index
    %c141_373 = arith.constant 141 : index
    %413 = vector.load %arg22[%c11_372, %c141_373] : memref<20x160xf32, #tpu.memory_space<vmem>>, vector<8x8xf32>
    tpu.vector_store %arg22[%c11_372, %c141_373], %412 {strides = array<i32>} : memref<20x160xf32, #tpu.memory_space<vmem>>, vector<8x8xf32>,
    %414 = vector.extract_strided_slice %221 {offsets = [8, 120], sizes = [8, 8], strides = [1, 1]} : vector<16x128xf32> to vector<8x8xf32>
    %c11_374 = arith.constant 11 : index
    %c151_375 = arith.constant 151 : index
    %415 = vector.load %arg22[%c11_374, %c151_375] : memref<20x160xf32, #tpu.memory_space<vmem>>, vector<8x8xf32>
    tpu.vector_store %arg22[%c11_374, %c151_375], %414 {strides = array<i32>} : memref<20x160xf32, #tpu.memory_space<vmem>>, vector<8x8xf32>,
    %c0_376 = arith.constant 0 : index
    %c0_377 = arith.constant 0 : index
    %416 = vector.load %arg22[%c0_376, %c0_377] : memref<20x160xf32, #tpu.memory_space<vmem>>, vector<20x160xf32>
    %417 = arith.truncf %416 : vector<20x160xf32> to vector<20x160xbf16>
    %c0_378 = arith.constant 0 : index
    %c0_379 = arith.constant 0 : index
    %418 = vector.load %arg11[%c0_378, %c0_379] : memref<24x20xbf16, #tpu.memory_space<vmem>>, vector<24x20xbf16>
    %cst_380 = arith.constant dense<0.000000e+00> : vector<24x160xf32>
    %419 = tpu.matmul %418, %417, %cst_380 {dimension_numbers = #tpu.dot_dimension_numbers<[1], [0], [0], [1], [0, 0, 1, 1], [], []>} : vector<24x20xbf16>, vector<20x160xbf16>, vector<24x160xf32> -> vector<24x160xf32>
    %cst_381 = arith.constant 0.000000e+00 : f32
    %420 = vector.broadcast %cst_381 : f32 to vector<8x64xf32>
    %421 = vector.extract_strided_slice %419 {offsets = [0, 0], sizes = [8, 160], strides = [1, 1]} : vector<24x160xf32> to vector<8x160xf32>
    %422 = arith.truncf %421 : vector<8x160xf32> to vector<8x160xbf16>
    %c0_382 = arith.constant 0 : index
    %c0_383 = arith.constant 0 : index
    %c0_384 = arith.constant 0 : index
    %423 = vector.load %arg12[%c0_382, %c0_383, %c0_384] : memref<3x160x64xbf16, #tpu.memory_space<vmem>>, vector<1x160x64xbf16>
    %424 = vector.shape_cast %423 : vector<1x160x64xbf16> to vector<160x64xbf16>
    %cst_385 = arith.constant dense<0.000000e+00> : vector<8x64xf32>
    %425 = tpu.matmul %422, %424, %cst_385 {dimension_numbers = #tpu.dot_dimension_numbers<[1], [0], [0], [1], [0, 0, 1, 1], [], []>} : vector<8x160xbf16>, vector<160x64xbf16>, vector<8x64xf32> -> vector<8x64xf32>
    %426 = arith.addf %420, %425 : vector<8x64xf32>
    %427 = vector.extract_strided_slice %419 {offsets = [8, 0], sizes = [8, 160], strides = [1, 1]} : vector<24x160xf32> to vector<8x160xf32>
    %428 = arith.truncf %427 : vector<8x160xf32> to vector<8x160xbf16>
    %c1_386 = arith.constant 1 : index
    %c0_387 = arith.constant 0 : index
    %c0_388 = arith.constant 0 : index
    %429 = vector.load %arg12[%c1_386, %c0_387, %c0_388] : memref<3x160x64xbf16, #tpu.memory_space<vmem>>, vector<1x160x64xbf16>
    %430 = vector.shape_cast %429 : vector<1x160x64xbf16> to vector<160x64xbf16>
    %cst_389 = arith.constant dense<0.000000e+00> : vector<8x64xf32>
    %431 = tpu.matmul %428, %430, %cst_389 {dimension_numbers = #tpu.dot_dimension_numbers<[1], [0], [0], [1], [0, 0, 1, 1], [], []>} : vector<8x160xbf16>, vector<160x64xbf16>, vector<8x64xf32> -> vector<8x64xf32>
    %432 = arith.addf %426, %431 : vector<8x64xf32>
    %433 = vector.extract_strided_slice %419 {offsets = [16, 0], sizes = [8, 160], strides = [1, 1]} : vector<24x160xf32> to vector<8x160xf32>
    %434 = arith.truncf %433 : vector<8x160xf32> to vector<8x160xbf16>
    %c2_390 = arith.constant 2 : index
    %c0_391 = arith.constant 0 : index
    %c0_392 = arith.constant 0 : index
    %435 = vector.load %arg12[%c2_390, %c0_391, %c0_392] : memref<3x160x64xbf16, #tpu.memory_space<vmem>>, vector<1x160x64xbf16>
    %436 = vector.shape_cast %435 : vector<1x160x64xbf16> to vector<160x64xbf16>
    %cst_393 = arith.constant dense<0.000000e+00> : vector<8x64xf32>
    %437 = tpu.matmul %434, %436, %cst_393 {dimension_numbers = #tpu.dot_dimension_numbers<[1], [0], [0], [1], [0, 0, 1, 1], [], []>} : vector<8x160xbf16>, vector<160x64xbf16>, vector<8x64xf32> -> vector<8x64xf32>
    %438 = arith.addf %432, %437 : vector<8x64xf32>
    %cst_394 = arith.constant 1.000000e+00 : f32
    %439 = vector.broadcast %cst_394 : f32 to vector<1x8xf32>
    %cst_395 = arith.constant dense<0.000000e+00> : vector<1x64xf32>
    %440 = tpu.matmul %439, %438, %cst_395 {dimension_numbers = #tpu.dot_dimension_numbers<[1], [0], [0], [1], [0, 0, 1, 1], [], []>} : vector<1x8xf32>, vector<8x64xf32>, vector<1x64xf32> -> vector<1x64xf32>
    %c0_396 = arith.constant 0 : index
    %c0_397 = arith.constant 0 : index
    %441 = vector.load %arg13[%c0_396, %c0_397] : memref<64x64xf32, #tpu.memory_space<vmem>>, vector<64x64xf32>
    %cst_398 = arith.constant dense<0.000000e+00> : vector<1x64xf32>
    %442 = tpu.matmul %440, %441, %cst_398 {dimension_numbers = #tpu.dot_dimension_numbers<[1], [0], [0], [1], [0, 0, 1, 1], [], []>} : vector<1x64xf32>, vector<64x64xf32>, vector<1x64xf32> -> vector<1x64xf32>
    %443 = vector.broadcast %442 : vector<1x64xf32> to vector<8x64xf32>
    %444 = arith.subf %438, %443 : vector<8x64xf32>
    %445 = arith.mulf %444, %444 : vector<8x64xf32>
    %cst_399 = arith.constant dense<0.000000e+00> : vector<1x64xf32>
    %446 = tpu.matmul %439, %445, %cst_399 {dimension_numbers = #tpu.dot_dimension_numbers<[1], [0], [0], [1], [0, 0, 1, 1], [], []>} : vector<1x8xf32>, vector<8x64xf32>, vector<1x64xf32> -> vector<1x64xf32>
    %c0_400 = arith.constant 0 : index
    %c0_401 = arith.constant 0 : index
    %447 = vector.load %arg13[%c0_400, %c0_401] : memref<64x64xf32, #tpu.memory_space<vmem>>, vector<64x64xf32>
    %cst_402 = arith.constant dense<0.000000e+00> : vector<1x64xf32>
    %448 = tpu.matmul %446, %447, %cst_402 {dimension_numbers = #tpu.dot_dimension_numbers<[1], [0], [0], [1], [0, 0, 1, 1], [], []>} : vector<1x64xf32>, vector<64x64xf32>, vector<1x64xf32> -> vector<1x64xf32>
    %c0_403 = arith.constant 0 : index
    %c0_404 = arith.constant 0 : index
    %449 = vector.load %arg14[%c0_403, %c0_404] : memref<1x64xf32, #tpu.memory_space<vmem>>, vector<1x64xf32>
    %cst_405 = arith.constant 9.99999974E-6 : f32
    %450 = vector.broadcast %cst_405 : f32 to vector<1x64xf32>
    %451 = arith.addf %448, %450 : vector<1x64xf32>
    %452 = math.rsqrt %451 : vector<1x64xf32>
    %453 = arith.mulf %449, %452 : vector<1x64xf32>
    %454 = vector.broadcast %453 : vector<1x64xf32> to vector<8x64xf32>
    %455 = arith.mulf %444, %454 : vector<8x64xf32>
    %c0_406 = arith.constant 0 : index
    %c0_407 = arith.constant 0 : index
    %456 = vector.load %arg15[%c0_406, %c0_407] : memref<1x64xf32, #tpu.memory_space<vmem>>, vector<1x64xf32>
    %457 = vector.broadcast %456 : vector<1x64xf32> to vector<8x64xf32>
    %458 = arith.addf %455, %457 : vector<8x64xf32>
    %c2_408 = arith.constant 2 : index
    %459 = memref.load %arg16[%c2_408] : memref<3xf32, #tpu.memory_space<smem>>
    %cst_409 = arith.constant 0.000000e+00 : f32
    %460 = vector.broadcast %cst_409 : f32 to vector<8x64xf32>
    %461 = arith.cmpf ogt, %458, %460 : vector<8x64xf32>
    %462 = vector.broadcast %459 : f32 to vector<8x64xf32>
    %463 = arith.mulf %462, %458 : vector<8x64xf32>
    %464 = arith.select %461, %458, %463 : vector<8x64xi1>, vector<8x64xf32>
    %465 = vector.extract_strided_slice %464 {offsets = [0, 0], sizes = [4, 4], strides = [1, 1]} : vector<8x64xf32> to vector<4x4xf32>
    %c0_410 = arith.constant 0 : index
    %c0_411 = arith.constant 0 : index
    %c0_412 = arith.constant 0 : index
    %c0_413 = arith.constant 0 : index
    %466 = vector.load %arg19[%c0_410, %c0_411, %c0_412, %c0_413] : memref<2x16x4x4xf32, #tpu.memory_space<vmem>>, vector<1x1x4x4xf32>
    %467 = vector.shape_cast %466 : vector<1x1x4x4xf32> to vector<4x4xf32>
    %468 = vector.shape_cast %465 : vector<4x4xf32> to vector<1x1x4x4xf32>
    tpu.vector_store %arg19[%c0_410, %c0_411, %c0_412, %c0_413], %468 {strides = array<i32>} : memref<2x16x4x4xf32, #tpu.memory_space<vmem>>, vector<1x1x4x4xf32>,
    %469 = vector.extract_strided_slice %464 {offsets = [0, 4], sizes = [4, 4], strides = [1, 1]} : vector<8x64xf32> to vector<4x4xf32>
    %c0_414 = arith.constant 0 : index
    %c1_415 = arith.constant 1 : index
    %c0_416 = arith.constant 0 : index
    %c0_417 = arith.constant 0 : index
    %470 = vector.load %arg19[%c0_414, %c1_415, %c0_416, %c0_417] : memref<2x16x4x4xf32, #tpu.memory_space<vmem>>, vector<1x1x4x4xf32>
    %471 = vector.shape_cast %470 : vector<1x1x4x4xf32> to vector<4x4xf32>
    %472 = vector.shape_cast %469 : vector<4x4xf32> to vector<1x1x4x4xf32>
    tpu.vector_store %arg19[%c0_414, %c1_415, %c0_416, %c0_417], %472 {strides = array<i32>} : memref<2x16x4x4xf32, #tpu.memory_space<vmem>>, vector<1x1x4x4xf32>,
    %473 = vector.extract_strided_slice %464 {offsets = [0, 8], sizes = [4, 4], strides = [1, 1]} : vector<8x64xf32> to vector<4x4xf32>
    %c0_418 = arith.constant 0 : index
    %c2_419 = arith.constant 2 : index
    %c0_420 = arith.constant 0 : index
    %c0_421 = arith.constant 0 : index
    %474 = vector.load %arg19[%c0_418, %c2_419, %c0_420, %c0_421] : memref<2x16x4x4xf32, #tpu.memory_space<vmem>>, vector<1x1x4x4xf32>
    %475 = vector.shape_cast %474 : vector<1x1x4x4xf32> to vector<4x4xf32>
    %476 = vector.shape_cast %473 : vector<4x4xf32> to vector<1x1x4x4xf32>
    tpu.vector_store %arg19[%c0_418, %c2_419, %c0_420, %c0_421], %476 {strides = array<i32>} : memref<2x16x4x4xf32, #tpu.memory_space<vmem>>, vector<1x1x4x4xf32>,
    %477 = vector.extract_strided_slice %464 {offsets = [0, 12], sizes = [4, 4], strides = [1, 1]} : vector<8x64xf32> to vector<4x4xf32>
    %c0_422 = arith.constant 0 : index
    %c3_423 = arith.constant 3 : index
    %c0_424 = arith.constant 0 : index
    %c0_425 = arith.constant 0 : index
    %478 = vector.load %arg19[%c0_422, %c3_423, %c0_424, %c0_425] : memref<2x16x4x4xf32, #tpu.memory_space<vmem>>, vector<1x1x4x4xf32>
    %479 = vector.shape_cast %478 : vector<1x1x4x4xf32> to vector<4x4xf32>
    %480 = vector.shape_cast %477 : vector<4x4xf32> to vector<1x1x4x4xf32>
    tpu.vector_store %arg19[%c0_422, %c3_423, %c0_424, %c0_425], %480 {strides = array<i32>} : memref<2x16x4x4xf32, #tpu.memory_space<vmem>>, vector<1x1x4x4xf32>,
    %481 = vector.extract_strided_slice %464 {offsets = [0, 16], sizes = [4, 4], strides = [1, 1]} : vector<8x64xf32> to vector<4x4xf32>
    %c0_426 = arith.constant 0 : index
    %c4_427 = arith.constant 4 : index
    %c0_428 = arith.constant 0 : index
    %c0_429 = arith.constant 0 : index
    %482 = vector.load %arg19[%c0_426, %c4_427, %c0_428, %c0_429] : memref<2x16x4x4xf32, #tpu.memory_space<vmem>>, vector<1x1x4x4xf32>
    %483 = vector.shape_cast %482 : vector<1x1x4x4xf32> to vector<4x4xf32>
    %484 = vector.shape_cast %481 : vector<4x4xf32> to vector<1x1x4x4xf32>
    tpu.vector_store %arg19[%c0_426, %c4_427, %c0_428, %c0_429], %484 {strides = array<i32>} : memref<2x16x4x4xf32, #tpu.memory_space<vmem>>, vector<1x1x4x4xf32>,
    %485 = vector.extract_strided_slice %464 {offsets = [0, 20], sizes = [4, 4], strides = [1, 1]} : vector<8x64xf32> to vector<4x4xf32>
    %c0_430 = arith.constant 0 : index
    %c5_431 = arith.constant 5 : index
    %c0_432 = arith.constant 0 : index
    %c0_433 = arith.constant 0 : index
    %486 = vector.load %arg19[%c0_430, %c5_431, %c0_432, %c0_433] : memref<2x16x4x4xf32, #tpu.memory_space<vmem>>, vector<1x1x4x4xf32>
    %487 = vector.shape_cast %486 : vector<1x1x4x4xf32> to vector<4x4xf32>
    %488 = vector.shape_cast %485 : vector<4x4xf32> to vector<1x1x4x4xf32>
    tpu.vector_store %arg19[%c0_430, %c5_431, %c0_432, %c0_433], %488 {strides = array<i32>} : memref<2x16x4x4xf32, #tpu.memory_space<vmem>>, vector<1x1x4x4xf32>,
    %489 = vector.extract_strided_slice %464 {offsets = [0, 24], sizes = [4, 4], strides = [1, 1]} : vector<8x64xf32> to vector<4x4xf32>
    %c0_434 = arith.constant 0 : index
    %c6_435 = arith.constant 6 : index
    %c0_436 = arith.constant 0 : index
    %c0_437 = arith.constant 0 : index
    %490 = vector.load %arg19[%c0_434, %c6_435, %c0_436, %c0_437] : memref<2x16x4x4xf32, #tpu.memory_space<vmem>>, vector<1x1x4x4xf32>
    %491 = vector.shape_cast %490 : vector<1x1x4x4xf32> to vector<4x4xf32>
    %492 = vector.shape_cast %489 : vector<4x4xf32> to vector<1x1x4x4xf32>
    tpu.vector_store %arg19[%c0_434, %c6_435, %c0_436, %c0_437], %492 {strides = array<i32>} : memref<2x16x4x4xf32, #tpu.memory_space<vmem>>, vector<1x1x4x4xf32>,
    %493 = vector.extract_strided_slice %464 {offsets = [0, 28], sizes = [4, 4], strides = [1, 1]} : vector<8x64xf32> to vector<4x4xf32>
    %c0_438 = arith.constant 0 : index
    %c7_439 = arith.constant 7 : index
    %c0_440 = arith.constant 0 : index
    %c0_441 = arith.constant 0 : index
    %494 = vector.load %arg19[%c0_438, %c7_439, %c0_440, %c0_441] : memref<2x16x4x4xf32, #tpu.memory_space<vmem>>, vector<1x1x4x4xf32>
    %495 = vector.shape_cast %494 : vector<1x1x4x4xf32> to vector<4x4xf32>
    %496 = vector.shape_cast %493 : vector<4x4xf32> to vector<1x1x4x4xf32>
    tpu.vector_store %arg19[%c0_438, %c7_439, %c0_440, %c0_441], %496 {strides = array<i32>} : memref<2x16x4x4xf32, #tpu.memory_space<vmem>>, vector<1x1x4x4xf32>,
    %497 = vector.extract_strided_slice %464 {offsets = [0, 32], sizes = [4, 4], strides = [1, 1]} : vector<8x64xf32> to vector<4x4xf32>
    %c0_442 = arith.constant 0 : index
    %c8_443 = arith.constant 8 : index
    %c0_444 = arith.constant 0 : index
    %c0_445 = arith.constant 0 : index
    %498 = vector.load %arg19[%c0_442, %c8_443, %c0_444, %c0_445] : memref<2x16x4x4xf32, #tpu.memory_space<vmem>>, vector<1x1x4x4xf32>
    %499 = vector.shape_cast %498 : vector<1x1x4x4xf32> to vector<4x4xf32>
    %500 = vector.shape_cast %497 : vector<4x4xf32> to vector<1x1x4x4xf32>
    tpu.vector_store %arg19[%c0_442, %c8_443, %c0_444, %c0_445], %500 {strides = array<i32>} : memref<2x16x4x4xf32, #tpu.memory_space<vmem>>, vector<1x1x4x4xf32>,
    %501 = vector.extract_strided_slice %464 {offsets = [0, 36], sizes = [4, 4], strides = [1, 1]} : vector<8x64xf32> to vector<4x4xf32>
    %c0_446 = arith.constant 0 : index
    %c9_447 = arith.constant 9 : index
    %c0_448 = arith.constant 0 : index
    %c0_449 = arith.constant 0 : index
    %502 = vector.load %arg19[%c0_446, %c9_447, %c0_448, %c0_449] : memref<2x16x4x4xf32, #tpu.memory_space<vmem>>, vector<1x1x4x4xf32>
    %503 = vector.shape_cast %502 : vector<1x1x4x4xf32> to vector<4x4xf32>
    %504 = vector.shape_cast %501 : vector<4x4xf32> to vector<1x1x4x4xf32>
    tpu.vector_store %arg19[%c0_446, %c9_447, %c0_448, %c0_449], %504 {strides = array<i32>} : memref<2x16x4x4xf32, #tpu.memory_space<vmem>>, vector<1x1x4x4xf32>,
    %505 = vector.extract_strided_slice %464 {offsets = [0, 40], sizes = [4, 4], strides = [1, 1]} : vector<8x64xf32> to vector<4x4xf32>
    %c0_450 = arith.constant 0 : index
    %c10_451 = arith.constant 10 : index
    %c0_452 = arith.constant 0 : index
    %c0_453 = arith.constant 0 : index
    %506 = vector.load %arg19[%c0_450, %c10_451, %c0_452, %c0_453] : memref<2x16x4x4xf32, #tpu.memory_space<vmem>>, vector<1x1x4x4xf32>
    %507 = vector.shape_cast %506 : vector<1x1x4x4xf32> to vector<4x4xf32>
    %508 = vector.shape_cast %505 : vector<4x4xf32> to vector<1x1x4x4xf32>
    tpu.vector_store %arg19[%c0_450, %c10_451, %c0_452, %c0_453], %508 {strides = array<i32>} : memref<2x16x4x4xf32, #tpu.memory_space<vmem>>, vector<1x1x4x4xf32>,
    %509 = vector.extract_strided_slice %464 {offsets = [0, 44], sizes = [4, 4], strides = [1, 1]} : vector<8x64xf32> to vector<4x4xf32>
    %c0_454 = arith.constant 0 : index
    %c11_455 = arith.constant 11 : index
    %c0_456 = arith.constant 0 : index
    %c0_457 = arith.constant 0 : index
    %510 = vector.load %arg19[%c0_454, %c11_455, %c0_456, %c0_457] : memref<2x16x4x4xf32, #tpu.memory_space<vmem>>, vector<1x1x4x4xf32>
    %511 = vector.shape_cast %510 : vector<1x1x4x4xf32> to vector<4x4xf32>
    %512 = vector.shape_cast %509 : vector<4x4xf32> to vector<1x1x4x4xf32>
    tpu.vector_store %arg19[%c0_454, %c11_455, %c0_456, %c0_457], %512 {strides = array<i32>} : memref<2x16x4x4xf32, #tpu.memory_space<vmem>>, vector<1x1x4x4xf32>,
    %513 = vector.extract_strided_slice %464 {offsets = [0, 48], sizes = [4, 4], strides = [1, 1]} : vector<8x64xf32> to vector<4x4xf32>
    %c0_458 = arith.constant 0 : index
    %c12_459 = arith.constant 12 : index
    %c0_460 = arith.constant 0 : index
    %c0_461 = arith.constant 0 : index
    %514 = vector.load %arg19[%c0_458, %c12_459, %c0_460, %c0_461] : memref<2x16x4x4xf32, #tpu.memory_space<vmem>>, vector<1x1x4x4xf32>
    %515 = vector.shape_cast %514 : vector<1x1x4x4xf32> to vector<4x4xf32>
    %516 = vector.shape_cast %513 : vector<4x4xf32> to vector<1x1x4x4xf32>
    tpu.vector_store %arg19[%c0_458, %c12_459, %c0_460, %c0_461], %516 {strides = array<i32>} : memref<2x16x4x4xf32, #tpu.memory_space<vmem>>, vector<1x1x4x4xf32>,
    %517 = vector.extract_strided_slice %464 {offsets = [0, 52], sizes = [4, 4], strides = [1, 1]} : vector<8x64xf32> to vector<4x4xf32>
    %c0_462 = arith.constant 0 : index
    %c13_463 = arith.constant 13 : index
    %c0_464 = arith.constant 0 : index
    %c0_465 = arith.constant 0 : index
    %518 = vector.load %arg19[%c0_462, %c13_463, %c0_464, %c0_465] : memref<2x16x4x4xf32, #tpu.memory_space<vmem>>, vector<1x1x4x4xf32>
    %519 = vector.shape_cast %518 : vector<1x1x4x4xf32> to vector<4x4xf32>
    %520 = vector.shape_cast %517 : vector<4x4xf32> to vector<1x1x4x4xf32>
    tpu.vector_store %arg19[%c0_462, %c13_463, %c0_464, %c0_465], %520 {strides = array<i32>} : memref<2x16x4x4xf32, #tpu.memory_space<vmem>>, vector<1x1x4x4xf32>,
    %521 = vector.extract_strided_slice %464 {offsets = [0, 56], sizes = [4, 4], strides = [1, 1]} : vector<8x64xf32> to vector<4x4xf32>
    %c0_466 = arith.constant 0 : index
    %c14_467 = arith.constant 14 : index
    %c0_468 = arith.constant 0 : index
    %c0_469 = arith.constant 0 : index
    %522 = vector.load %arg19[%c0_466, %c14_467, %c0_468, %c0_469] : memref<2x16x4x4xf32, #tpu.memory_space<vmem>>, vector<1x1x4x4xf32>
    %523 = vector.shape_cast %522 : vector<1x1x4x4xf32> to vector<4x4xf32>
    %524 = vector.shape_cast %521 : vector<4x4xf32> to vector<1x1x4x4xf32>
    tpu.vector_store %arg19[%c0_466, %c14_467, %c0_468, %c0_469], %524 {strides = array<i32>} : memref<2x16x4x4xf32, #tpu.memory_space<vmem>>, vector<1x1x4x4xf32>,
    %525 = vector.extract_strided_slice %464 {offsets = [0, 60], sizes = [4, 4], strides = [1, 1]} : vector<8x64xf32> to vector<4x4xf32>
    %c0_470 = arith.constant 0 : index
    %c15_471 = arith.constant 15 : index
    %c0_472 = arith.constant 0 : index
    %c0_473 = arith.constant 0 : index
    %526 = vector.load %arg19[%c0_470, %c15_471, %c0_472, %c0_473] : memref<2x16x4x4xf32, #tpu.memory_space<vmem>>, vector<1x1x4x4xf32>
    %527 = vector.shape_cast %526 : vector<1x1x4x4xf32> to vector<4x4xf32>
    %528 = vector.shape_cast %525 : vector<4x4xf32> to vector<1x1x4x4xf32>
    tpu.vector_store %arg19[%c0_470, %c15_471, %c0_472, %c0_473], %528 {strides = array<i32>} : memref<2x16x4x4xf32, #tpu.memory_space<vmem>>, vector<1x1x4x4xf32>,
    %529 = vector.extract_strided_slice %464 {offsets = [4, 0], sizes = [4, 4], strides = [1, 1]} : vector<8x64xf32> to vector<4x4xf32>
    %c1_474 = arith.constant 1 : index
    %c0_475 = arith.constant 0 : index
    %c0_476 = arith.constant 0 : index
    %c0_477 = arith.constant 0 : index
    %530 = vector.load %arg19[%c1_474, %c0_475, %c0_476, %c0_477] : memref<2x16x4x4xf32, #tpu.memory_space<vmem>>, vector<1x1x4x4xf32>
    %531 = vector.shape_cast %530 : vector<1x1x4x4xf32> to vector<4x4xf32>
    %532 = vector.shape_cast %529 : vector<4x4xf32> to vector<1x1x4x4xf32>
    tpu.vector_store %arg19[%c1_474, %c0_475, %c0_476, %c0_477], %532 {strides = array<i32>} : memref<2x16x4x4xf32, #tpu.memory_space<vmem>>, vector<1x1x4x4xf32>,
    %533 = vector.extract_strided_slice %464 {offsets = [4, 4], sizes = [4, 4], strides = [1, 1]} : vector<8x64xf32> to vector<4x4xf32>
    %c1_478 = arith.constant 1 : index
    %c1_479 = arith.constant 1 : index
    %c0_480 = arith.constant 0 : index
    %c0_481 = arith.constant 0 : index
    %534 = vector.load %arg19[%c1_478, %c1_479, %c0_480, %c0_481] : memref<2x16x4x4xf32, #tpu.memory_space<vmem>>, vector<1x1x4x4xf32>
    %535 = vector.shape_cast %534 : vector<1x1x4x4xf32> to vector<4x4xf32>
    %536 = vector.shape_cast %533 : vector<4x4xf32> to vector<1x1x4x4xf32>
    tpu.vector_store %arg19[%c1_478, %c1_479, %c0_480, %c0_481], %536 {strides = array<i32>} : memref<2x16x4x4xf32, #tpu.memory_space<vmem>>, vector<1x1x4x4xf32>,
    %537 = vector.extract_strided_slice %464 {offsets = [4, 8], sizes = [4, 4], strides = [1, 1]} : vector<8x64xf32> to vector<4x4xf32>
    %c1_482 = arith.constant 1 : index
    %c2_483 = arith.constant 2 : index
    %c0_484 = arith.constant 0 : index
    %c0_485 = arith.constant 0 : index
    %538 = vector.load %arg19[%c1_482, %c2_483, %c0_484, %c0_485] : memref<2x16x4x4xf32, #tpu.memory_space<vmem>>, vector<1x1x4x4xf32>
    %539 = vector.shape_cast %538 : vector<1x1x4x4xf32> to vector<4x4xf32>
    %540 = vector.shape_cast %537 : vector<4x4xf32> to vector<1x1x4x4xf32>
    tpu.vector_store %arg19[%c1_482, %c2_483, %c0_484, %c0_485], %540 {strides = array<i32>} : memref<2x16x4x4xf32, #tpu.memory_space<vmem>>, vector<1x1x4x4xf32>,
    %541 = vector.extract_strided_slice %464 {offsets = [4, 12], sizes = [4, 4], strides = [1, 1]} : vector<8x64xf32> to vector<4x4xf32>
    %c1_486 = arith.constant 1 : index
    %c3_487 = arith.constant 3 : index
    %c0_488 = arith.constant 0 : index
    %c0_489 = arith.constant 0 : index
    %542 = vector.load %arg19[%c1_486, %c3_487, %c0_488, %c0_489] : memref<2x16x4x4xf32, #tpu.memory_space<vmem>>, vector<1x1x4x4xf32>
    %543 = vector.shape_cast %542 : vector<1x1x4x4xf32> to vector<4x4xf32>
    %544 = vector.shape_cast %541 : vector<4x4xf32> to vector<1x1x4x4xf32>
    tpu.vector_store %arg19[%c1_486, %c3_487, %c0_488, %c0_489], %544 {strides = array<i32>} : memref<2x16x4x4xf32, #tpu.memory_space<vmem>>, vector<1x1x4x4xf32>,
    %545 = vector.extract_strided_slice %464 {offsets = [4, 16], sizes = [4, 4], strides = [1, 1]} : vector<8x64xf32> to vector<4x4xf32>
    %c1_490 = arith.constant 1 : index
    %c4_491 = arith.constant 4 : index
    %c0_492 = arith.constant 0 : index
    %c0_493 = arith.constant 0 : index
    %546 = vector.load %arg19[%c1_490, %c4_491, %c0_492, %c0_493] : memref<2x16x4x4xf32, #tpu.memory_space<vmem>>, vector<1x1x4x4xf32>
    %547 = vector.shape_cast %546 : vector<1x1x4x4xf32> to vector<4x4xf32>
    %548 = vector.shape_cast %545 : vector<4x4xf32> to vector<1x1x4x4xf32>
    tpu.vector_store %arg19[%c1_490, %c4_491, %c0_492, %c0_493], %548 {strides = array<i32>} : memref<2x16x4x4xf32, #tpu.memory_space<vmem>>, vector<1x1x4x4xf32>,
    %549 = vector.extract_strided_slice %464 {offsets = [4, 20], sizes = [4, 4], strides = [1, 1]} : vector<8x64xf32> to vector<4x4xf32>
    %c1_494 = arith.constant 1 : index
    %c5_495 = arith.constant 5 : index
    %c0_496 = arith.constant 0 : index
    %c0_497 = arith.constant 0 : index
    %550 = vector.load %arg19[%c1_494, %c5_495, %c0_496, %c0_497] : memref<2x16x4x4xf32, #tpu.memory_space<vmem>>, vector<1x1x4x4xf32>
    %551 = vector.shape_cast %550 : vector<1x1x4x4xf32> to vector<4x4xf32>
    %552 = vector.shape_cast %549 : vector<4x4xf32> to vector<1x1x4x4xf32>
    tpu.vector_store %arg19[%c1_494, %c5_495, %c0_496, %c0_497], %552 {strides = array<i32>} : memref<2x16x4x4xf32, #tpu.memory_space<vmem>>, vector<1x1x4x4xf32>,
    %553 = vector.extract_strided_slice %464 {offsets = [4, 24], sizes = [4, 4], strides = [1, 1]} : vector<8x64xf32> to vector<4x4xf32>
    %c1_498 = arith.constant 1 : index
    %c6_499 = arith.constant 6 : index
    %c0_500 = arith.constant 0 : index
    %c0_501 = arith.constant 0 : index
    %554 = vector.load %arg19[%c1_498, %c6_499, %c0_500, %c0_501] : memref<2x16x4x4xf32, #tpu.memory_space<vmem>>, vector<1x1x4x4xf32>
    %555 = vector.shape_cast %554 : vector<1x1x4x4xf32> to vector<4x4xf32>
    %556 = vector.shape_cast %553 : vector<4x4xf32> to vector<1x1x4x4xf32>
    tpu.vector_store %arg19[%c1_498, %c6_499, %c0_500, %c0_501], %556 {strides = array<i32>} : memref<2x16x4x4xf32, #tpu.memory_space<vmem>>, vector<1x1x4x4xf32>,
    %557 = vector.extract_strided_slice %464 {offsets = [4, 28], sizes = [4, 4], strides = [1, 1]} : vector<8x64xf32> to vector<4x4xf32>
    %c1_502 = arith.constant 1 : index
    %c7_503 = arith.constant 7 : index
    %c0_504 = arith.constant 0 : index
    %c0_505 = arith.constant 0 : index
    %558 = vector.load %arg19[%c1_502, %c7_503, %c0_504, %c0_505] : memref<2x16x4x4xf32, #tpu.memory_space<vmem>>, vector<1x1x4x4xf32>
    %559 = vector.shape_cast %558 : vector<1x1x4x4xf32> to vector<4x4xf32>
    %560 = vector.shape_cast %557 : vector<4x4xf32> to vector<1x1x4x4xf32>
    tpu.vector_store %arg19[%c1_502, %c7_503, %c0_504, %c0_505], %560 {strides = array<i32>} : memref<2x16x4x4xf32, #tpu.memory_space<vmem>>, vector<1x1x4x4xf32>,
    %561 = vector.extract_strided_slice %464 {offsets = [4, 32], sizes = [4, 4], strides = [1, 1]} : vector<8x64xf32> to vector<4x4xf32>
    %c1_506 = arith.constant 1 : index
    %c8_507 = arith.constant 8 : index
    %c0_508 = arith.constant 0 : index
    %c0_509 = arith.constant 0 : index
    %562 = vector.load %arg19[%c1_506, %c8_507, %c0_508, %c0_509] : memref<2x16x4x4xf32, #tpu.memory_space<vmem>>, vector<1x1x4x4xf32>
    %563 = vector.shape_cast %562 : vector<1x1x4x4xf32> to vector<4x4xf32>
    %564 = vector.shape_cast %561 : vector<4x4xf32> to vector<1x1x4x4xf32>
    tpu.vector_store %arg19[%c1_506, %c8_507, %c0_508, %c0_509], %564 {strides = array<i32>} : memref<2x16x4x4xf32, #tpu.memory_space<vmem>>, vector<1x1x4x4xf32>,
    %565 = vector.extract_strided_slice %464 {offsets = [4, 36], sizes = [4, 4], strides = [1, 1]} : vector<8x64xf32> to vector<4x4xf32>
    %c1_510 = arith.constant 1 : index
    %c9_511 = arith.constant 9 : index
    %c0_512 = arith.constant 0 : index
    %c0_513 = arith.constant 0 : index
    %566 = vector.load %arg19[%c1_510, %c9_511, %c0_512, %c0_513] : memref<2x16x4x4xf32, #tpu.memory_space<vmem>>, vector<1x1x4x4xf32>
    %567 = vector.shape_cast %566 : vector<1x1x4x4xf32> to vector<4x4xf32>
    %568 = vector.shape_cast %565 : vector<4x4xf32> to vector<1x1x4x4xf32>
    tpu.vector_store %arg19[%c1_510, %c9_511, %c0_512, %c0_513], %568 {strides = array<i32>} : memref<2x16x4x4xf32, #tpu.memory_space<vmem>>, vector<1x1x4x4xf32>,
    %569 = vector.extract_strided_slice %464 {offsets = [4, 40], sizes = [4, 4], strides = [1, 1]} : vector<8x64xf32> to vector<4x4xf32>
    %c1_514 = arith.constant 1 : index
    %c10_515 = arith.constant 10 : index
    %c0_516 = arith.constant 0 : index
    %c0_517 = arith.constant 0 : index
    %570 = vector.load %arg19[%c1_514, %c10_515, %c0_516, %c0_517] : memref<2x16x4x4xf32, #tpu.memory_space<vmem>>, vector<1x1x4x4xf32>
    %571 = vector.shape_cast %570 : vector<1x1x4x4xf32> to vector<4x4xf32>
    %572 = vector.shape_cast %569 : vector<4x4xf32> to vector<1x1x4x4xf32>
    tpu.vector_store %arg19[%c1_514, %c10_515, %c0_516, %c0_517], %572 {strides = array<i32>} : memref<2x16x4x4xf32, #tpu.memory_space<vmem>>, vector<1x1x4x4xf32>,
    %573 = vector.extract_strided_slice %464 {offsets = [4, 44], sizes = [4, 4], strides = [1, 1]} : vector<8x64xf32> to vector<4x4xf32>
    %c1_518 = arith.constant 1 : index
    %c11_519 = arith.constant 11 : index
    %c0_520 = arith.constant 0 : index
    %c0_521 = arith.constant 0 : index
    %574 = vector.load %arg19[%c1_518, %c11_519, %c0_520, %c0_521] : memref<2x16x4x4xf32, #tpu.memory_space<vmem>>, vector<1x1x4x4xf32>
    %575 = vector.shape_cast %574 : vector<1x1x4x4xf32> to vector<4x4xf32>
    %576 = vector.shape_cast %573 : vector<4x4xf32> to vector<1x1x4x4xf32>
    tpu.vector_store %arg19[%c1_518, %c11_519, %c0_520, %c0_521], %576 {strides = array<i32>} : memref<2x16x4x4xf32, #tpu.memory_space<vmem>>, vector<1x1x4x4xf32>,
    %577 = vector.extract_strided_slice %464 {offsets = [4, 48], sizes = [4, 4], strides = [1, 1]} : vector<8x64xf32> to vector<4x4xf32>
    %c1_522 = arith.constant 1 : index
    %c12_523 = arith.constant 12 : index
    %c0_524 = arith.constant 0 : index
    %c0_525 = arith.constant 0 : index
    %578 = vector.load %arg19[%c1_522, %c12_523, %c0_524, %c0_525] : memref<2x16x4x4xf32, #tpu.memory_space<vmem>>, vector<1x1x4x4xf32>
    %579 = vector.shape_cast %578 : vector<1x1x4x4xf32> to vector<4x4xf32>
    %580 = vector.shape_cast %577 : vector<4x4xf32> to vector<1x1x4x4xf32>
    tpu.vector_store %arg19[%c1_522, %c12_523, %c0_524, %c0_525], %580 {strides = array<i32>} : memref<2x16x4x4xf32, #tpu.memory_space<vmem>>, vector<1x1x4x4xf32>,
    %581 = vector.extract_strided_slice %464 {offsets = [4, 52], sizes = [4, 4], strides = [1, 1]} : vector<8x64xf32> to vector<4x4xf32>
    %c1_526 = arith.constant 1 : index
    %c13_527 = arith.constant 13 : index
    %c0_528 = arith.constant 0 : index
    %c0_529 = arith.constant 0 : index
    %582 = vector.load %arg19[%c1_526, %c13_527, %c0_528, %c0_529] : memref<2x16x4x4xf32, #tpu.memory_space<vmem>>, vector<1x1x4x4xf32>
    %583 = vector.shape_cast %582 : vector<1x1x4x4xf32> to vector<4x4xf32>
    %584 = vector.shape_cast %581 : vector<4x4xf32> to vector<1x1x4x4xf32>
    tpu.vector_store %arg19[%c1_526, %c13_527, %c0_528, %c0_529], %584 {strides = array<i32>} : memref<2x16x4x4xf32, #tpu.memory_space<vmem>>, vector<1x1x4x4xf32>,
    %585 = vector.extract_strided_slice %464 {offsets = [4, 56], sizes = [4, 4], strides = [1, 1]} : vector<8x64xf32> to vector<4x4xf32>
    %c1_530 = arith.constant 1 : index
    %c14_531 = arith.constant 14 : index
    %c0_532 = arith.constant 0 : index
    %c0_533 = arith.constant 0 : index
    %586 = vector.load %arg19[%c1_530, %c14_531, %c0_532, %c0_533] : memref<2x16x4x4xf32, #tpu.memory_space<vmem>>, vector<1x1x4x4xf32>
    %587 = vector.shape_cast %586 : vector<1x1x4x4xf32> to vector<4x4xf32>
    %588 = vector.shape_cast %585 : vector<4x4xf32> to vector<1x1x4x4xf32>
    tpu.vector_store %arg19[%c1_530, %c14_531, %c0_532, %c0_533], %588 {strides = array<i32>} : memref<2x16x4x4xf32, #tpu.memory_space<vmem>>, vector<1x1x4x4xf32>,
    %589 = vector.extract_strided_slice %464 {offsets = [4, 60], sizes = [4, 4], strides = [1, 1]} : vector<8x64xf32> to vector<4x4xf32>
    %c1_534 = arith.constant 1 : index
    %c15_535 = arith.constant 15 : index
    %c0_536 = arith.constant 0 : index
    %c0_537 = arith.constant 0 : index
    %590 = vector.load %arg19[%c1_534, %c15_535, %c0_536, %c0_537] : memref<2x16x4x4xf32, #tpu.memory_space<vmem>>, vector<1x1x4x4xf32>
    %591 = vector.shape_cast %590 : vector<1x1x4x4xf32> to vector<4x4xf32>
    %592 = vector.shape_cast %589 : vector<4x4xf32> to vector<1x1x4x4xf32>
    tpu.vector_store %arg19[%c1_534, %c15_535, %c0_536, %c0_537], %592 {strides = array<i32>} : memref<2x16x4x4xf32, #tpu.memory_space<vmem>>, vector<1x1x4x4xf32>,
    return
  }
}

</mosaic_0001>

<llo_original>
// kernel: forward.1
$region0: #{forward.1}
  #allocation0 [shape = 'u32[]', space=smem, size = 0x4, offset = 0x4, fixed_abs, tag = 'smem constant byte address 0x4 - core index']
  #allocation1 [shape = 'u32[72,128]{1,0:T(1,128)}', space=vmem, size = 0x9000, scoped, tag = 'internal scratch']
  #allocation2 [shape = 'f32[36,72]{1,0:T(8,128)}', space=vmem, size = 0x5000, scoped, tag = 'scratch operand']
  #allocation3 [shape = 'f32[36,144]{1,0:T(8,128)}', space=vmem, size = 0xa000, scoped, tag = 'scratch operand']
  #allocation4 [shape = 'f32[20,160]{1,0:T(8,128)}', space=vmem, size = 0x6000, scoped, tag = 'scratch operand']
  %s0 = inlined_call_operand.vmem [shape: f32[2,4,16,16], index: 0, kind: input, shape index: {}]
  %s1 = inlined_call_operand.vmem [shape: bf16[96,36], index: 1, kind: input, shape index: {}]
  %s2 = inlined_call_operand.vmem [shape: bf16[3,72,128], index: 2, kind: input, shape index: {}]
  %s3 = inlined_call_operand.vmem [shape: f32[128,128], index: 3, kind: input, shape index: {}]
  %s4 = inlined_call_operand.vmem [shape: f32[1,128], index: 4, kind: input, shape index: {}]
  %s5 = inlined_call_operand.vmem [shape: f32[1,128], index: 5, kind: input, shape index: {}]
  %s6 = inlined_call_operand.vmem [shape: bf16[48,36], index: 6, kind: input, shape index: {}]
  %s7 = inlined_call_operand.vmem [shape: bf16[3,144,128], index: 7, kind: input, shape index: {}]
  %s8 = inlined_call_operand.vmem [shape: f32[128,128], index: 8, kind: input, shape index: {}]
  %s9 = inlined_call_operand.vmem [shape: f32[1,128], index: 9, kind: input, shape index: {}]
  %s10 = inlined_call_operand.vmem [shape: f32[1,128], index: 10, kind: input, shape index: {}]
  %s11 = inlined_call_operand.vmem [shape: bf16[24,20], index: 11, kind: input, shape index: {}]
  %s12 = inlined_call_operand.vmem [shape: bf16[3,160,64], index: 12, kind: input, shape index: {}]
  %s13 = inlined_call_operand.vmem [shape: f32[64,64], index: 13, kind: input, shape index: {}]
  %s14 = inlined_call_operand.vmem [shape: f32[1,64], index: 14, kind: input, shape index: {}]
  %s15 = inlined_call_operand.vmem [shape: f32[1,64], index: 15, kind: input, shape index: {}]
  %s16 = inlined_call_operand.vmem [shape: f32[3], index: 16, kind: input, shape index: {}]
  %s17 = inlined_call_operand.hbm [shape: f32[2,8,16,16], index: 17, kind: output, shape index: {0}]
  %s18 = inlined_call_operand.vmem [shape: f32[2,16,8,8], index: 18, kind: output, shape index: {1}]
  %s19 = inlined_call_operand.vmem [shape: f32[2,16,4,4], index: 19, kind: output, shape index: {2}]
  %20 = xla_tuple %s17, %s18, %s19
  %s21 = sld [smem:[#allocation0]]
  $region98: #{forward.1} parent=0
    _
  %s23 = ssub.s32 1, %s21
  %s24 = scalar_select 0, %s23, %s21
  $region1: #{forward.1} parent=0
    #allocation5 [shape = 'u8[512]{0}', space=smem, size = 0x200, scoped, tag = 'input window, operand 16, single buffered']
    #allocation6 [shape = 's32[1]{0}', space=sflag, size = 0x4, scoped, tag = 'scoped memory for forward.1']
    #allocation7 [shape = 's32[1]{0}', space=sflag, size = 0x4, scoped, tag = 'scoped memory for forward.1']
    #allocation8 [shape = 'u8[131072]{0}', space=vmem, size = 0x20000, scoped, tag = 'output window, operand 0, single buffered']
    %25 = vsyncpa [#allocation7], 0
    %26 = vsyncpa [#allocation6], 0
    // Predicated region
    $region2: #{forward.1} parent=1 // pred_check
      _
    $region3: #{forward.1} parent=1 // pred_check_branch
      %28 = sbr.rel (0) target = $region5
    $region4: #{forward.1} parent=1 // pred_region
      _
    $region5: #{forward.1} parent=1 // pred_fallthru
      _
    // Predicated region
    $region6: #{forward.1} parent=1 // pred_check
      _
    $region7: #{forward.1} parent=1 // pred_check_branch
      %30 = sbr.rel (0) target = $region9
    $region8: #{forward.1} parent=1 // pred_region
      _
    $region9: #{forward.1} parent=1 // pred_fallthru
      _
    // Predicated region
    $region10: #{forward.1} parent=1 // pred_check
      _
    $region11: #{forward.1} parent=1 // pred_check_branch
      %32 = sbr.rel (0) target = $region13
    $region12: #{forward.1} parent=1 // pred_region
      _
    $region13: #{forward.1} parent=1 // pred_fallthru
      _
    // Predicated region
    $region14: #{forward.1} parent=1 // pred_check
      _
    $region15: #{forward.1} parent=1 // pred_check_branch
      %34 = sbr.rel (0) target = $region17
    $region16: #{forward.1} parent=1 // pred_region
      _
    $region17: #{forward.1} parent=1 // pred_fallthru
      _
    // Predicated region
    $region18: #{forward.1} parent=1 // pred_check
      _
    $region19: #{forward.1} parent=1 // pred_check_branch
      %36 = sbr.rel (0) target = $region21
    $region20: #{forward.1} parent=1 // pred_region
      _
    $region21: #{forward.1} parent=1 // pred_fallthru
      _
    // Predicated region
    $region22: #{forward.1} parent=1 // pred_check
      _
    $region23: #{forward.1} parent=1 // pred_check_branch
      %38 = sbr.rel (0) target = $region25
    $region24: #{forward.1} parent=1 // pred_region
      _
    $region25: #{forward.1} parent=1 // pred_fallthru
      _
    // Predicated region
    $region26: #{forward.1} parent=1 // pred_check
      _
    $region27: #{forward.1} parent=1 // pred_check_branch
      %40 = sbr.rel (0) target = $region29
    $region28: #{forward.1} parent=1 // pred_region
      _
    $region29: #{forward.1} parent=1 // pred_fallthru
      _
    // Predicated region
    $region30: #{forward.1} parent=1 // pred_check
      _
    $region31: #{forward.1} parent=1 // pred_check_branch
      %42 = sbr.rel (0) target = $region33
    $region32: #{forward.1} parent=1 // pred_region
      _
    $region33: #{forward.1} parent=1 // pred_fallthru
      _
    // Predicated region
    $region34: #{forward.1} parent=1 // pred_check
      _
    $region35: #{forward.1} parent=1 // pred_check_branch
      %44 = sbr.rel (0) target = $region37
    $region36: #{forward.1} parent=1 // pred_region
      _
    $region37: #{forward.1} parent=1 // pred_fallthru
      _
    // Predicated region
    $region38: #{forward.1} parent=1 // pred_check
      _
    $region39: #{forward.1} parent=1 // pred_check_branch
      %46 = sbr.rel (0) target = $region41
    $region40: #{forward.1} parent=1 // pred_region
      _
    $region41: #{forward.1} parent=1 // pred_fallthru
      _
    // Predicated region
    $region42: #{forward.1} parent=1 // pred_check
      _
    $region43: #{forward.1} parent=1 // pred_check_branch
      %48 = sbr.rel (0) target = $region45
    $region44: #{forward.1} parent=1 // pred_region
      _
    $region45: #{forward.1} parent=1 // pred_fallthru
      _
    // Predicated region
    $region46: #{forward.1} parent=1 // pred_check
      _
    $region47: #{forward.1} parent=1 // pred_check_branch
      %50 = sbr.rel (0) target = $region49
    $region48: #{forward.1} parent=1 // pred_region
      _
    $region49: #{forward.1} parent=1 // pred_fallthru
      _
    // Predicated region
    $region50: #{forward.1} parent=1 // pred_check
      _
    $region51: #{forward.1} parent=1 // pred_check_branch
      %52 = sbr.rel (0) target = $region53
    $region52: #{forward.1} parent=1 // pred_region
      _
    $region53: #{forward.1} parent=1 // pred_fallthru
      _
    // Predicated region
    $region54: #{forward.1} parent=1 // pred_check
      _
    $region55: #{forward.1} parent=1 // pred_check_branch
      %54 = sbr.rel (0) target = $region57
    $region56: #{forward.1} parent=1 // pred_region
      _
    $region57: #{forward.1} parent=1 // pred_fallthru
      _
    // Predicated region
    $region58: #{forward.1} parent=1 // pred_check
      _
    $region59: #{forward.1} parent=1 // pred_check_branch
      %56 = sbr.rel (0) target = $region61
    $region60: #{forward.1} parent=1 // pred_region
      _
    $region61: #{forward.1} parent=1 // pred_fallthru
      _
    // Predicated region
    $region62: #{forward.1} parent=1 // pred_check
      _
    $region63: #{forward.1} parent=1 // pred_check_branch
      %58 = sbr.rel (0) target = $region65
    $region64: #{forward.1} parent=1 // pred_region
      _
    $region65: #{forward.1} parent=1 // pred_fallthru
      _
    // Predicated region
    $region66: #{forward.1} parent=1 // pred_check
      _
    $region67: #{forward.1} parent=1 // pred_check_branch
      %60 = sbr.rel (0) target = $region69
    $region68: #{forward.1} parent=1 // pred_region
      %62 = vsyncadd [#allocation7], 0
      %s64 = sshll.u32 %s16, 4
      %s65 = int_to_ptr.vmem [resolvable:$true] %s64
      %67 = dma.vmem_to_smem %s65, 16, [#allocation5], [#allocation7]
    $region69: #{forward.1} parent=1 // pred_fallthru
      _
    // Predicated region
    $region70: #{forward.1} parent=1 // pred_check
      _
    $region71: #{forward.1} parent=1 // pred_check_branch
      %69 = sbr.rel (0) target = $region73
    $region72: #{forward.1} parent=1 // pred_region
      %71 = dma.done [#allocation7], 16
    $region73: #{forward.1} parent=1 // pred_fallthru
      _
    %72 = sfence
    %vm74 = vcmask 588800
    %75 = vst.msk [vmem:[#allocation2] sm:$0xff] %vm74, 0.0
    %76 = vst.msk [vmem:[#allocation2 + $0x8] sm:$0xff] %vm74, 0.0
    %77 = vst.msk [vmem:[#allocation2 + $0x10] sm:$0xff] %vm74, 0.0
    %78 = vst.msk [vmem:[#allocation2 + $0x18] sm:$0xff] %vm74, 0.0
    %vm79 = vcmask 584704
    %80 = vst.msk [vmem:[#allocation2 + $0x20] sm:$0xf] %vm79, 0.0
    %v81 = vld [vmem:[%s0] sm:$0xff]
    %v82 = vld [vmem:[%s0 + $0x8] sm:$0xff]
    %85 = vrot.lane.b32.xlu0 %v81, 1
    %v86 = vpop.permute.xlu0 %85
    %87 = vrot.lane.b32.xlu0 %v82, 1
    %v88 = vpop.permute.xlu0 %87
    %vm91 = vcmask 138248
    %92 = vst.msk [vmem:[#allocation2 + $0x1] sm:$0xff] %vm91, %v86
    %93 = vst.msk [vmem:[#allocation2 + $0x9] sm:$0xff] %vm91, %v88
    %s94 = scalar_lea.vmem %s0, 16
    %v95 = vld [vmem:[%s94] sm:$0xff]
    %v96 = vld [vmem:[%s94 + $0x8] sm:$0xff]
    %99 = vrot.lane.b32.xlu0 %v95, 19
    %v100 = vpop.permute.xlu0 %99
    %101 = vrot.lane.b32.xlu0 %v96, 19
    %v102 = vpop.permute.xlu0 %101
    %vm105 = vcmask 285848
    %106 = vst.msk [vmem:[#allocation2 + $0x1] sm:$0xff] %vm105, %v100
    %107 = vst.msk [vmem:[#allocation2 + $0x9] sm:$0xff] %vm105, %v102
    %s108 = scalar_lea.vmem %s0, 32
    %v109 = vld [vmem:[%s108] sm:$0xff]
    %v110 = vld [vmem:[%s108 + $0x8] sm:$0xff]
    %113 = vrot.lane.b32.xlu0 %v109, 37
    %v114 = vpop.permute.xlu0 %113
    %115 = vrot.lane.b32.xlu0 %v110, 37
    %v116 = vpop.permute.xlu0 %115
    %vm119 = vcmask 433448
    %120 = vst.msk [vmem:[#allocation2 + $0x1] sm:$0xff] %vm119, %v114
    %121 = vst.msk [vmem:[#allocation2 + $0x9] sm:$0xff] %vm119, %v116
    %s122 = scalar_lea.vmem %s0, 48
    %v123 = vld [vmem:[%s122] sm:$0xff]
    %v124 = vld [vmem:[%s122 + $0x8] sm:$0xff]
    %127 = vrot.lane.b32.xlu0 %v123, 55
    %v128 = vpop.permute.xlu0 %127
    %129 = vrot.lane.b32.xlu0 %v124, 55
    %v130 = vpop.permute.xlu0 %129
    %vm133 = vcmask 581048
    %134 = vst.msk [vmem:[#allocation2 + $0x1] sm:$0xff] %vm133, %v128
    %135 = vst.msk [vmem:[#allocation2 + $0x9] sm:$0xff] %vm133, %v130
    %s136 = scalar_lea.vmem %s0, 64
    %v137 = vld [vmem:[%s136] sm:$0xff]
    %v138 = vld [vmem:[%s136 + $0x8] sm:$0xff]
    %141 = vrot.lane.b32.xlu0 %v137, 1
    %v142 = vpop.permute.xlu0 %141
    %143 = vrot.lane.b32.xlu0 %v138, 1
    %v144 = vpop.permute.xlu0 %143
    %147 = vst.msk [vmem:[#allocation2 + $0x13] sm:$0xff] %vm91, %v142
    %148 = vst.msk [vmem:[#allocation2 + $0x1b] sm:$0xff] %vm91, %v144
    %s149 = scalar_lea.vmem %s0, 80
    %v150 = vld [vmem:[%s149] sm:$0xff]
    %v151 = vld [vmem:[%s149 + $0x8] sm:$0xff]
    %154 = vrot.lane.b32.xlu0 %v150, 19
    %v155 = vpop.permute.xlu0 %154
    %156 = vrot.lane.b32.xlu0 %v151, 19
    %v157 = vpop.permute.xlu0 %156
    %160 = vst.msk [vmem:[#allocation2 + $0x13] sm:$0xff] %vm105, %v155
    %161 = vst.msk [vmem:[#allocation2 + $0x1b] sm:$0xff] %vm105, %v157
    %s162 = scalar_lea.vmem %s0, 96
    %v163 = vld [vmem:[%s162] sm:$0xff]
    %v164 = vld [vmem:[%s162 + $0x8] sm:$0xff]
    %167 = vrot.lane.b32.xlu0 %v163, 37
    %v168 = vpop.permute.xlu0 %167
    %169 = vrot.lane.b32.xlu0 %v164, 37
    %v170 = vpop.permute.xlu0 %169
    %173 = vst.msk [vmem:[#allocation2 + $0x13] sm:$0xff] %vm119, %v168
    %174 = vst.msk [vmem:[#allocation2 + $0x1b] sm:$0xff] %vm119, %v170
    %s175 = scalar_lea.vmem %s0, 112
    %v176 = vld [vmem:[%s175] sm:$0xff]
    %v177 = vld [vmem:[%s175 + $0x8] sm:$0xff]
    %180 = vrot.lane.b32.xlu0 %v176, 55
    %v181 = vpop.permute.xlu0 %180
    %182 = vrot.lane.b32.xlu0 %v177, 55
    %v183 = vpop.permute.xlu0 %182
    %186 = vst.msk [vmem:[#allocation2 + $0x13] sm:$0xff] %vm133, %v181
    %187 = vst.msk [vmem:[#allocation2 + $0x1b] sm:$0xff] %vm133, %v183
    %v188 = vld [vmem:[#allocation2] sm:$0xff]
    %v189 = vld [vmem:[#allocation2 + $0x8] sm:$0xff]
    %v190 = vld [vmem:[#allocation2 + $0x10] sm:$0xff]
    %v191 = vld [vmem:[#allocation2 + $0x18] sm:$0xff]
    %v192 = vld [vmem:[#allocation2 + $0x20] sm:$0xf]
    %v193 = vpack.c.bf16 %v189, %v188
    %v194 = vpack.c.bf16 %v191, %v190
    %v195 = vpack.c.bf16 %v192, %v192
    %v196 = vld [vmem:[%s1] sm:$0xf]
    %v197 = vld [vmem:[%s1 + $0x4] sm:$0xf]
    %v198 = vld [vmem:[%s1 + $0x8] sm:$0xf]
    %v199 = vld [vmem:[%s1 + $0xc] sm:$0xf]
    %v200 = vld [vmem:[%s1 + $0x10] sm:$0xf]
    %v201 = vld [vmem:[%s1 + $0x14] sm:$0xf]
    %v202 = vld [vmem:[%s1 + $0x18] sm:$0xf]
    %v203 = vld [vmem:[%s1 + $0x1c] sm:$0xf]
    %v204 = vld [vmem:[%s1 + $0x20] sm:$0xf]
    %v205 = vld [vmem:[%s1 + $0x24] sm:$0xf]
    %v206 = vld [vmem:[%s1 + $0x28] sm:$0xf]
    %v207 = vld [vmem:[%s1 + $0x2c] sm:$0xf]
    %v220 = vunpack.c.l.b16 %v196
    %v221 = vunpack.c.l.b16 %v197
    %v222 = vunpack.c.l.b16 %v198
    %v223 = vunpack.c.l.b16 %v199
    %v224 = vunpack.c.l.b16 %v200
    %v225 = vunpack.c.l.b16 %v201
    %v226 = vunpack.c.l.b16 %v202
    %v227 = vunpack.c.l.b16 %v203
    %v228 = vunpack.c.l.b16 %v204
    %v229 = vunpack.c.l.b16 %v205
    %v230 = vunpack.c.l.b16 %v206
    %v231 = vunpack.c.l.b16 %v207
    %v232 = vpack.c.b16 %v221, %v220
    %v233 = vpack.c.b16 %v223, %v222
    %v234 = vpack.c.b16 %v225, %v224
    %v235 = vpack.c.b16 %v227, %v226
    %v236 = vpack.c.b16 %v229, %v228
    %v237 = vpack.c.b16 %v231, %v230
    %vm238 = vcmask 293888
    %v240 = vsel %vm238, %v232, 0
    %v243 = vsel %vm238, %v233, 0
    %v246 = vsel %vm238, %v234, 0
    %v249 = vsel %vm238, %v235, 0
    %v252 = vsel %vm238, %v236, 0
    %v255 = vsel %vm238, %v237, 0
    %vm257 = vcmask 1041408
    %v259 = vsel %vm257, %v195, 0
    %261 = vmatpush.bf16.msra.mxu0 0
    %262 = vmatpush.bf16.msra.mxu0 0
    %263 = vmatpush.bf16.msra.mxu0 0
    %264 = vmatpush.bf16.msra.mxu0 0
    %265 = vmatpush.bf16.msra.mxu0 0
    %266 = vmatpush.bf16.msra.mxu0 %v259
    %267 = vmatpush.bf16.msra.mxu0 %v194
    %268 = vmatpush.bf16.msra.mxu0 %v193
    %269 = vmatmul.bf16.gmra.mxu0 %v240
    %v270 = vpop.f32.mrf.mxu0
    %v271 = vadd.f32 0.0, %v270
    %v272 = vpop.f32.mrf.mxu0
    %v273 = vadd.f32 0.0, %v272
    %274 = vmatmul.bf16.gmra.mxu0 %v243
    %v275 = vpop.f32.mrf.mxu0
    %v276 = vadd.f32 0.0, %v275
    %v277 = vpop.f32.mrf.mxu0
    %v278 = vadd.f32 0.0, %v277
    %279 = vmatmul.bf16.gmra.mxu0 %v246
    %v280 = vpop.f32.mrf.mxu0
    %v281 = vadd.f32 0.0, %v280
    %v282 = vpop.f32.mrf.mxu0
    %v283 = vadd.f32 0.0, %v282
    %284 = vmatmul.bf16.gmra.mxu0 %v249
    %v285 = vpop.f32.mrf.mxu0
    %v286 = vadd.f32 0.0, %v285
    %v287 = vpop.f32.mrf.mxu0
    %v288 = vadd.f32 0.0, %v287
    %289 = vmatmul.bf16.gmra.mxu0 %v252
    %v290 = vpop.f32.mrf.mxu0
    %v291 = vadd.f32 0.0, %v290
    %v292 = vpop.f32.mrf.mxu0
    %v293 = vadd.f32 0.0, %v292
    %294 = vmatmul.bf16.gmra.mxu0 %v255
    %v295 = vpop.f32.mrf.mxu0
    %v296 = vadd.f32 0.0, %v295
    %v297 = vpop.f32.mrf.mxu0
    %v298 = vadd.f32 0.0, %v297
    %299 = vdwg.mxu0
    %v300 = vpack.c.bf16 %v273, %v271
    %v301 = vpack.c.bf16 %v278, %v276
    %v302 = vld [vmem:[%s2] sm:$0xf]
    %v303 = vld [vmem:[%s2 + $0x4] sm:$0xf]
    %v304 = vld [vmem:[%s2 + $0x8] sm:$0xf]
    %v305 = vld [vmem:[%s2 + $0xc] sm:$0xf]
    %v306 = vld [vmem:[%s2 + $0x10] sm:$0xf]
    %v307 = vld [vmem:[%s2 + $0x14] sm:$0xf]
    %v308 = vld [vmem:[%s2 + $0x18] sm:$0xf]
    %v309 = vld [vmem:[%s2 + $0x1c] sm:$0xf]
    %v310 = vld [vmem:[%s2 + $0x20] sm:$0xf]
    %v311 = vpack.c.bf16 %v283, %v281
    %v312 = vpack.c.bf16 %v288, %v286
    %s313 = scalar_lea.vmem %s2, 36
    %v314 = vld [vmem:[%s313] sm:$0xf]
    %v315 = vld [vmem:[%s313 + $0x4] sm:$0xf]
    %v316 = vld [vmem:[%s313 + $0x8] sm:$0xf]
    %v317 = vld [vmem:[%s313 + $0xc] sm:$0xf]
    %v318 = vld [vmem:[%s313 + $0x10] sm:$0xf]
    %v319 = vld [vmem:[%s313 + $0x14] sm:$0xf]
    %v320 = vld [vmem:[%s313 + $0x18] sm:$0xf]
    %v321 = vld [vmem:[%s313 + $0x1c] sm:$0xf]
    %v322 = vld [vmem:[%s313 + $0x20] sm:$0xf]
    %v332 = vunpack.c.l.b16 %v314
    %v333 = vunpack.c.l.b16 %v315
    %v334 = vunpack.c.l.b16 %v316
    %v335 = vunpack.c.l.b16 %v317
    %v336 = vunpack.c.l.b16 %v318
    %v337 = vunpack.c.l.b16 %v319
    %v338 = vunpack.c.l.b16 %v320
    %v339 = vunpack.c.l.b16 %v321
    %v340 = vunpack.c.l.b16 %v322
    %v341 = vpack.c.b16 %v333, %v332
    %v342 = vpack.c.b16 %v335, %v334
    %v343 = vpack.c.b16 %v337, %v336
    %v344 = vpack.c.b16 %v339, %v338
    %v345 = vpack.c.b16 %v340, %v340
    %v351 = vsel %vm74, %v311, 0
    %v354 = vsel %vm74, %v312, 0
    %vm356 = vcmask 1043456
    %v358 = vsel %vm356, %v345, 0
    %360 = vmatpush.bf16.msra.mxu0 0
    %361 = vmatpush.bf16.msra.mxu0 0
    %362 = vmatpush.bf16.msra.mxu0 0
    %363 = vmatpush.bf16.msra.mxu0 %v358
    %364 = vmatpush.bf16.msra.mxu0 %v344
    %365 = vmatpush.bf16.msra.mxu0 %v343
    %366 = vmatpush.bf16.msra.mxu0 %v342
    %367 = vmatpush.bf16.msra.mxu0 %v341
    %368 = vmatmul.bf16.gmra.mxu0 %v351
    %v369 = vpop.f32.mrf.mxu0
    %v370 = vadd.f32 0.0, %v369
    %v371 = vpop.f32.mrf.mxu0
    %v372 = vadd.f32 0.0, %v371
    %373 = vmatmul.bf16.gmra.mxu0 %v354
    %v374 = vpop.f32.mrf.mxu0
    %v375 = vadd.f32 0.0, %v374
    %v376 = vpop.f32.mrf.mxu0
    %v377 = vadd.f32 0.0, %v376
    %378 = vdwg.mxu0
    %v388 = vunpack.c.l.b16 %v302
    %v389 = vunpack.c.l.b16 %v303
    %v390 = vunpack.c.l.b16 %v304
    %v391 = vunpack.c.l.b16 %v305
    %v392 = vunpack.c.l.b16 %v306
    %v393 = vunpack.c.l.b16 %v307
    %v394 = vunpack.c.l.b16 %v308
    %v395 = vunpack.c.l.b16 %v309
    %v396 = vunpack.c.l.b16 %v310
    %v397 = vpack.c.b16 %v389, %v388
    %v398 = vpack.c.b16 %v391, %v390
    %v399 = vpack.c.b16 %v393, %v392
    %v400 = vpack.c.b16 %v395, %v394
    %v401 = vpack.c.b16 %v396, %v396
    %v407 = vsel %vm74, %v300, 0
    %v410 = vsel %vm74, %v301, 0
    %v413 = vsel %vm356, %v401, 0
    %415 = vmatpush.bf16.msra.mxu0 0
    %416 = vmatpush.bf16.msra.mxu0 0
    %417 = vmatpush.bf16.msra.mxu0 0
    %418 = vmatpush.bf16.msra.mxu0 %v413
    %419 = vmatpush.bf16.msra.mxu0 %v400
    %420 = vmatpush.bf16.msra.mxu0 %v399
    %421 = vmatpush.bf16.msra.mxu0 %v398
    %422 = vmatpush.bf16.msra.mxu0 %v397
    %423 = vmatmul.bf16.gmra.mxu0 %v407
    %v424 = vpop.f32.mrf.mxu0
    %v425 = vadd.f32 %v370, %v424
    %v426 = vpop.f32.mrf.mxu0
    %v427 = vadd.f32 %v372, %v426
    %428 = vmatmul.bf16.gmra.mxu0 %v410
    %v429 = vpop.f32.mrf.mxu0
    %v430 = vadd.f32 %v375, %v429
    %v431 = vpop.f32.mrf.mxu0
    %v432 = vadd.f32 %v377, %v431
    %433 = vdwg.mxu0
    %v434 = vpack.c.bf16 %v293, %v291
    %v435 = vpack.c.bf16 %v298, %v296
    %s436 = scalar_lea.vmem %s2, 72
    %v437 = vld [vmem:[%s436] sm:$0xf]
    %v438 = vld [vmem:[%s436 + $0x4] sm:$0xf]
    %v439 = vld [vmem:[%s436 + $0x8] sm:$0xf]
    %v440 = vld [vmem:[%s436 + $0xc] sm:$0xf]
    %v441 = vld [vmem:[%s436 + $0x10] sm:$0xf]
    %v442 = vld [vmem:[%s436 + $0x14] sm:$0xf]
    %v443 = vld [vmem:[%s436 + $0x18] sm:$0xf]
    %v444 = vld [vmem:[%s436 + $0x1c] sm:$0xf]
    %v445 = vld [vmem:[%s436 + $0x20] sm:$0xf]
    %v455 = vunpack.c.l.b16 %v437
    %v456 = vunpack.c.l.b16 %v438
    %v457 = vunpack.c.l.b16 %v439
    %v458 = vunpack.c.l.b16 %v440
    %v459 = vunpack.c.l.b16 %v441
    %v460 = vunpack.c.l.b16 %v442
    %v461 = vunpack.c.l.b16 %v443
    %v462 = vunpack.c.l.b16 %v444
    %v463 = vunpack.c.l.b16 %v445
    %v464 = vpack.c.b16 %v456, %v455
    %v465 = vpack.c.b16 %v458, %v457
    %v466 = vpack.c.b16 %v460, %v459
    %v467 = vpack.c.b16 %v462, %v461
    %v468 = vpack.c.b16 %v463, %v463
    %v474 = vsel %vm74, %v434, 0
    %v477 = vsel %vm74, %v435, 0
    %v480 = vsel %vm356, %v468, 0
    %482 = vmatpush.bf16.msra.mxu0 0
    %483 = vmatpush.bf16.msra.mxu0 0
    %484 = vmatpush.bf16.msra.mxu0 0
    %485 = vmatpush.bf16.msra.mxu0 %v480
    %486 = vmatpush.bf16.msra.mxu0 %v467
    %487 = vmatpush.bf16.msra.mxu0 %v466
    %488 = vmatpush.bf16.msra.mxu0 %v465
    %489 = vmatpush.bf16.msra.mxu0 %v464
    %490 = vmatmul.bf16.gmra.mxu0 %v474
    %v491 = vpop.f32.mrf.mxu0
    %v492 = vadd.f32 0.0, %v491
    %v493 = vpop.f32.mrf.mxu0
    %v494 = vadd.f32 0.0, %v493
    %495 = vmatmul.bf16.gmra.mxu0 %v477
    %v496 = vpop.f32.mrf.mxu0
    %v497 = vadd.f32 0.0, %v496
    %v498 = vpop.f32.mrf.mxu0
    %v499 = vadd.f32 0.0, %v498
    %500 = vdwg.mxu0
    %v501 = vadd.f32 %v425, %v492
    %v502 = vadd.f32 %v427, %v494
    %v503 = vadd.f32 %v430, %v497
    %v504 = vadd.f32 %v432, %v499
    %vm505 = vcmask 261120
    %v507 = vsel %vm505, 1.0, 0
    %509 = vmatpush.msra.mxu0 0.0
    %510 = vmatpush.msra.mxu0 0.0
    %511 = vmatpush.msra.mxu0 0.0
    %512 = vmatpush.msra.mxu0 0.0
    %513 = vmatpush.msra.mxu0 0.0
    %514 = vmatpush.msra.mxu0 0.0
    %515 = vmatpush.msra.mxu0 0.0
    %516 = vmatpush.msra.mxu0 0.0
    %517 = vmatpush.msra.mxu0 0.0
    %518 = vmatpush.msra.mxu0 0.0
    %519 = vmatpush.msra.mxu0 0.0
    %520 = vmatpush.msra.mxu0 0.0
    %521 = vmatpush.msra.mxu0 %v504
    %522 = vmatpush.msra.mxu0 %v503
    %523 = vmatpush.msra.mxu0 %v502
    %524 = vmatpush.msra.mxu0 %v501
    %525 = vmatmul.f32.gmra.mxu0 %v507
    %v526 = vpop.f32.mrf.mxu0
    %v527 = vadd.f32 0.0, %v526
    %528 = vdwg.mxu0
    %v529 = vld [vmem:[%s3] sm:$0xff]
    %v530 = vld [vmem:[%s3 + $0x8] sm:$0xff]
    %v531 = vld [vmem:[%s3 + $0x10] sm:$0xff]
    %v532 = vld [vmem:[%s3 + $0x18] sm:$0xff]
    %v533 = vld [vmem:[%s3 + $0x20] sm:$0xff]
    %v534 = vld [vmem:[%s3 + $0x28] sm:$0xff]
    %v535 = vld [vmem:[%s3 + $0x30] sm:$0xff]
    %v536 = vld [vmem:[%s3 + $0x38] sm:$0xff]
    %v537 = vld [vmem:[%s3 + $0x40] sm:$0xff]
    %v538 = vld [vmem:[%s3 + $0x48] sm:$0xff]
    %v539 = vld [vmem:[%s3 + $0x50] sm:$0xff]
    %v540 = vld [vmem:[%s3 + $0x58] sm:$0xff]
    %v541 = vld [vmem:[%s3 + $0x60] sm:$0xff]
    %v542 = vld [vmem:[%s3 + $0x68] sm:$0xff]
    %v543 = vld [vmem:[%s3 + $0x70] sm:$0xff]
    %v544 = vld [vmem:[%s3 + $0x78] sm:$0xff]
    %545 = vmatpush.msra.mxu0 %v544
    %546 = vmatpush.msra.mxu0 %v543
    %547 = vmatpush.msra.mxu0 %v542
    %548 = vmatpush.msra.mxu0 %v541
    %549 = vmatpush.msra.mxu0 %v540
    %550 = vmatpush.msra.mxu0 %v539
    %551 = vmatpush.msra.mxu0 %v538
    %552 = vmatpush.msra.mxu0 %v537
    %553 = vmatpush.msra.mxu0 %v536
    %554 = vmatpush.msra.mxu0 %v535
    %555 = vmatpush.msra.mxu0 %v534
    %556 = vmatpush.msra.mxu0 %v533
    %557 = vmatpush.msra.mxu0 %v532
    %558 = vmatpush.msra.mxu0 %v531
    %559 = vmatpush.msra.mxu0 %v530
    %560 = vmatpush.msra.mxu0 %v529
    %561 = vmatmul.f32.gmra.mxu0 %v527
    %v562 = vpop.f32.mrf.mxu0
    %v563 = vadd.f32 0.0, %v562
    %564 = vdwg.mxu0
    %v565 = vperm.slane %v563, 0
    %v566 = vsub.f32 %v501, %v565
    %v567 = vsub.f32 %v502, %v565
    %v568 = vsub.f32 %v503, %v565
    %v569 = vsub.f32 %v504, %v565
    %v570 = vmul.f32 %v566, %v566
    %v571 = vmul.f32 %v567, %v567
    %v572 = vmul.f32 %v568, %v568
    %v573 = vmul.f32 %v569, %v569
    %574 = vmatpush.msra.mxu0 0.0
    %575 = vmatpush.msra.mxu0 0.0
    %576 = vmatpush.msra.mxu0 0.0
    %577 = vmatpush.msra.mxu0 0.0
    %578 = vmatpush.msra.mxu0 0.0
    %579 = vmatpush.msra.mxu0 0.0
    %580 = vmatpush.msra.mxu0 0.0
    %581 = vmatpush.msra.mxu0 0.0
    %582 = vmatpush.msra.mxu0 0.0
    %583 = vmatpush.msra.mxu0 0.0
    %584 = vmatpush.msra.mxu0 0.0
    %585 = vmatpush.msra.mxu0 0.0
    %586 = vmatpush.msra.mxu0 %v573
    %587 = vmatpush.msra.mxu0 %v572
    %588 = vmatpush.msra.mxu0 %v571
    %589 = vmatpush.msra.mxu0 %v570
    %590 = vmatmul.f32.gmra.mxu0 %v507
    %v591 = vpop.f32.mrf.mxu0
    %v592 = vadd.f32 0.0, %v591
    %593 = vdwg.mxu0
    %v594 = vld [vmem:[%s4] sm:$0x1]
    %595 = vmatpush.msra.mxu0 %v544
    %596 = vmatpush.msra.mxu0 %v543
    %597 = vmatpush.msra.mxu0 %v542
    %598 = vmatpush.msra.mxu0 %v541
    %599 = vmatpush.msra.mxu0 %v540
    %600 = vmatpush.msra.mxu0 %v539
    %601 = vmatpush.msra.mxu0 %v538
    %602 = vmatpush.msra.mxu0 %v537
    %603 = vmatpush.msra.mxu0 %v536
    %604 = vmatpush.msra.mxu0 %v535
    %605 = vmatpush.msra.mxu0 %v534
    %606 = vmatpush.msra.mxu0 %v533
    %607 = vmatpush.msra.mxu0 %v532
    %608 = vmatpush.msra.mxu0 %v531
    %609 = vmatpush.msra.mxu0 %v530
    %610 = vmatpush.msra.mxu0 %v529
    %611 = vmatmul.f32.gmra.mxu0 %v592
    %v612 = vpop.f32.mrf.mxu0
    %v613 = vadd.f32 1e-05, %v612
    %614 = vdwg.mxu0
    %v615 = vrsqrt.pop %v613
    %v616 = vmul.f32 %v615, %v613
    %v617 = vmul.f32 %v616, %v615
    %v618 = vmul.f32 0.5, %v617
    %v619 = vsub.f32 1.5, %v618
    %v620 = vmul.f32 %v615, %v619
    %vm621 = vweird.f32 %v613
    %vm622 = vweird.f32 %v615
    %vm623 = vmor %vm621, %vm622
    %v624 = vsel %vm623, %v615, %v620
    %v625 = vmul.f32 %v594, %v624
    %v627 = vperm.slane %v625, 0
    %v629 = vmul.f32 %v566, %v627
    %v630 = vmul.f32 %v567, %v627
    %v631 = vmul.f32 %v568, %v627
    %v632 = vmul.f32 %v569, %v627
    %v633 = vld [vmem:[%s5] sm:$0x1]
    %v635 = vperm.slane %v633, 0
    %v637 = vadd.f32 %v629, %v635
    %v638 = vadd.f32 %v630, %v635
    %v639 = vadd.f32 %v631, %v635
    %v640 = vadd.f32 %v632, %v635
    %s641 = sld [smem:[#allocation5]]
    %vm642 = vcmp.gt.f32.partialorder %v637, 0.0
    %vm643 = vcmp.gt.f32.partialorder %v638, 0.0
    %vm644 = vcmp.gt.f32.partialorder %v639, 0.0
    %vm645 = vcmp.gt.f32.partialorder %v640, 0.0
    %v646 = vstv %s641
    %v647 = vmul.f32 %v646, %v637
    %v648 = vmul.f32 %v646, %v638
    %v649 = vmul.f32 %v646, %v639
    %v650 = vmul.f32 %v646, %v640
    %v651 = vsel %vm642, %v637, %v647
    %v652 = vsel %vm643, %v638, %v648
    %v653 = vsel %vm644, %v639, %v649
    %v654 = vsel %vm645, %v640, %v650
    %vm655 = vcmask 130048
    %656 = vst.msk [vmem:[#allocation8] sm:$0xff] %vm655, %v651
    %657 = vst.msk [vmem:[#allocation8 + $0x8] sm:$0xff] %vm655, %v652
    %660 = vrot.lane.b32.xlu0 %v651, 112
    %v661 = vpop.permute.xlu0 %660
    %662 = vrot.lane.b32.xlu0 %v652, 112
    %v663 = vpop.permute.xlu0 %662
    %s666 = scalar_lea.vmem [#allocation8], 16
    %667 = vst.msk [vmem:[%s666] sm:$0xff] %vm655, %v661
    %668 = vst.msk [vmem:[%s666 + $0x8] sm:$0xff] %vm655, %v663
    %669 = vrot.lane.b32.xlu0 %v651, 96
    %v670 = vpop.permute.xlu0 %669
    %671 = vrot.lane.b32.xlu0 %v652, 96
    %v672 = vpop.permute.xlu0 %671
    %s675 = scalar_lea.vmem [#allocation8], 32
    %676 = vst.msk [vmem:[%s675] sm:$0xff] %vm655, %v670
    %677 = vst.msk [vmem:[%s675 + $0x8] sm:$0xff] %vm655, %v672
    %678 = vrot.lane.b32.xlu0 %v651, 80
    %v679 = vpop.permute.xlu0 %678
    %680 = vrot.lane.b32.xlu0 %v652, 80
    %v681 = vpop.permute.xlu0 %680
    %s684 = scalar_lea.vmem [#allocation8], 48
    %685 = vst.msk [vmem:[%s684] sm:$0xff] %vm655, %v679
    %686 = vst.msk [vmem:[%s684 + $0x8] sm:$0xff] %vm655, %v681
    %687 = vrot.lane.b32.xlu0 %v651, 64
    %v688 = vpop.permute.xlu0 %687
    %689 = vrot.lane.b32.xlu0 %v652, 64
    %v690 = vpop.permute.xlu0 %689
    %s693 = scalar_lea.vmem [#allocation8], 64
    %694 = vst.msk [vmem:[%s693] sm:$0xff] %vm655, %v688
    %695 = vst.msk [vmem:[%s693 + $0x8] sm:$0xff] %vm655, %v690
    %696 = vrot.lane.b32.xlu0 %v651, 48
    %v697 = vpop.permute.xlu0 %696
    %698 = vrot.lane.b32.xlu0 %v652, 48
    %v699 = vpop.permute.xlu0 %698
    %s702 = scalar_lea.vmem [#allocation8], 80
    %703 = vst.msk [vmem:[%s702] sm:$0xff] %vm655, %v697
    %704 = vst.msk [vmem:[%s702 + $0x8] sm:$0xff] %vm655, %v699
    %705 = vrot.lane.b32.xlu0 %v651, 32
    %v706 = vpop.permute.xlu0 %705
    %707 = vrot.lane.b32.xlu0 %v652, 32
    %v708 = vpop.permute.xlu0 %707
    %s711 = scalar_lea.vmem [#allocation8], 96
    %712 = vst.msk [vmem:[%s711] sm:$0xff] %vm655, %v706
    %713 = vst.msk [vmem:[%s711 + $0x8] sm:$0xff] %vm655, %v708
    %714 = vrot.lane.b32.xlu0 %v651, 16
    %v715 = vpop.permute.xlu0 %714
    %716 = vrot.lane.b32.xlu0 %v652, 16
    %v717 = vpop.permute.xlu0 %716
    %s720 = scalar_lea.vmem [#allocation8], 112
    %721 = vst.msk [vmem:[%s720] sm:$0xff] %vm655, %v715
    %722 = vst.msk [vmem:[%s720 + $0x8] sm:$0xff] %vm655, %v717
    %s723 = scalar_lea.vmem [#allocation8], 128
    %724 = vst.msk [vmem:[%s723] sm:$0xff] %vm655, %v653
    %725 = vst.msk [vmem:[%s723 + $0x8] sm:$0xff] %vm655, %v654
    %728 = vrot.lane.b32.xlu0 %v653, 112
    %v729 = vpop.permute.xlu0 %728
    %730 = vrot.lane.b32.xlu0 %v654, 112
    %v731 = vpop.permute.xlu0 %730
    %s734 = scalar_lea.vmem [#allocation8], 144
    %735 = vst.msk [vmem:[%s734] sm:$0xff] %vm655, %v729
    %736 = vst.msk [vmem:[%s734 + $0x8] sm:$0xff] %vm655, %v731
    %737 = vrot.lane.b32.xlu0 %v653, 96
    %v738 = vpop.permute.xlu0 %737
    %739 = vrot.lane.b32.xlu0 %v654, 96
    %v740 = vpop.permute.xlu0 %739
    %s743 = scalar_lea.vmem [#allocation8], 160
    %744 = vst.msk [vmem:[%s743] sm:$0xff] %vm655, %v738
    %745 = vst.msk [vmem:[%s743 + $0x8] sm:$0xff] %vm655, %v740
    %746 = vrot.lane.b32.xlu0 %v653, 80
    %v747 = vpop.permute.xlu0 %746
    %748 = vrot.lane.b32.xlu0 %v654, 80
    %v749 = vpop.permute.xlu0 %748
    %s752 = scalar_lea.vmem [#allocation8], 176
    %753 = vst.msk [vmem:[%s752] sm:$0xff] %vm655, %v747
    %754 = vst.msk [vmem:[%s752 + $0x8] sm:$0xff] %vm655, %v749
    %755 = vrot.lane.b32.xlu0 %v653, 64
    %v756 = vpop.permute.xlu0 %755
    %757 = vrot.lane.b32.xlu0 %v654, 64
    %v758 = vpop.permute.xlu0 %757
    %s761 = scalar_lea.vmem [#allocation8], 192
    %762 = vst.msk [vmem:[%s761] sm:$0xff] %vm655, %v756
    %763 = vst.msk [vmem:[%s761 + $0x8] sm:$0xff] %vm655, %v758
    %764 = vrot.lane.b32.xlu0 %v653, 48
    %v765 = vpop.permute.xlu0 %764
    %766 = vrot.lane.b32.xlu0 %v654, 48
    %v767 = vpop.permute.xlu0 %766
    %s770 = scalar_lea.vmem [#allocation8], 208
    %771 = vst.msk [vmem:[%s770] sm:$0xff] %vm655, %v765
    %772 = vst.msk [vmem:[%s770 + $0x8] sm:$0xff] %vm655, %v767
    %773 = vrot.lane.b32.xlu0 %v653, 32
    %v774 = vpop.permute.xlu0 %773
    %775 = vrot.lane.b32.xlu0 %v654, 32
    %v776 = vpop.permute.xlu0 %775
    %s779 = scalar_lea.vmem [#allocation8], 224
    %780 = vst.msk [vmem:[%s779] sm:$0xff] %vm655, %v774
    %781 = vst.msk [vmem:[%s779 + $0x8] sm:$0xff] %vm655, %v776
    %782 = vrot.lane.b32.xlu0 %v653, 16
    %v783 = vpop.permute.xlu0 %782
    %784 = vrot.lane.b32.xlu0 %v654, 16
    %v785 = vpop.permute.xlu0 %784
    %s788 = scalar_lea.vmem [#allocation8], 240
    %789 = vst.msk [vmem:[%s788] sm:$0xff] %vm655, %v783
    %790 = vst.msk [vmem:[%s788 + $0x8] sm:$0xff] %vm655, %v785
    %791 = vst [vmem:[#allocation3] sm:$0xff] 0.0
    %792 = vst.msk [vmem:[#allocation3 + $0x8] sm:$0xff] %vm655, 0.0
    %793 = vst [vmem:[#allocation3 + $0x10] sm:$0xff] 0.0
    %794 = vst.msk [vmem:[#allocation3 + $0x18] sm:$0xff] %vm655, 0.0
    %795 = vst [vmem:[#allocation3 + $0x20] sm:$0xff] 0.0
    %796 = vst.msk [vmem:[#allocation3 + $0x28] sm:$0xff] %vm655, 0.0
    %797 = vst [vmem:[#allocation3 + $0x30] sm:$0xff] 0.0
    %798 = vst.msk [vmem:[#allocation3 + $0x38] sm:$0xff] %vm655, 0.0
    %799 = vst [vmem:[#allocation3 + $0x40] sm:$0xf] 0.0
    %vm800 = vcmask 125952
    %801 = vst.msk [vmem:[#allocation3 + $0x48] sm:$0xf] %vm800, 0.0
    %vm802 = vcmask 1040384
    %v803 = vrot.slane %v651, 7
    %v804 = vrot.slane %v652, 7
    %v805 = vsel %vm802, %v803, %v804
    %806 = vrot.lane.b32.xlu0 %v803, 1
    %v807 = vpop.permute.xlu0 %806
    %808 = vrot.lane.b32.xlu0 %v805, 1
    %v809 = vpop.permute.xlu0 %808
    %810 = vrot.lane.b32.xlu0 %v804, 1
    %v811 = vpop.permute.xlu0 %810
    %vm815 = vcmask 138249
    %816 = vst.msk [vmem:[#allocation3] sm:$0xfe] %vm815, %v807
    %817 = vst.msk [vmem:[#allocation3 + $0x10] sm:$0xff] %vm91, %v809
    %vm818 = vcmask 131080
    %819 = vst.msk [vmem:[#allocation3 + $0x20] sm:$0x1] %vm818, %v811
    %820 = vrot.lane.b32.xlu0 %v803, 3
    %v821 = vpop.permute.xlu0 %820
    %822 = vrot.lane.b32.xlu0 %v805, 3
    %v823 = vpop.permute.xlu0 %822
    %824 = vrot.lane.b32.xlu0 %v804, 3
    %v825 = vpop.permute.xlu0 %824
    %vm829 = vcmask 285849
    %830 = vst.msk [vmem:[#allocation3] sm:$0xfe] %vm829, %v821
    %831 = vst.msk [vmem:[#allocation3 + $0x10] sm:$0xff] %vm105, %v823
    %vm832 = vcmask 278680
    %833 = vst.msk [vmem:[#allocation3 + $0x20] sm:$0x1] %vm832, %v825
    %834 = vrot.lane.b32.xlu0 %v803, 5
    %v835 = vpop.permute.xlu0 %834
    %836 = vrot.lane.b32.xlu0 %v805, 5
    %v837 = vpop.permute.xlu0 %836
    %838 = vrot.lane.b32.xlu0 %v804, 5
    %v839 = vpop.permute.xlu0 %838
    %vm843 = vcmask 433449
    %844 = vst.msk [vmem:[#allocation3] sm:$0xfe] %vm843, %v835
    %845 = vst.msk [vmem:[#allocation3 + $0x10] sm:$0xff] %vm119, %v837
    %vm846 = vcmask 426280
    %847 = vst.msk [vmem:[#allocation3 + $0x20] sm:$0x1] %vm846, %v839
    %848 = vrot.lane.b32.xlu0 %v803, 7
    %v849 = vpop.permute.xlu0 %848
    %850 = vrot.lane.b32.xlu0 %v805, 7
    %v851 = vpop.permute.xlu0 %850
    %852 = vrot.lane.b32.xlu0 %v804, 7
    %v853 = vpop.permute.xlu0 %852
    %vm857 = vcmask 581049
    %858 = vst.msk [vmem:[#allocation3] sm:$0xfe] %vm857, %v849
    %859 = vst.msk [vmem:[#allocation3 + $0x10] sm:$0xff] %vm133, %v851
    %vm860 = vcmask 573880
    %861 = vst.msk [vmem:[#allocation3 + $0x20] sm:$0x1] %vm860, %v853
    %862 = vrot.lane.b32.xlu0 %v803, 9
    %v863 = vpop.permute.xlu0 %862
    %864 = vrot.lane.b32.xlu0 %v805, 9
    %v865 = vpop.permute.xlu0 %864
    %866 = vrot.lane.b32.xlu0 %v804, 9
    %v867 = vpop.permute.xlu0 %866
    %vm871 = vcmask 728649
    %872 = vst.msk [vmem:[#allocation3] sm:$0xfe] %vm871, %v863
    %vm873 = vcmask 728648
    %874 = vst.msk [vmem:[#allocation3 + $0x10] sm:$0xff] %vm873, %v865
    %vm875 = vcmask 721480
    %876 = vst.msk [vmem:[#allocation3 + $0x20] sm:$0x1] %vm875, %v867
    %877 = vrot.lane.b32.xlu0 %v803, 11
    %v878 = vpop.permute.xlu0 %877
    %879 = vrot.lane.b32.xlu0 %v805, 11
    %v880 = vpop.permute.xlu0 %879
    %881 = vrot.lane.b32.xlu0 %v804, 11
    %v882 = vpop.permute.xlu0 %881
    %vm886 = vcmask 876249
    %887 = vst.msk [vmem:[#allocation3] sm:$0xfe] %vm886, %v878
    %vm888 = vcmask 876248
    %889 = vst.msk [vmem:[#allocation3 + $0x10] sm:$0xff] %vm888, %v880
    %vm890 = vcmask 869080
    %891 = vst.msk [vmem:[#allocation3 + $0x20] sm:$0x1] %vm890, %v882
    %892 = vrot.lane.b32.xlu0 %v803, 13
    %v893 = vpop.permute.xlu0 %892
    %894 = vrot.lane.b32.xlu0 %v805, 13
    %v895 = vpop.permute.xlu0 %894
    %896 = vrot.lane.b32.xlu0 %v804, 13
    %v897 = vpop.permute.xlu0 %896
    %vm901 = vcmask 1023849
    %902 = vst.msk [vmem:[#allocation3] sm:$0xfe] %vm901, %v893
    %vm903 = vcmask 1023848
    %904 = vst.msk [vmem:[#allocation3 + $0x10] sm:$0xff] %vm903, %v895
    %vm905 = vcmask 1016680
    %906 = vst.msk [vmem:[#allocation3 + $0x20] sm:$0x1] %vm905, %v897
    %907 = vrot.lane.b32.xlu0 %v803, 15
    %v908 = vpop.permute.xlu0 %907
    %909 = vrot.lane.b32.xlu0 %v805, 15
    %v910 = vpop.permute.xlu0 %909
    %911 = vrot.lane.b32.xlu0 %v804, 15
    %v912 = vpop.permute.xlu0 %911
    %vm916 = vcmask 1048569
    %917 = vst.msk [vmem:[#allocation3] sm:$0xfe] %vm916, %v908
    %vm918 = vcmask 121857
    %919 = vst.msk [vmem:[#allocation3 + $0x8] sm:$0xfe] %vm918, %v908
    %vm920 = vcmask 1048568
    %921 = vst.msk [vmem:[#allocation3 + $0x10] sm:$0xff] %vm920, %v910
    %vm922 = vcmask 121856
    %923 = vst.msk [vmem:[#allocation3 + $0x18] sm:$0xff] %vm922, %v910
    %vm924 = vcmask 1041400
    %925 = vst.msk [vmem:[#allocation3 + $0x20] sm:$0x1] %vm924, %v912
    %vm926 = vcmask 114688
    %927 = vst.msk [vmem:[#allocation3 + $0x28] sm:$0x1] %vm926, %v912
    %vm928 = vcmask 1042432
    %v929 = vrot.slane %v653, 5
    %v930 = vrot.slane %v654, 5
    %v931 = vsel %vm928, %v929, %v930
    %932 = vrot.lane.b32.xlu0 %v929, 1
    %v933 = vpop.permute.xlu0 %932
    %934 = vrot.lane.b32.xlu0 %v931, 1
    %v935 = vpop.permute.xlu0 %934
    %936 = vrot.lane.b32.xlu0 %v930, 1
    %v937 = vpop.permute.xlu0 %936
    %vm941 = vcmask 138251
    %942 = vst.msk [vmem:[#allocation3 + $0x20] sm:$0xf8] %vm941, %v933
    %943 = vst.msk [vmem:[#allocation3 + $0x30] sm:$0xff] %vm91, %v935
    %vm944 = vcmask 133128
    %945 = vst.msk [vmem:[#allocation3 + $0x40] sm:$0x7] %vm944, %v937
    %946 = vrot.lane.b32.xlu0 %v929, 3
    %v947 = vpop.permute.xlu0 %946
    %948 = vrot.lane.b32.xlu0 %v931, 3
    %v949 = vpop.permute.xlu0 %948
    %950 = vrot.lane.b32.xlu0 %v930, 3
    %v951 = vpop.permute.xlu0 %950
    %vm955 = vcmask 285851
    %956 = vst.msk [vmem:[#allocation3 + $0x20] sm:$0xf8] %vm955, %v947
    %957 = vst.msk [vmem:[#allocation3 + $0x30] sm:$0xff] %vm105, %v949
    %vm958 = vcmask 280728
    %959 = vst.msk [vmem:[#allocation3 + $0x40] sm:$0x7] %vm958, %v951
    %960 = vrot.lane.b32.xlu0 %v929, 5
    %v961 = vpop.permute.xlu0 %960
    %962 = vrot.lane.b32.xlu0 %v931, 5
    %v963 = vpop.permute.xlu0 %962
    %964 = vrot.lane.b32.xlu0 %v930, 5
    %v965 = vpop.permute.xlu0 %964
    %vm969 = vcmask 433451
    %970 = vst.msk [vmem:[#allocation3 + $0x20] sm:$0xf8] %vm969, %v961
    %971 = vst.msk [vmem:[#allocation3 + $0x30] sm:$0xff] %vm119, %v963
    %vm972 = vcmask 428328
    %973 = vst.msk [vmem:[#allocation3 + $0x40] sm:$0x7] %vm972, %v965
    %974 = vrot.lane.b32.xlu0 %v929, 7
    %v975 = vpop.permute.xlu0 %974
    %976 = vrot.lane.b32.xlu0 %v931, 7
    %v977 = vpop.permute.xlu0 %976
    %978 = vrot.lane.b32.xlu0 %v930, 7
    %v979 = vpop.permute.xlu0 %978
    %vm983 = vcmask 581051
    %984 = vst.msk [vmem:[#allocation3 + $0x20] sm:$0xf8] %vm983, %v975
    %985 = vst.msk [vmem:[#allocation3 + $0x30] sm:$0xff] %vm133, %v977
    %vm986 = vcmask 575928
    %987 = vst.msk [vmem:[#allocation3 + $0x40] sm:$0x7] %vm986, %v979
    %988 = vrot.lane.b32.xlu0 %v929, 9
    %v989 = vpop.permute.xlu0 %988
    %990 = vrot.lane.b32.xlu0 %v931, 9
    %v991 = vpop.permute.xlu0 %990
    %992 = vrot.lane.b32.xlu0 %v930, 9
    %v993 = vpop.permute.xlu0 %992
    %vm997 = vcmask 728651
    %998 = vst.msk [vmem:[#allocation3 + $0x20] sm:$0xf8] %vm997, %v989
    %999 = vst.msk [vmem:[#allocation3 + $0x30] sm:$0xff] %vm873, %v991
    %vm1000 = vcmask 723528
    %1001 = vst.msk [vmem:[#allocation3 + $0x40] sm:$0x7] %vm1000, %v993
    %1002 = vrot.lane.b32.xlu0 %v929, 11
    %v1003 = vpop.permute.xlu0 %1002
    %1004 = vrot.lane.b32.xlu0 %v931, 11
    %v1005 = vpop.permute.xlu0 %1004
    %1006 = vrot.lane.b32.xlu0 %v930, 11
    %v1007 = vpop.permute.xlu0 %1006
    %vm1011 = vcmask 876251
    %1012 = vst.msk [vmem:[#allocation3 + $0x20] sm:$0xf8] %vm1011, %v1003
    %1013 = vst.msk [vmem:[#allocation3 + $0x30] sm:$0xff] %vm888, %v1005
    %vm1014 = vcmask 871128
    %1015 = vst.msk [vmem:[#allocation3 + $0x40] sm:$0x7] %vm1014, %v1007
    %1016 = vrot.lane.b32.xlu0 %v929, 13
    %v1017 = vpop.permute.xlu0 %1016
    %1018 = vrot.lane.b32.xlu0 %v931, 13
    %v1019 = vpop.permute.xlu0 %1018
    %1020 = vrot.lane.b32.xlu0 %v930, 13
    %v1021 = vpop.permute.xlu0 %1020
    %vm1025 = vcmask 1023851
    %1026 = vst.msk [vmem:[#allocation3 + $0x20] sm:$0xf8] %vm1025, %v1017
    %1027 = vst.msk [vmem:[#allocation3 + $0x30] sm:$0xff] %vm903, %v1019
    %vm1028 = vcmask 1018728
    %1029 = vst.msk [vmem:[#allocation3 + $0x40] sm:$0x7] %vm1028, %v1021
    %1030 = vrot.lane.b32.xlu0 %v929, 15
    %v1031 = vpop.permute.xlu0 %1030
    %1032 = vrot.lane.b32.xlu0 %v931, 15
    %v1033 = vpop.permute.xlu0 %1032
    %1034 = vrot.lane.b32.xlu0 %v930, 15
    %v1035 = vpop.permute.xlu0 %1034
    %vm1039 = vcmask 1048571
    %1040 = vst.msk [vmem:[#allocation3 + $0x20] sm:$0xf8] %vm1039, %v1031
    %vm1041 = vcmask 121859
    %1042 = vst.msk [vmem:[#allocation3 + $0x28] sm:$0xf8] %vm1041, %v1031
    %1043 = vst.msk [vmem:[#allocation3 + $0x30] sm:$0xff] %vm920, %v1033
    %1044 = vst.msk [vmem:[#allocation3 + $0x38] sm:$0xff] %vm922, %v1033
    %vm1045 = vcmask 1043448
    %1046 = vst.msk [vmem:[#allocation3 + $0x40] sm:$0x7] %vm1045, %v1035
    %vm1047 = vcmask 116736
    %1048 = vst.msk [vmem:[#allocation3 + $0x48] sm:$0x7] %vm1047, %v1035
    %v1049 = vld [vmem:[#allocation3] sm:$0xff]
    %v1050 = vld [vmem:[#allocation3 + $0x8] sm:$0xff]
    %v1051 = vld [vmem:[#allocation3 + $0x10] sm:$0xff]
    %v1052 = vld [vmem:[#allocation3 + $0x18] sm:$0xff]
    %v1053 = vld [vmem:[#allocation3 + $0x20] sm:$0xff]
    %v1054 = vld [vmem:[#allocation3 + $0x28] sm:$0xff]
    %v1055 = vld [vmem:[#allocation3 + $0x30] sm:$0xff]
    %v1056 = vld [vmem:[#allocation3 + $0x38] sm:$0xff]
    %v1057 = vld [vmem:[#allocation3 + $0x40] sm:$0xf]
    %v1058 = vld [vmem:[#allocation3 + $0x48] sm:$0xf]
    %v1059 = vpack.c.bf16 %v1051, %v1049
    %v1060 = vpack.c.bf16 %v1052, %v1050
    %v1061 = vpack.c.bf16 %v1055, %v1053
    %v1062 = vpack.c.bf16 %v1056, %v1054
    %v1063 = vpack.c.bf16 %v1057, %v1057
    %v1064 = vpack.c.bf16 %v1058, %v1058
    %v1065 = vld [vmem:[%s6] sm:$0xf]
    %v1066 = vld [vmem:[%s6 + $0x4] sm:$0xf]
    %v1067 = vld [vmem:[%s6 + $0x8] sm:$0xf]
    %v1068 = vld [vmem:[%s6 + $0xc] sm:$0xf]
    %v1069 = vld [vmem:[%s6 + $0x10] sm:$0xf]
    %v1070 = vld [vmem:[%s6 + $0x14] sm:$0xf]
    %v1077 = vunpack.c.l.b16 %v1065
    %v1078 = vunpack.c.l.b16 %v1066
    %v1079 = vunpack.c.l.b16 %v1067
    %v1080 = vunpack.c.l.b16 %v1068
    %v1081 = vunpack.c.l.b16 %v1069
    %v1082 = vunpack.c.l.b16 %v1070
    %v1083 = vpack.c.b16 %v1078, %v1077
    %v1084 = vpack.c.b16 %v1080, %v1079
    %v1085 = vpack.c.b16 %v1082, %v1081
    %v1087 = vsel %vm238, %v1083, 0
    %v1090 = vsel %vm238, %v1084, 0
    %v1093 = vsel %vm238, %v1085, 0
    %v1096 = vsel %vm257, %v1063, 0
    %v1099 = vsel %vm257, %v1064, 0
    %1101 = vmatpush.bf16.msra.mxu0 0
    %1102 = vmatpush.bf16.msra.mxu0 0
    %1103 = vmatpush.bf16.msra.mxu0 0
    %1104 = vmatpush.bf16.msra.mxu0 0
    %1105 = vmatpush.bf16.msra.mxu0 0
    %1106 = vmatpush.bf16.msra.mxu0 %v1096
    %1107 = vmatpush.bf16.msra.mxu0 %v1061
    %1108 = vmatpush.bf16.msra.mxu0 %v1059
    %1109 = vmatmul.bf16.gmra.mxu0 %v1087
    %v1110 = vpop.f32.mrf.mxu0
    %v1111 = vadd.f32 0.0, %v1110
    %v1112 = vpop.f32.mrf.mxu0
    %v1113 = vadd.f32 0.0, %v1112
    %1114 = vmatmul.bf16.gmra.mxu0 %v1090
    %v1115 = vpop.f32.mrf.mxu0
    %v1116 = vadd.f32 0.0, %v1115
    %v1117 = vpop.f32.mrf.mxu0
    %v1118 = vadd.f32 0.0, %v1117
    %1119 = vmatmul.bf16.gmra.mxu0 %v1093
    %v1120 = vpop.f32.mrf.mxu0
    %v1121 = vadd.f32 0.0, %v1120
    %v1122 = vpop.f32.mrf.mxu0
    %v1123 = vadd.f32 0.0, %v1122
    %1124 = vdwg.mxu0
    %1125 = vmatpush.bf16.msra.mxu0 0
    %1126 = vmatpush.bf16.msra.mxu0 0
    %1127 = vmatpush.bf16.msra.mxu0 0
    %1128 = vmatpush.bf16.msra.mxu0 0
    %1129 = vmatpush.bf16.msra.mxu0 0
    %1130 = vmatpush.bf16.msra.mxu0 %v1099
    %1131 = vmatpush.bf16.msra.mxu0 %v1062
    %1132 = vmatpush.bf16.msra.mxu0 %v1060
    %1133 = vmatmul.bf16.gmra.mxu0 %v1087
    %v1134 = vpop.f32.mrf.mxu0
    %v1135 = vadd.f32 0.0, %v1134
    %v1136 = vpop.f32.mrf.mxu0
    %v1137 = vadd.f32 0.0, %v1136
    %1138 = vmatmul.bf16.gmra.mxu0 %v1090
    %v1139 = vpop.f32.mrf.mxu0
    %v1140 = vadd.f32 0.0, %v1139
    %v1141 = vpop.f32.mrf.mxu0
    %v1142 = vadd.f32 0.0, %v1141
    %1143 = vmatmul.bf16.gmra.mxu0 %v1093
    %v1144 = vpop.f32.mrf.mxu0
    %v1145 = vadd.f32 0.0, %v1144
    %v1146 = vpop.f32.mrf.mxu0
    %v1147 = vadd.f32 0.0, %v1146
    %1148 = vdwg.mxu0
    %v1149 = vpack.c.bf16 %v1113, %v1111
    %v1150 = vpack.c.bf16 %v1137, %v1135
    %v1151 = vld [vmem:[%s7] sm:$0xf]
    %v1152 = vld [vmem:[%s7 + $0x4] sm:$0xf]
    %v1153 = vld [vmem:[%s7 + $0x8] sm:$0xf]
    %v1154 = vld [vmem:[%s7 + $0xc] sm:$0xf]
    %v1155 = vld [vmem:[%s7 + $0x10] sm:$0xf]
    %v1156 = vld [vmem:[%s7 + $0x14] sm:$0xf]
    %v1157 = vld [vmem:[%s7 + $0x18] sm:$0xf]
    %v1158 = vld [vmem:[%s7 + $0x1c] sm:$0xf]
    %v1159 = vld [vmem:[%s7 + $0x20] sm:$0xf]
    %v1160 = vld [vmem:[%s7 + $0x24] sm:$0xf]
    %v1161 = vld [vmem:[%s7 + $0x28] sm:$0xf]
    %v1162 = vld [vmem:[%s7 + $0x2c] sm:$0xf]
    %v1163 = vld [vmem:[%s7 + $0x30] sm:$0xf]
    %v1164 = vld [vmem:[%s7 + $0x34] sm:$0xf]
    %v1165 = vld [vmem:[%s7 + $0x38] sm:$0xf]
    %v1166 = vld [vmem:[%s7 + $0x3c] sm:$0xf]
    %v1167 = vld [vmem:[%s7 + $0x40] sm:$0xf]
    %v1168 = vld [vmem:[%s7 + $0x44] sm:$0xf]
    %v1169 = vpack.c.bf16 %v1118, %v1116
    %v1170 = vpack.c.bf16 %v1142, %v1140
    %s1171 = scalar_lea.vmem %s7, 72
    %v1172 = vld [vmem:[%s1171] sm:$0xf]
    %v1173 = vld [vmem:[%s1171 + $0x4] sm:$0xf]
    %v1174 = vld [vmem:[%s1171 + $0x8] sm:$0xf]
    %v1175 = vld [vmem:[%s1171 + $0xc] sm:$0xf]
    %v1176 = vld [vmem:[%s1171 + $0x10] sm:$0xf]
    %v1177 = vld [vmem:[%s1171 + $0x14] sm:$0xf]
    %v1178 = vld [vmem:[%s1171 + $0x18] sm:$0xf]
    %v1179 = vld [vmem:[%s1171 + $0x1c] sm:$0xf]
    %v1180 = vld [vmem:[%s1171 + $0x20] sm:$0xf]
    %v1181 = vld [vmem:[%s1171 + $0x24] sm:$0xf]
    %v1182 = vld [vmem:[%s1171 + $0x28] sm:$0xf]
    %v1183 = vld [vmem:[%s1171 + $0x2c] sm:$0xf]
    %v1184 = vld [vmem:[%s1171 + $0x30] sm:$0xf]
    %v1185 = vld [vmem:[%s1171 + $0x34] sm:$0xf]
    %v1186 = vld [vmem:[%s1171 + $0x38] sm:$0xf]
    %v1187 = vld [vmem:[%s1171 + $0x3c] sm:$0xf]
    %v1188 = vld [vmem:[%s1171 + $0x40] sm:$0xf]
    %v1189 = vld [vmem:[%s1171 + $0x44] sm:$0xf]
    %v1208 = vunpack.c.l.b16 %v1172
    %v1209 = vunpack.c.l.b16 %v1173
    %v1210 = vunpack.c.l.b16 %v1174
    %v1211 = vunpack.c.l.b16 %v1175
    %v1212 = vunpack.c.l.b16 %v1176
    %v1213 = vunpack.c.l.b16 %v1177
    %v1214 = vunpack.c.l.b16 %v1178
    %v1215 = vunpack.c.l.b16 %v1179
    %v1216 = vunpack.c.l.b16 %v1180
    %v1217 = vunpack.c.l.b16 %v1181
    %v1218 = vunpack.c.l.b16 %v1182
    %v1219 = vunpack.c.l.b16 %v1183
    %v1220 = vunpack.c.l.b16 %v1184
    %v1221 = vunpack.c.l.b16 %v1185
    %v1222 = vunpack.c.l.b16 %v1186
    %v1223 = vunpack.c.l.b16 %v1187
    %v1224 = vunpack.c.l.b16 %v1188
    %v1225 = vunpack.c.l.b16 %v1189
    %v1226 = vpack.c.b16 %v1209, %v1208
    %v1227 = vpack.c.b16 %v1211, %v1210
    %v1228 = vpack.c.b16 %v1213, %v1212
    %v1229 = vpack.c.b16 %v1215, %v1214
    %v1230 = vpack.c.b16 %v1217, %v1216
    %v1231 = vpack.c.b16 %v1219, %v1218
    %v1232 = vpack.c.b16 %v1221, %v1220
    %v1233 = vpack.c.b16 %v1223, %v1222
    %v1234 = vpack.c.b16 %v1225, %v1224
    %v1245 = vsel %vm655, %v1170, 0
    %1247 = vmatpush.bf16.msra.mxu0 %v1233
    %1248 = vmatpush.bf16.msra.mxu0 %v1232
    %1249 = vmatpush.bf16.msra.mxu0 %v1231
    %1250 = vmatpush.bf16.msra.mxu0 %v1230
    %1251 = vmatpush.bf16.msra.mxu0 %v1229
    %1252 = vmatpush.bf16.msra.mxu0 %v1228
    %1253 = vmatpush.bf16.msra.mxu0 %v1227
    %1254 = vmatpush.bf16.msra.mxu0 %v1226
    %1255 = vmatmul.bf16.gmra.mxu0 %v1169
    %v1256 = vpop.f32.mrf.mxu0
    %v1257 = vadd.f32 0.0, %v1256
    %v1258 = vpop.f32.mrf.mxu0
    %v1259 = vadd.f32 0.0, %v1258
    %1260 = vdwg.mxu0
    %1261 = vmatpush.bf16.msra.mxu0 0
    %1262 = vmatpush.bf16.msra.mxu0 0
    %1263 = vmatpush.bf16.msra.mxu0 0
    %1264 = vmatpush.bf16.msra.mxu0 0
    %1265 = vmatpush.bf16.msra.mxu0 0
    %1266 = vmatpush.bf16.msra.mxu0 0
    %1267 = vmatpush.bf16.msra.mxu0 0
    %1268 = vmatpush.bf16.msra.mxu0 %v1234
    %1269 = vmatmul.bf16.gmra.mxu0 %v1245
    %v1270 = vpop.f32.mrf.mxu0
    %v1271 = vadd.f32 %v1257, %v1270
    %v1272 = vpop.f32.mrf.mxu0
    %v1273 = vadd.f32 %v1259, %v1272
    %1274 = vdwg.mxu0
    %v1293 = vunpack.c.l.b16 %v1151
    %v1294 = vunpack.c.l.b16 %v1152
    %v1295 = vunpack.c.l.b16 %v1153
    %v1296 = vunpack.c.l.b16 %v1154
    %v1297 = vunpack.c.l.b16 %v1155
    %v1298 = vunpack.c.l.b16 %v1156
    %v1299 = vunpack.c.l.b16 %v1157
    %v1300 = vunpack.c.l.b16 %v1158
    %v1301 = vunpack.c.l.b16 %v1159
    %v1302 = vunpack.c.l.b16 %v1160
    %v1303 = vunpack.c.l.b16 %v1161
    %v1304 = vunpack.c.l.b16 %v1162
    %v1305 = vunpack.c.l.b16 %v1163
    %v1306 = vunpack.c.l.b16 %v1164
    %v1307 = vunpack.c.l.b16 %v1165
    %v1308 = vunpack.c.l.b16 %v1166
    %v1309 = vunpack.c.l.b16 %v1167
    %v1310 = vunpack.c.l.b16 %v1168
    %v1311 = vpack.c.b16 %v1294, %v1293
    %v1312 = vpack.c.b16 %v1296, %v1295
    %v1313 = vpack.c.b16 %v1298, %v1297
    %v1314 = vpack.c.b16 %v1300, %v1299
    %v1315 = vpack.c.b16 %v1302, %v1301
    %v1316 = vpack.c.b16 %v1304, %v1303
    %v1317 = vpack.c.b16 %v1306, %v1305
    %v1318 = vpack.c.b16 %v1308, %v1307
    %v1319 = vpack.c.b16 %v1310, %v1309
    %v1330 = vsel %vm655, %v1150, 0
    %1332 = vmatpush.bf16.msra.mxu0 %v1318
    %1333 = vmatpush.bf16.msra.mxu0 %v1317
    %1334 = vmatpush.bf16.msra.mxu0 %v1316
    %1335 = vmatpush.bf16.msra.mxu0 %v1315
    %1336 = vmatpush.bf16.msra.mxu0 %v1314
    %1337 = vmatpush.bf16.msra.mxu0 %v1313
    %1338 = vmatpush.bf16.msra.mxu0 %v1312
    %1339 = vmatpush.bf16.msra.mxu0 %v1311
    %1340 = vmatmul.bf16.gmra.mxu0 %v1149
    %v1341 = vpop.f32.mrf.mxu0
    %v1342 = vadd.f32 %v1271, %v1341
    %v1343 = vpop.f32.mrf.mxu0
    %v1344 = vadd.f32 %v1273, %v1343
    %1345 = vdwg.mxu0
    %1346 = vmatpush.bf16.msra.mxu0 0
    %1347 = vmatpush.bf16.msra.mxu0 0
    %1348 = vmatpush.bf16.msra.mxu0 0
    %1349 = vmatpush.bf16.msra.mxu0 0
    %1350 = vmatpush.bf16.msra.mxu0 0
    %1351 = vmatpush.bf16.msra.mxu0 0
    %1352 = vmatpush.bf16.msra.mxu0 0
    %1353 = vmatpush.bf16.msra.mxu0 %v1319
    %1354 = vmatmul.bf16.gmra.mxu0 %v1330
    %v1355 = vpop.f32.mrf.mxu0
    %v1356 = vadd.f32 %v1342, %v1355
    %v1357 = vpop.f32.mrf.mxu0
    %v1358 = vadd.f32 %v1344, %v1357
    %1359 = vdwg.mxu0
    %v1360 = vpack.c.bf16 %v1123, %v1121
    %v1361 = vpack.c.bf16 %v1147, %v1145
    %s1362 = scalar_lea.vmem %s7, 144
    %v1363 = vld [vmem:[%s1362] sm:$0xf]
    %v1364 = vld [vmem:[%s1362 + $0x4] sm:$0xf]
    %v1365 = vld [vmem:[%s1362 + $0x8] sm:$0xf]
    %v1366 = vld [vmem:[%s1362 + $0xc] sm:$0xf]
    %v1367 = vld [vmem:[%s1362 + $0x10] sm:$0xf]
    %v1368 = vld [vmem:[%s1362 + $0x14] sm:$0xf]
    %v1369 = vld [vmem:[%s1362 + $0x18] sm:$0xf]
    %v1370 = vld [vmem:[%s1362 + $0x1c] sm:$0xf]
    %v1371 = vld [vmem:[%s1362 + $0x20] sm:$0xf]
    %v1372 = vld [vmem:[%s1362 + $0x24] sm:$0xf]
    %v1373 = vld [vmem:[%s1362 + $0x28] sm:$0xf]
    %v1374 = vld [vmem:[%s1362 + $0x2c] sm:$0xf]
    %v1375 = vld [vmem:[%s1362 + $0x30] sm:$0xf]
    %v1376 = vld [vmem:[%s1362 + $0x34] sm:$0xf]
    %v1377 = vld [vmem:[%s1362 + $0x38] sm:$0xf]
    %v1378 = vld [vmem:[%s1362 + $0x3c] sm:$0xf]
    %v1379 = vld [vmem:[%s1362 + $0x40] sm:$0xf]
    %v1380 = vld [vmem:[%s1362 + $0x44] sm:$0xf]
    %v1399 = vunpack.c.l.b16 %v1363
    %v1400 = vunpack.c.l.b16 %v1364
    %v1401 = vunpack.c.l.b16 %v1365
    %v1402 = vunpack.c.l.b16 %v1366
    %v1403 = vunpack.c.l.b16 %v1367
    %v1404 = vunpack.c.l.b16 %v1368
    %v1405 = vunpack.c.l.b16 %v1369
    %v1406 = vunpack.c.l.b16 %v1370
    %v1407 = vunpack.c.l.b16 %v1371
    %v1408 = vunpack.c.l.b16 %v1372
    %v1409 = vunpack.c.l.b16 %v1373
    %v1410 = vunpack.c.l.b16 %v1374
    %v1411 = vunpack.c.l.b16 %v1375
    %v1412 = vunpack.c.l.b16 %v1376
    %v1413 = vunpack.c.l.b16 %v1377
    %v1414 = vunpack.c.l.b16 %v1378
    %v1415 = vunpack.c.l.b16 %v1379
    %v1416 = vunpack.c.l.b16 %v1380
    %v1417 = vpack.c.b16 %v1400, %v1399
    %v1418 = vpack.c.b16 %v1402, %v1401
    %v1419 = vpack.c.b16 %v1404, %v1403
    %v1420 = vpack.c.b16 %v1406, %v1405
    %v1421 = vpack.c.b16 %v1408, %v1407
    %v1422 = vpack.c.b16 %v1410, %v1409
    %v1423 = vpack.c.b16 %v1412, %v1411
    %v1424 = vpack.c.b16 %v1414, %v1413
    %v1425 = vpack.c.b16 %v1416, %v1415
    %v1436 = vsel %vm655, %v1361, 0
    %1438 = vmatpush.bf16.msra.mxu0 %v1424
    %1439 = vmatpush.bf16.msra.mxu0 %v1423
    %1440 = vmatpush.bf16.msra.mxu0 %v1422
    %1441 = vmatpush.bf16.msra.mxu0 %v1421
    %1442 = vmatpush.bf16.msra.mxu0 %v1420
    %1443 = vmatpush.bf16.msra.mxu0 %v1419
    %1444 = vmatpush.bf16.msra.mxu0 %v1418
    %1445 = vmatpush.bf16.msra.mxu0 %v1417
    %1446 = vmatmul.bf16.gmra.mxu0 %v1360
    %v1447 = vpop.f32.mrf.mxu0
    %v1448 = vadd.f32 0.0, %v1447
    %v1449 = vpop.f32.mrf.mxu0
    %v1450 = vadd.f32 0.0, %v1449
    %1451 = vdwg.mxu0
    %1452 = vmatpush.bf16.msra.mxu0 0
    %1453 = vmatpush.bf16.msra.mxu0 0
    %1454 = vmatpush.bf16.msra.mxu0 0
    %1455 = vmatpush.bf16.msra.mxu0 0
    %1456 = vmatpush.bf16.msra.mxu0 0
    %1457 = vmatpush.bf16.msra.mxu0 0
    %1458 = vmatpush.bf16.msra.mxu0 0
    %1459 = vmatpush.bf16.msra.mxu0 %v1425
    %1460 = vmatmul.bf16.gmra.mxu0 %v1436
    %v1461 = vpop.f32.mrf.mxu0
    %v1462 = vadd.f32 %v1448, %v1461
    %v1463 = vpop.f32.mrf.mxu0
    %v1464 = vadd.f32 %v1450, %v1463
    %1465 = vdwg.mxu0
    %v1466 = vadd.f32 %v1356, %v1462
    %v1467 = vadd.f32 %v1358, %v1464
    %v1468 = vsel %vm655, 1.0, 0
    %1470 = vmatpush.msra.mxu0 0.0
    %1471 = vmatpush.msra.mxu0 0.0
    %1472 = vmatpush.msra.mxu0 0.0
    %1473 = vmatpush.msra.mxu0 0.0
    %1474 = vmatpush.msra.mxu0 0.0
    %1475 = vmatpush.msra.mxu0 0.0
    %1476 = vmatpush.msra.mxu0 0.0
    %1477 = vmatpush.msra.mxu0 0.0
    %1478 = vmatpush.msra.mxu0 0.0
    %1479 = vmatpush.msra.mxu0 0.0
    %1480 = vmatpush.msra.mxu0 0.0
    %1481 = vmatpush.msra.mxu0 0.0
    %1482 = vmatpush.msra.mxu0 0.0
    %1483 = vmatpush.msra.mxu0 0.0
    %1484 = vmatpush.msra.mxu0 %v1467
    %1485 = vmatpush.msra.mxu0 %v1466
    %1486 = vmatmul.f32.gmra.mxu0 %v1468
    %v1487 = vpop.f32.mrf.mxu0
    %v1488 = vadd.f32 0.0, %v1487
    %1489 = vdwg.mxu0
    %v1490 = vld [vmem:[%s8] sm:$0xff]
    %v1491 = vld [vmem:[%s8 + $0x8] sm:$0xff]
    %v1492 = vld [vmem:[%s8 + $0x10] sm:$0xff]
    %v1493 = vld [vmem:[%s8 + $0x18] sm:$0xff]
    %v1494 = vld [vmem:[%s8 + $0x20] sm:$0xff]
    %v1495 = vld [vmem:[%s8 + $0x28] sm:$0xff]
    %v1496 = vld [vmem:[%s8 + $0x30] sm:$0xff]
    %v1497 = vld [vmem:[%s8 + $0x38] sm:$0xff]
    %v1498 = vld [vmem:[%s8 + $0x40] sm:$0xff]
    %v1499 = vld [vmem:[%s8 + $0x48] sm:$0xff]
    %v1500 = vld [vmem:[%s8 + $0x50] sm:$0xff]
    %v1501 = vld [vmem:[%s8 + $0x58] sm:$0xff]
    %v1502 = vld [vmem:[%s8 + $0x60] sm:$0xff]
    %v1503 = vld [vmem:[%s8 + $0x68] sm:$0xff]
    %v1504 = vld [vmem:[%s8 + $0x70] sm:$0xff]
    %v1505 = vld [vmem:[%s8 + $0x78] sm:$0xff]
    %1506 = vmatpush.msra.mxu0 %v1505
    %1507 = vmatpush.msra.mxu0 %v1504
    %1508 = vmatpush.msra.mxu0 %v1503
    %1509 = vmatpush.msra.mxu0 %v1502
    %1510 = vmatpush.msra.mxu0 %v1501
    %1511 = vmatpush.msra.mxu0 %v1500
    %1512 = vmatpush.msra.mxu0 %v1499
    %1513 = vmatpush.msra.mxu0 %v1498
    %1514 = vmatpush.msra.mxu0 %v1497
    %1515 = vmatpush.msra.mxu0 %v1496
    %1516 = vmatpush.msra.mxu0 %v1495
    %1517 = vmatpush.msra.mxu0 %v1494
    %1518 = vmatpush.msra.mxu0 %v1493
    %1519 = vmatpush.msra.mxu0 %v1492
    %1520 = vmatpush.msra.mxu0 %v1491
    %1521 = vmatpush.msra.mxu0 %v1490
    %1522 = vmatmul.f32.gmra.mxu0 %v1488
    %v1523 = vpop.f32.mrf.mxu0
    %v1524 = vadd.f32 0.0, %v1523
    %1525 = vdwg.mxu0
    %v1526 = vperm.slane %v1524, 0
    %v1527 = vsub.f32 %v1466, %v1526
    %v1528 = vsub.f32 %v1467, %v1526
    %v1529 = vmul.f32 %v1527, %v1527
    %v1530 = vmul.f32 %v1528, %v1528
    %1531 = vmatpush.msra.mxu0 0.0
    %1532 = vmatpush.msra.mxu0 0.0
    %1533 = vmatpush.msra.mxu0 0.0
    %1534 = vmatpush.msra.mxu0 0.0
    %1535 = vmatpush.msra.mxu0 0.0
    %1536 = vmatpush.msra.mxu0 0.0
    %1537 = vmatpush.msra.mxu0 0.0
    %1538 = vmatpush.msra.mxu0 0.0
    %1539 = vmatpush.msra.mxu0 0.0
    %1540 = vmatpush.msra.mxu0 0.0
    %1541 = vmatpush.msra.mxu0 0.0
    %1542 = vmatpush.msra.mxu0 0.0
    %1543 = vmatpush.msra.mxu0 0.0
    %1544 = vmatpush.msra.mxu0 0.0
    %1545 = vmatpush.msra.mxu0 %v1530
    %1546 = vmatpush.msra.mxu0 %v1529
    %1547 = vmatmul.f32.gmra.mxu0 %v1468
    %v1548 = vpop.f32.mrf.mxu0
    %v1549 = vadd.f32 0.0, %v1548
    %1550 = vdwg.mxu0
    %v1551 = vld [vmem:[%s9] sm:$0x1]
    %1552 = vmatpush.msra.mxu0 %v1505
    %1553 = vmatpush.msra.mxu0 %v1504
    %1554 = vmatpush.msra.mxu0 %v1503
    %1555 = vmatpush.msra.mxu0 %v1502
    %1556 = vmatpush.msra.mxu0 %v1501
    %1557 = vmatpush.msra.mxu0 %v1500
    %1558 = vmatpush.msra.mxu0 %v1499
    %1559 = vmatpush.msra.mxu0 %v1498
    %1560 = vmatpush.msra.mxu0 %v1497
    %1561 = vmatpush.msra.mxu0 %v1496
    %1562 = vmatpush.msra.mxu0 %v1495
    %1563 = vmatpush.msra.mxu0 %v1494
    %1564 = vmatpush.msra.mxu0 %v1493
    %1565 = vmatpush.msra.mxu0 %v1492
    %1566 = vmatpush.msra.mxu0 %v1491
    %1567 = vmatpush.msra.mxu0 %v1490
    %1568 = vmatmul.f32.gmra.mxu0 %v1549
    %v1569 = vpop.f32.mrf.mxu0
    %v1570 = vadd.f32 1e-05, %v1569
    %1571 = vdwg.mxu0
    %v1572 = vrsqrt.pop %v1570
    %v1573 = vmul.f32 %v1572, %v1570
    %v1574 = vmul.f32 %v1573, %v1572
    %v1575 = vmul.f32 0.5, %v1574
    %v1576 = vsub.f32 1.5, %v1575
    %v1577 = vmul.f32 %v1572, %v1576
    %vm1578 = vweird.f32 %v1570
    %vm1579 = vweird.f32 %v1572
    %vm1580 = vmor %vm1578, %vm1579
    %v1581 = vsel %vm1580, %v1572, %v1577
    %v1582 = vmul.f32 %v1551, %v1581
    %v1584 = vperm.slane %v1582, 0
    %v1586 = vmul.f32 %v1527, %v1584
    %v1587 = vmul.f32 %v1528, %v1584
    %v1588 = vld [vmem:[%s10] sm:$0x1]
    %v1590 = vperm.slane %v1588, 0
    %v1592 = vadd.f32 %v1586, %v1590
    %v1593 = vadd.f32 %v1587, %v1590
    %s1594 = sld [smem:[#allocation5 + $0x1]]
    %vm1595 = vcmp.gt.f32.partialorder %v1592, 0.0
    %vm1596 = vcmp.gt.f32.partialorder %v1593, 0.0
    %v1597 = vstv %s1594
    %v1598 = vmul.f32 %v1597, %v1592
    %v1599 = vmul.f32 %v1597, %v1593
    %v1600 = vsel %vm1595, %v1592, %v1598
    %v1601 = vsel %vm1596, %v1593, %v1599
    %vm1602 = vcmask 64512
    %1603 = vst.msk [vmem:[%s18] sm:$0xff] %vm1602, %v1600
    %1605 = vrot.lane.b32.xlu0 %v1600, 120
    %v1606 = vpop.permute.xlu0 %1605
    %s1608 = scalar_lea.vmem %s18, 8
    %1609 = vst.msk [vmem:[%s1608] sm:$0xff] %vm1602, %v1606
    %1610 = vrot.lane.b32.xlu0 %v1600, 112
    %v1611 = vpop.permute.xlu0 %1610
    %s1613 = scalar_lea.vmem %s18, 16
    %1614 = vst.msk [vmem:[%s1613] sm:$0xff] %vm1602, %v1611
    %1615 = vrot.lane.b32.xlu0 %v1600, 104
    %v1616 = vpop.permute.xlu0 %1615
    %s1618 = scalar_lea.vmem %s18, 24
    %1619 = vst.msk [vmem:[%s1618] sm:$0xff] %vm1602, %v1616
    %1620 = vrot.lane.b32.xlu0 %v1600, 96
    %v1621 = vpop.permute.xlu0 %1620
    %s1623 = scalar_lea.vmem %s18, 32
    %1624 = vst.msk [vmem:[%s1623] sm:$0xff] %vm1602, %v1621
    %1625 = vrot.lane.b32.xlu0 %v1600, 88
    %v1626 = vpop.permute.xlu0 %1625
    %s1628 = scalar_lea.vmem %s18, 40
    %1629 = vst.msk [vmem:[%s1628] sm:$0xff] %vm1602, %v1626
    %1630 = vrot.lane.b32.xlu0 %v1600, 80
    %v1631 = vpop.permute.xlu0 %1630
    %s1633 = scalar_lea.vmem %s18, 48
    %1634 = vst.msk [vmem:[%s1633] sm:$0xff] %vm1602, %v1631
    %1635 = vrot.lane.b32.xlu0 %v1600, 72
    %v1636 = vpop.permute.xlu0 %1635
    %s1638 = scalar_lea.vmem %s18, 56
    %1639 = vst.msk [vmem:[%s1638] sm:$0xff] %vm1602, %v1636
    %1640 = vrot.lane.b32.xlu0 %v1600, 64
    %v1641 = vpop.permute.xlu0 %1640
    %s1643 = scalar_lea.vmem %s18, 64
    %1644 = vst.msk [vmem:[%s1643] sm:$0xff] %vm1602, %v1641
    %1645 = vrot.lane.b32.xlu0 %v1600, 56
    %v1646 = vpop.permute.xlu0 %1645
    %s1648 = scalar_lea.vmem %s18, 72
    %1649 = vst.msk [vmem:[%s1648] sm:$0xff] %vm1602, %v1646
    %1650 = vrot.lane.b32.xlu0 %v1600, 48
    %v1651 = vpop.permute.xlu0 %1650
    %s1653 = scalar_lea.vmem %s18, 80
    %1654 = vst.msk [vmem:[%s1653] sm:$0xff] %vm1602, %v1651
    %1655 = vrot.lane.b32.xlu0 %v1600, 40
    %v1656 = vpop.permute.xlu0 %1655
    %s1658 = scalar_lea.vmem %s18, 88
    %1659 = vst.msk [vmem:[%s1658] sm:$0xff] %vm1602, %v1656
    %1660 = vrot.lane.b32.xlu0 %v1600, 32
    %v1661 = vpop.permute.xlu0 %1660
    %s1663 = scalar_lea.vmem %s18, 96
    %1664 = vst.msk [vmem:[%s1663] sm:$0xff] %vm1602, %v1661
    %1665 = vrot.lane.b32.xlu0 %v1600, 24
    %v1666 = vpop.permute.xlu0 %1665
    %s1668 = scalar_lea.vmem %s18, 104
    %1669 = vst.msk [vmem:[%s1668] sm:$0xff] %vm1602, %v1666
    %1670 = vrot.lane.b32.xlu0 %v1600, 16
    %v1671 = vpop.permute.xlu0 %1670
    %s1673 = scalar_lea.vmem %s18, 112
    %1674 = vst.msk [vmem:[%s1673] sm:$0xff] %vm1602, %v1671
    %1675 = vrot.lane.b32.xlu0 %v1600, 8
    %v1676 = vpop.permute.xlu0 %1675
    %s1678 = scalar_lea.vmem %s18, 120
    %1679 = vst.msk [vmem:[%s1678] sm:$0xff] %vm1602, %v1676
    %s1680 = scalar_lea.vmem %s18, 128
    %1681 = vst.msk [vmem:[%s1680] sm:$0xff] %vm1602, %v1601
    %1683 = vrot.lane.b32.xlu0 %v1601, 120
    %v1684 = vpop.permute.xlu0 %1683
    %s1686 = scalar_lea.vmem %s18, 136
    %1687 = vst.msk [vmem:[%s1686] sm:$0xff] %vm1602, %v1684
    %1688 = vrot.lane.b32.xlu0 %v1601, 112
    %v1689 = vpop.permute.xlu0 %1688
    %s1691 = scalar_lea.vmem %s18, 144
    %1692 = vst.msk [vmem:[%s1691] sm:$0xff] %vm1602, %v1689
    %1693 = vrot.lane.b32.xlu0 %v1601, 104
    %v1694 = vpop.permute.xlu0 %1693
    %s1696 = scalar_lea.vmem %s18, 152
    %1697 = vst.msk [vmem:[%s1696] sm:$0xff] %vm1602, %v1694
    %1698 = vrot.lane.b32.xlu0 %v1601, 96
    %v1699 = vpop.permute.xlu0 %1698
    %s1701 = scalar_lea.vmem %s18, 160
    %1702 = vst.msk [vmem:[%s1701] sm:$0xff] %vm1602, %v1699
    %1703 = vrot.lane.b32.xlu0 %v1601, 88
    %v1704 = vpop.permute.xlu0 %1703
    %s1706 = scalar_lea.vmem %s18, 168
    %1707 = vst.msk [vmem:[%s1706] sm:$0xff] %vm1602, %v1704
    %1708 = vrot.lane.b32.xlu0 %v1601, 80
    %v1709 = vpop.permute.xlu0 %1708
    %s1711 = scalar_lea.vmem %s18, 176
    %1712 = vst.msk [vmem:[%s1711] sm:$0xff] %vm1602, %v1709
    %1713 = vrot.lane.b32.xlu0 %v1601, 72
    %v1714 = vpop.permute.xlu0 %1713
    %s1716 = scalar_lea.vmem %s18, 184
    %1717 = vst.msk [vmem:[%s1716] sm:$0xff] %vm1602, %v1714
    %1718 = vrot.lane.b32.xlu0 %v1601, 64
    %v1719 = vpop.permute.xlu0 %1718
    %s1721 = scalar_lea.vmem %s18, 192
    %1722 = vst.msk [vmem:[%s1721] sm:$0xff] %vm1602, %v1719
    %1723 = vrot.lane.b32.xlu0 %v1601, 56
    %v1724 = vpop.permute.xlu0 %1723
    %s1726 = scalar_lea.vmem %s18, 200
    %1727 = vst.msk [vmem:[%s1726] sm:$0xff] %vm1602, %v1724
    %1728 = vrot.lane.b32.xlu0 %v1601, 48
    %v1729 = vpop.permute.xlu0 %1728
    %s1731 = scalar_lea.vmem %s18, 208
    %1732 = vst.msk [vmem:[%s1731] sm:$0xff] %vm1602, %v1729
    %1733 = vrot.lane.b32.xlu0 %v1601, 40
    %v1734 = vpop.permute.xlu0 %1733
    %s1736 = scalar_lea.vmem %s18, 216
    %1737 = vst.msk [vmem:[%s1736] sm:$0xff] %vm1602, %v1734
    %1738 = vrot.lane.b32.xlu0 %v1601, 32
    %v1739 = vpop.permute.xlu0 %1738
    %s1741 = scalar_lea.vmem %s18, 224
    %1742 = vst.msk [vmem:[%s1741] sm:$0xff] %vm1602, %v1739
    %1743 = vrot.lane.b32.xlu0 %v1601, 24
    %v1744 = vpop.permute.xlu0 %1743
    %s1746 = scalar_lea.vmem %s18, 232
    %1747 = vst.msk [vmem:[%s1746] sm:$0xff] %vm1602, %v1744
    %1748 = vrot.lane.b32.xlu0 %v1601, 16
    %v1749 = vpop.permute.xlu0 %1748
    %s1751 = scalar_lea.vmem %s18, 240
    %1752 = vst.msk [vmem:[%s1751] sm:$0xff] %vm1602, %v1749
    %1753 = vrot.lane.b32.xlu0 %v1601, 8
    %v1754 = vpop.permute.xlu0 %1753
    %s1756 = scalar_lea.vmem %s18, 248
    %1757 = vst.msk [vmem:[%s1756] sm:$0xff] %vm1602, %v1754
    %1758 = vst [vmem:[#allocation4] sm:$0xff] 0.0
    %1759 = vst.msk [vmem:[#allocation4 + $0x8] sm:$0xff] %vm505, 0.0
    %1760 = vst [vmem:[#allocation4 + $0x10] sm:$0xff] 0.0
    %1761 = vst.msk [vmem:[#allocation4 + $0x18] sm:$0xff] %vm505, 0.0
    %1762 = vst [vmem:[#allocation4 + $0x20] sm:$0xf] 0.0
    %vm1763 = vcmask 257024
    %1764 = vst.msk [vmem:[#allocation4 + $0x28] sm:$0xf] %vm1763, 0.0
    %v1765 = vrot.slane %v1600, 7
    %1766 = vrot.lane.b32.xlu0 %v1765, 1
    %v1767 = vpop.permute.xlu0 %1766
    %vm1769 = vcmask 72713
    %1770 = vst.msk [vmem:[#allocation4] sm:$0xfe] %vm1769, %v1767
    %vm1771 = vcmask 65544
    %1772 = vst.msk [vmem:[#allocation4 + $0x10] sm:$0x1] %vm1771, %v1767
    %1773 = vrot.lane.b32.xlu0 %v1765, 3
    %v1774 = vpop.permute.xlu0 %1773
    %vm1776 = vcmask 154713
    %1777 = vst.msk [vmem:[#allocation4] sm:$0xfe] %vm1776, %v1774
    %vm1778 = vcmask 147544
    %1779 = vst.msk [vmem:[#allocation4 + $0x10] sm:$0x1] %vm1778, %v1774
    %1780 = vrot.lane.b32.xlu0 %v1765, 5
    %v1781 = vpop.permute.xlu0 %1780
    %vm1783 = vcmask 236713
    %1784 = vst.msk [vmem:[#allocation4] sm:$0xfe] %vm1783, %v1781
    %vm1785 = vcmask 229544
    %1786 = vst.msk [vmem:[#allocation4 + $0x10] sm:$0x1] %vm1785, %v1781
    %1787 = vrot.lane.b32.xlu0 %v1765, 7
    %v1788 = vpop.permute.xlu0 %1787
    %vm1790 = vcmask 318713
    %1791 = vst.msk [vmem:[#allocation4] sm:$0xfe] %vm1790, %v1788
    %vm1792 = vcmask 311544
    %1793 = vst.msk [vmem:[#allocation4 + $0x10] sm:$0x1] %vm1792, %v1788
    %1794 = vrot.lane.b32.xlu0 %v1765, 9
    %v1795 = vpop.permute.xlu0 %1794
    %vm1797 = vcmask 400713
    %1798 = vst.msk [vmem:[#allocation4] sm:$0xfe] %vm1797, %v1795
    %vm1799 = vcmask 393544
    %1800 = vst.msk [vmem:[#allocation4 + $0x10] sm:$0x1] %vm1799, %v1795
    %1801 = vrot.lane.b32.xlu0 %v1765, 11
    %v1802 = vpop.permute.xlu0 %1801
    %vm1804 = vcmask 482713
    %1805 = vst.msk [vmem:[#allocation4] sm:$0xfe] %vm1804, %v1802
    %vm1806 = vcmask 475544
    %1807 = vst.msk [vmem:[#allocation4 + $0x10] sm:$0x1] %vm1806, %v1802
    %1808 = vrot.lane.b32.xlu0 %v1765, 13
    %v1809 = vpop.permute.xlu0 %1808
    %vm1811 = vcmask 564713
    %1812 = vst.msk [vmem:[#allocation4] sm:$0xfe] %vm1811, %v1809
    %vm1813 = vcmask 557544
    %1814 = vst.msk [vmem:[#allocation4 + $0x10] sm:$0x1] %vm1813, %v1809
    %1815 = vrot.lane.b32.xlu0 %v1765, 15
    %v1816 = vpop.permute.xlu0 %1815
    %vm1818 = vcmask 646713
    %1819 = vst.msk [vmem:[#allocation4] sm:$0xfe] %vm1818, %v1816
    %vm1820 = vcmask 639544
    %1821 = vst.msk [vmem:[#allocation4 + $0x10] sm:$0x1] %vm1820, %v1816
    %1822 = vrot.lane.b32.xlu0 %v1765, 17
    %v1823 = vpop.permute.xlu0 %1822
    %vm1825 = vcmask 728713
    %1826 = vst.msk [vmem:[#allocation4] sm:$0xfe] %vm1825, %v1823
    %vm1827 = vcmask 721544
    %1828 = vst.msk [vmem:[#allocation4 + $0x10] sm:$0x1] %vm1827, %v1823
    %1829 = vrot.lane.b32.xlu0 %v1765, 19
    %v1830 = vpop.permute.xlu0 %1829
    %vm1832 = vcmask 810713
    %1833 = vst.msk [vmem:[#allocation4] sm:$0xfe] %vm1832, %v1830
    %vm1834 = vcmask 803544
    %1835 = vst.msk [vmem:[#allocation4 + $0x10] sm:$0x1] %vm1834, %v1830
    %1836 = vrot.lane.b32.xlu0 %v1765, 21
    %v1837 = vpop.permute.xlu0 %1836
    %vm1839 = vcmask 892713
    %1840 = vst.msk [vmem:[#allocation4] sm:$0xfe] %vm1839, %v1837
    %vm1841 = vcmask 885544
    %1842 = vst.msk [vmem:[#allocation4 + $0x10] sm:$0x1] %vm1841, %v1837
    %1843 = vrot.lane.b32.xlu0 %v1765, 23
    %v1844 = vpop.permute.xlu0 %1843
    %vm1846 = vcmask 974713
    %1847 = vst.msk [vmem:[#allocation4] sm:$0xfe] %vm1846, %v1844
    %vm1848 = vcmask 967544
    %1849 = vst.msk [vmem:[#allocation4 + $0x10] sm:$0x1] %vm1848, %v1844
    %1850 = vrot.lane.b32.xlu0 %v1765, 25
    %v1851 = vpop.permute.xlu0 %1850
    %vm1853 = vcmask 1048521
    %1854 = vst.msk [vmem:[#allocation4] sm:$0xfe] %vm1853, %v1851
    %vm1855 = vcmask 7169
    %1856 = vst.msk [vmem:[#allocation4 + $0x8] sm:$0xfe] %vm1855, %v1851
    %vm1857 = vcmask 1041352
    %1858 = vst.msk [vmem:[#allocation4 + $0x10] sm:$0x1] %vm1857, %v1851
    %vm1859 = vcmask 0
    %1860 = vst.msk [vmem:[#allocation4 + $0x18] sm:$0x1] %vm1859, %v1851
    %1861 = vrot.lane.b32.xlu0 %v1765, 27
    %v1862 = vpop.permute.xlu0 %1861
    %vm1864 = vcmask 89113
    %1865 = vst.msk [vmem:[#allocation4 + $0x8] sm:$0xfe] %vm1864, %v1862
    %vm1866 = vcmask 81944
    %1867 = vst.msk [vmem:[#allocation4 + $0x18] sm:$0x1] %vm1866, %v1862
    %1868 = vrot.lane.b32.xlu0 %v1765, 29
    %v1869 = vpop.permute.xlu0 %1868
    %vm1871 = vcmask 171113
    %1872 = vst.msk [vmem:[#allocation4 + $0x8] sm:$0xfe] %vm1871, %v1869
    %vm1873 = vcmask 163944
    %1874 = vst.msk [vmem:[#allocation4 + $0x18] sm:$0x1] %vm1873, %v1869
    %1875 = vrot.lane.b32.xlu0 %v1765, 31
    %v1876 = vpop.permute.xlu0 %1875
    %vm1878 = vcmask 253113
    %1879 = vst.msk [vmem:[#allocation4 + $0x8] sm:$0xfe] %vm1878, %v1876
    %vm1880 = vcmask 245944
    %1881 = vst.msk [vmem:[#allocation4 + $0x18] sm:$0x1] %vm1880, %v1876
    %v1882 = vrot.slane %v1601, 5
    %1883 = vrot.lane.b32.xlu0 %v1882, 1
    %v1884 = vpop.permute.xlu0 %1883
    %vm1886 = vcmask 72715
    %1887 = vst.msk [vmem:[#allocation4 + $0x10] sm:$0xf8] %vm1886, %v1884
    %vm1888 = vcmask 67592
    %1889 = vst.msk [vmem:[#allocation4 + $0x20] sm:$0x7] %vm1888, %v1884
    %1890 = vrot.lane.b32.xlu0 %v1882, 3
    %v1891 = vpop.permute.xlu0 %1890
    %vm1893 = vcmask 154715
    %1894 = vst.msk [vmem:[#allocation4 + $0x10] sm:$0xf8] %vm1893, %v1891
    %vm1895 = vcmask 149592
    %1896 = vst.msk [vmem:[#allocation4 + $0x20] sm:$0x7] %vm1895, %v1891
    %1897 = vrot.lane.b32.xlu0 %v1882, 5
    %v1898 = vpop.permute.xlu0 %1897
    %vm1900 = vcmask 236715
    %1901 = vst.msk [vmem:[#allocation4 + $0x10] sm:$0xf8] %vm1900, %v1898
    %vm1902 = vcmask 231592
    %1903 = vst.msk [vmem:[#allocation4 + $0x20] sm:$0x7] %vm1902, %v1898
    %1904 = vrot.lane.b32.xlu0 %v1882, 7
    %v1905 = vpop.permute.xlu0 %1904
    %vm1907 = vcmask 318715
    %1908 = vst.msk [vmem:[#allocation4 + $0x10] sm:$0xf8] %vm1907, %v1905
    %vm1909 = vcmask 313592
    %1910 = vst.msk [vmem:[#allocation4 + $0x20] sm:$0x7] %vm1909, %v1905
    %1911 = vrot.lane.b32.xlu0 %v1882, 9
    %v1912 = vpop.permute.xlu0 %1911
    %vm1914 = vcmask 400715
    %1915 = vst.msk [vmem:[#allocation4 + $0x10] sm:$0xf8] %vm1914, %v1912
    %vm1916 = vcmask 395592
    %1917 = vst.msk [vmem:[#allocation4 + $0x20] sm:$0x7] %vm1916, %v1912
    %1918 = vrot.lane.b32.xlu0 %v1882, 11
    %v1919 = vpop.permute.xlu0 %1918
    %vm1921 = vcmask 482715
    %1922 = vst.msk [vmem:[#allocation4 + $0x10] sm:$0xf8] %vm1921, %v1919
    %vm1923 = vcmask 477592
    %1924 = vst.msk [vmem:[#allocation4 + $0x20] sm:$0x7] %vm1923, %v1919
    %1925 = vrot.lane.b32.xlu0 %v1882, 13
    %v1926 = vpop.permute.xlu0 %1925
    %vm1928 = vcmask 564715
    %1929 = vst.msk [vmem:[#allocation4 + $0x10] sm:$0xf8] %vm1928, %v1926
    %vm1930 = vcmask 559592
    %1931 = vst.msk [vmem:[#allocation4 + $0x20] sm:$0x7] %vm1930, %v1926
    %1932 = vrot.lane.b32.xlu0 %v1882, 15
    %v1933 = vpop.permute.xlu0 %1932
    %vm1935 = vcmask 646715
    %1936 = vst.msk [vmem:[#allocation4 + $0x10] sm:$0xf8] %vm1935, %v1933
    %vm1937 = vcmask 641592
    %1938 = vst.msk [vmem:[#allocation4 + $0x20] sm:$0x7] %vm1937, %v1933
    %1939 = vrot.lane.b32.xlu0 %v1882, 17
    %v1940 = vpop.permute.xlu0 %1939
    %vm1942 = vcmask 728715
    %1943 = vst.msk [vmem:[#allocation4 + $0x10] sm:$0xf8] %vm1942, %v1940
    %vm1944 = vcmask 723592
    %1945 = vst.msk [vmem:[#allocation4 + $0x20] sm:$0x7] %vm1944, %v1940
    %1946 = vrot.lane.b32.xlu0 %v1882, 19
    %v1947 = vpop.permute.xlu0 %1946
    %vm1949 = vcmask 810715
    %1950 = vst.msk [vmem:[#allocation4 + $0x10] sm:$0xf8] %vm1949, %v1947
    %vm1951 = vcmask 805592
    %1952 = vst.msk [vmem:[#allocation4 + $0x20] sm:$0x7] %vm1951, %v1947
    %1953 = vrot.lane.b32.xlu0 %v1882, 21
    %v1954 = vpop.permute.xlu0 %1953
    %vm1956 = vcmask 892715
    %1957 = vst.msk [vmem:[#allocation4 + $0x10] sm:$0xf8] %vm1956, %v1954
    %vm1958 = vcmask 887592
    %1959 = vst.msk [vmem:[#allocation4 + $0x20] sm:$0x7] %vm1958, %v1954
    %1960 = vrot.lane.b32.xlu0 %v1882, 23
    %v1961 = vpop.permute.xlu0 %1960
    %vm1963 = vcmask 974715
    %1964 = vst.msk [vmem:[#allocation4 + $0x10] sm:$0xf8] %vm1963, %v1961
    %vm1965 = vcmask 969592
    %1966 = vst.msk [vmem:[#allocation4 + $0x20] sm:$0x7] %vm1965, %v1961
    %1967 = vrot.lane.b32.xlu0 %v1882, 25
    %v1968 = vpop.permute.xlu0 %1967
    %vm1970 = vcmask 1048523
    %1971 = vst.msk [vmem:[#allocation4 + $0x10] sm:$0xf8] %vm1970, %v1968
    %vm1972 = vcmask 7171
    %1973 = vst.msk [vmem:[#allocation4 + $0x18] sm:$0xf8] %vm1972, %v1968
    %vm1974 = vcmask 1043400
    %1975 = vst.msk [vmem:[#allocation4 + $0x20] sm:$0x7] %vm1974, %v1968
    %vm1976 = vcmask 2048
    %1977 = vst.msk [vmem:[#allocation4 + $0x28] sm:$0x7] %vm1976, %v1968
    %1978 = vrot.lane.b32.xlu0 %v1882, 27
    %v1979 = vpop.permute.xlu0 %1978
    %vm1981 = vcmask 89115
    %1982 = vst.msk [vmem:[#allocation4 + $0x18] sm:$0xf8] %vm1981, %v1979
    %vm1983 = vcmask 83992
    %1984 = vst.msk [vmem:[#allocation4 + $0x28] sm:$0x7] %vm1983, %v1979
    %1985 = vrot.lane.b32.xlu0 %v1882, 29
    %v1986 = vpop.permute.xlu0 %1985
    %vm1988 = vcmask 171115
    %1989 = vst.msk [vmem:[#allocation4 + $0x18] sm:$0xf8] %vm1988, %v1986
    %vm1990 = vcmask 165992
    %1991 = vst.msk [vmem:[#allocation4 + $0x28] sm:$0x7] %vm1990, %v1986
    %1992 = vrot.lane.b32.xlu0 %v1882, 31
    %v1993 = vpop.permute.xlu0 %1992
    %vm1995 = vcmask 253115
    %1996 = vst.msk [vmem:[#allocation4 + $0x18] sm:$0xf8] %vm1995, %v1993
    %vm1997 = vcmask 247992
    %1998 = vst.msk [vmem:[#allocation4 + $0x28] sm:$0x7] %vm1997, %v1993
    %v1999 = vld [vmem:[#allocation4] sm:$0xff]
    %v2000 = vld [vmem:[#allocation4 + $0x8] sm:$0xff]
    %v2001 = vld [vmem:[#allocation4 + $0x10] sm:$0xff]
    %v2002 = vld [vmem:[#allocation4 + $0x18] sm:$0xff]
    %v2003 = vld [vmem:[#allocation4 + $0x20] sm:$0xf]
    %v2004 = vld [vmem:[#allocation4 + $0x28] sm:$0xf]
    %v2005 = vpack.c.bf16 %v2001, %v1999
    %v2006 = vpack.c.bf16 %v2002, %v2000
    %v2007 = vpack.c.bf16 %v2003, %v2003
    %v2008 = vpack.c.bf16 %v2004, %v2004
    %v2009 = vld [vmem:[%s11] sm:$0xf]
    %v2010 = vld [vmem:[%s11 + $0x4] sm:$0xf]
    %v2011 = vld [vmem:[%s11 + $0x8] sm:$0xf]
    %v2015 = vunpack.c.l.b16 %v2009
    %v2016 = vunpack.c.l.b16 %v2010
    %v2017 = vunpack.c.l.b16 %v2011
    %v2018 = vpack.c.b16 %v2016, %v2015
    %v2019 = vpack.c.b16 %v2017, %v2017
    %vm2020 = vcmask 162816
    %v2022 = vsel %vm2020, %v2018, 0
    %v2025 = vsel %vm2020, %v2019, 0
    %v2028 = vsel %vm257, %v2007, 0
    %v2031 = vsel %vm257, %v2008, 0
    %2033 = vmatpush.bf16.msra.mxu0 0
    %2034 = vmatpush.bf16.msra.mxu0 0
    %2035 = vmatpush.bf16.msra.mxu0 0
    %2036 = vmatpush.bf16.msra.mxu0 0
    %2037 = vmatpush.bf16.msra.mxu0 0
    %2038 = vmatpush.bf16.msra.mxu0 0
    %2039 = vmatpush.bf16.msra.mxu0 %v2028
    %2040 = vmatpush.bf16.msra.mxu0 %v2005
    %2041 = vmatmul.bf16.gmra.mxu0 %v2022
    %v2042 = vpop.f32.mrf.mxu0
    %v2043 = vadd.f32 0.0, %v2042
    %v2044 = vpop.f32.mrf.mxu0
    %v2045 = vadd.f32 0.0, %v2044
    %2046 = vmatmul.bf16.gmra.mxu0 %v2025
    %v2047 = vpop.f32.mrf.mxu0
    %v2048 = vadd.f32 0.0, %v2047
    %v2049 = vpop.f32.mrf.mxu0
    %2050 = vdwg.mxu0
    %2051 = vmatpush.bf16.msra.mxu0 0
    %2052 = vmatpush.bf16.msra.mxu0 0
    %2053 = vmatpush.bf16.msra.mxu0 0
    %2054 = vmatpush.bf16.msra.mxu0 0
    %2055 = vmatpush.bf16.msra.mxu0 0
    %2056 = vmatpush.bf16.msra.mxu0 0
    %2057 = vmatpush.bf16.msra.mxu0 %v2031
    %2058 = vmatpush.bf16.msra.mxu0 %v2006
    %2059 = vmatmul.bf16.gmra.mxu0 %v2022
    %v2060 = vpop.f32.mrf.mxu0
    %v2061 = vadd.f32 0.0, %v2060
    %v2062 = vpop.f32.mrf.mxu0
    %v2063 = vadd.f32 0.0, %v2062
    %2064 = vmatmul.bf16.gmra.mxu0 %v2025
    %v2065 = vpop.f32.mrf.mxu0
    %v2066 = vadd.f32 0.0, %v2065
    %v2067 = vpop.f32.mrf.mxu0
    %2068 = vdwg.mxu0
    %v2069 = vpack.c.bf16 %v2043, %v2043
    %v2070 = vpack.c.bf16 %v2061, %v2061
    %v2071 = vld [vmem:[%s12] sm:$0xf]
    %v2072 = vld [vmem:[%s12 + $0x4] sm:$0xf]
    %v2073 = vld [vmem:[%s12 + $0x8] sm:$0xf]
    %v2074 = vld [vmem:[%s12 + $0xc] sm:$0xf]
    %v2075 = vld [vmem:[%s12 + $0x10] sm:$0xf]
    %v2076 = vld [vmem:[%s12 + $0x14] sm:$0xf]
    %v2077 = vld [vmem:[%s12 + $0x18] sm:$0xf]
    %v2078 = vld [vmem:[%s12 + $0x1c] sm:$0xf]
    %v2079 = vld [vmem:[%s12 + $0x20] sm:$0xf]
    %v2080 = vld [vmem:[%s12 + $0x24] sm:$0xf]
    %v2081 = vld [vmem:[%s12 + $0x28] sm:$0xf]
    %v2082 = vld [vmem:[%s12 + $0x2c] sm:$0xf]
    %v2083 = vld [vmem:[%s12 + $0x30] sm:$0xf]
    %v2084 = vld [vmem:[%s12 + $0x34] sm:$0xf]
    %v2085 = vld [vmem:[%s12 + $0x38] sm:$0xf]
    %v2086 = vld [vmem:[%s12 + $0x3c] sm:$0xf]
    %v2087 = vld [vmem:[%s12 + $0x40] sm:$0xf]
    %v2088 = vld [vmem:[%s12 + $0x44] sm:$0xf]
    %v2089 = vld [vmem:[%s12 + $0x48] sm:$0xf]
    %v2090 = vld [vmem:[%s12 + $0x4c] sm:$0xf]
    %v2091 = vpack.c.bf16 %v2045, %v2045
    %v2092 = vpack.c.bf16 %v2063, %v2063
    %s2093 = scalar_lea.vmem %s12, 80
    %v2094 = vld [vmem:[%s2093] sm:$0xf]
    %v2095 = vld [vmem:[%s2093 + $0x4] sm:$0xf]
    %v2096 = vld [vmem:[%s2093 + $0x8] sm:$0xf]
    %v2097 = vld [vmem:[%s2093 + $0xc] sm:$0xf]
    %v2098 = vld [vmem:[%s2093 + $0x10] sm:$0xf]
    %v2099 = vld [vmem:[%s2093 + $0x14] sm:$0xf]
    %v2100 = vld [vmem:[%s2093 + $0x18] sm:$0xf]
    %v2101 = vld [vmem:[%s2093 + $0x1c] sm:$0xf]
    %v2102 = vld [vmem:[%s2093 + $0x20] sm:$0xf]
    %v2103 = vld [vmem:[%s2093 + $0x24] sm:$0xf]
    %v2104 = vld [vmem:[%s2093 + $0x28] sm:$0xf]
    %v2105 = vld [vmem:[%s2093 + $0x2c] sm:$0xf]
    %v2106 = vld [vmem:[%s2093 + $0x30] sm:$0xf]
    %v2107 = vld [vmem:[%s2093 + $0x34] sm:$0xf]
    %v2108 = vld [vmem:[%s2093 + $0x38] sm:$0xf]
    %v2109 = vld [vmem:[%s2093 + $0x3c] sm:$0xf]
    %v2110 = vld [vmem:[%s2093 + $0x40] sm:$0xf]
    %v2111 = vld [vmem:[%s2093 + $0x44] sm:$0xf]
    %v2112 = vld [vmem:[%s2093 + $0x48] sm:$0xf]
    %v2113 = vld [vmem:[%s2093 + $0x4c] sm:$0xf]
    %v2134 = vunpack.c.l.b16 %v2094
    %v2135 = vunpack.c.l.b16 %v2095
    %v2136 = vunpack.c.l.b16 %v2096
    %v2137 = vunpack.c.l.b16 %v2097
    %v2138 = vunpack.c.l.b16 %v2098
    %v2139 = vunpack.c.l.b16 %v2099
    %v2140 = vunpack.c.l.b16 %v2100
    %v2141 = vunpack.c.l.b16 %v2101
    %v2142 = vunpack.c.l.b16 %v2102
    %v2143 = vunpack.c.l.b16 %v2103
    %v2144 = vunpack.c.l.b16 %v2104
    %v2145 = vunpack.c.l.b16 %v2105
    %v2146 = vunpack.c.l.b16 %v2106
    %v2147 = vunpack.c.l.b16 %v2107
    %v2148 = vunpack.c.l.b16 %v2108
    %v2149 = vunpack.c.l.b16 %v2109
    %v2150 = vunpack.c.l.b16 %v2110
    %v2151 = vunpack.c.l.b16 %v2111
    %v2152 = vunpack.c.l.b16 %v2112
    %v2153 = vunpack.c.l.b16 %v2113
    %v2154 = vpack.c.b16 %v2135, %v2134
    %v2155 = vpack.c.b16 %v2137, %v2136
    %v2156 = vpack.c.b16 %v2139, %v2138
    %v2157 = vpack.c.b16 %v2141, %v2140
    %v2158 = vpack.c.b16 %v2143, %v2142
    %v2159 = vpack.c.b16 %v2145, %v2144
    %v2160 = vpack.c.b16 %v2147, %v2146
    %v2161 = vpack.c.b16 %v2149, %v2148
    %v2162 = vpack.c.b16 %v2151, %v2150
    %v2163 = vpack.c.b16 %v2153, %v2152
    %v2175 = vsel %vm505, %v2092, 0
    %2177 = vmatpush.bf16.msra.mxu0 %v2161
    %2178 = vmatpush.bf16.msra.mxu0 %v2160
    %2179 = vmatpush.bf16.msra.mxu0 %v2159
    %2180 = vmatpush.bf16.msra.mxu0 %v2158
    %2181 = vmatpush.bf16.msra.mxu0 %v2157
    %2182 = vmatpush.bf16.msra.mxu0 %v2156
    %2183 = vmatpush.bf16.msra.mxu0 %v2155
    %2184 = vmatpush.bf16.msra.mxu0 %v2154
    %2185 = vmatmul.bf16.gmra.mxu0 %v2091
    %v2186 = vpop.f32.mrf.mxu0
    %v2187 = vadd.f32 0.0, %v2186
    %v2188 = vpop.f32.mrf.mxu0
    %2189 = vdwg.mxu0
    %2190 = vmatpush.bf16.msra.mxu0 0
    %2191 = vmatpush.bf16.msra.mxu0 0
    %2192 = vmatpush.bf16.msra.mxu0 0
    %2193 = vmatpush.bf16.msra.mxu0 0
    %2194 = vmatpush.bf16.msra.mxu0 0
    %2195 = vmatpush.bf16.msra.mxu0 0
    %2196 = vmatpush.bf16.msra.mxu0 %v2163
    %2197 = vmatpush.bf16.msra.mxu0 %v2162
    %2198 = vmatmul.bf16.gmra.mxu0 %v2175
    %v2199 = vpop.f32.mrf.mxu0
    %v2200 = vadd.f32 %v2187, %v2199
    %v2201 = vpop.f32.mrf.mxu0
    %2202 = vdwg.mxu0
    %v2223 = vunpack.c.l.b16 %v2071
    %v2224 = vunpack.c.l.b16 %v2072
    %v2225 = vunpack.c.l.b16 %v2073
    %v2226 = vunpack.c.l.b16 %v2074
    %v2227 = vunpack.c.l.b16 %v2075
    %v2228 = vunpack.c.l.b16 %v2076
    %v2229 = vunpack.c.l.b16 %v2077
    %v2230 = vunpack.c.l.b16 %v2078
    %v2231 = vunpack.c.l.b16 %v2079
    %v2232 = vunpack.c.l.b16 %v2080
    %v2233 = vunpack.c.l.b16 %v2081
    %v2234 = vunpack.c.l.b16 %v2082
    %v2235 = vunpack.c.l.b16 %v2083
    %v2236 = vunpack.c.l.b16 %v2084
    %v2237 = vunpack.c.l.b16 %v2085
    %v2238 = vunpack.c.l.b16 %v2086
    %v2239 = vunpack.c.l.b16 %v2087
    %v2240 = vunpack.c.l.b16 %v2088
    %v2241 = vunpack.c.l.b16 %v2089
    %v2242 = vunpack.c.l.b16 %v2090
    %v2243 = vpack.c.b16 %v2224, %v2223
    %v2244 = vpack.c.b16 %v2226, %v2225
    %v2245 = vpack.c.b16 %v2228, %v2227
    %v2246 = vpack.c.b16 %v2230, %v2229
    %v2247 = vpack.c.b16 %v2232, %v2231
    %v2248 = vpack.c.b16 %v2234, %v2233
    %v2249 = vpack.c.b16 %v2236, %v2235
    %v2250 = vpack.c.b16 %v2238, %v2237
    %v2251 = vpack.c.b16 %v2240, %v2239
    %v2252 = vpack.c.b16 %v2242, %v2241
    %v2264 = vsel %vm505, %v2070, 0
    %2266 = vmatpush.bf16.msra.mxu0 %v2250
    %2267 = vmatpush.bf16.msra.mxu0 %v2249
    %2268 = vmatpush.bf16.msra.mxu0 %v2248
    %2269 = vmatpush.bf16.msra.mxu0 %v2247
    %2270 = vmatpush.bf16.msra.mxu0 %v2246
    %2271 = vmatpush.bf16.msra.mxu0 %v2245
    %2272 = vmatpush.bf16.msra.mxu0 %v2244
    %2273 = vmatpush.bf16.msra.mxu0 %v2243
    %2274 = vmatmul.bf16.gmra.mxu0 %v2069
    %v2275 = vpop.f32.mrf.mxu0
    %v2276 = vadd.f32 %v2200, %v2275
    %v2277 = vpop.f32.mrf.mxu0
    %2278 = vdwg.mxu0
    %2279 = vmatpush.bf16.msra.mxu0 0
    %2280 = vmatpush.bf16.msra.mxu0 0
    %2281 = vmatpush.bf16.msra.mxu0 0
    %2282 = vmatpush.bf16.msra.mxu0 0
    %2283 = vmatpush.bf16.msra.mxu0 0
    %2284 = vmatpush.bf16.msra.mxu0 0
    %2285 = vmatpush.bf16.msra.mxu0 %v2252
    %2286 = vmatpush.bf16.msra.mxu0 %v2251
    %2287 = vmatmul.bf16.gmra.mxu0 %v2264
    %v2288 = vpop.f32.mrf.mxu0
    %v2289 = vadd.f32 %v2276, %v2288
    %v2290 = vpop.f32.mrf.mxu0
    %2291 = vdwg.mxu0
    %v2292 = vpack.c.bf16 %v2048, %v2048
    %v2293 = vpack.c.bf16 %v2066, %v2066
    %s2294 = scalar_lea.vmem %s12, 160
    %v2295 = vld [vmem:[%s2294] sm:$0xf]
    %v2296 = vld [vmem:[%s2294 + $0x4] sm:$0xf]
    %v2297 = vld [vmem:[%s2294 + $0x8] sm:$0xf]
    %v2298 = vld [vmem:[%s2294 + $0xc] sm:$0xf]
    %v2299 = vld [vmem:[%s2294 + $0x10] sm:$0xf]
    %v2300 = vld [vmem:[%s2294 + $0x14] sm:$0xf]
    %v2301 = vld [vmem:[%s2294 + $0x18] sm:$0xf]
    %v2302 = vld [vmem:[%s2294 + $0x1c] sm:$0xf]
    %v2303 = vld [vmem:[%s2294 + $0x20] sm:$0xf]
    %v2304 = vld [vmem:[%s2294 + $0x24] sm:$0xf]
    %v2305 = vld [vmem:[%s2294 + $0x28] sm:$0xf]
    %v2306 = vld [vmem:[%s2294 + $0x2c] sm:$0xf]
    %v2307 = vld [vmem:[%s2294 + $0x30] sm:$0xf]
    %v2308 = vld [vmem:[%s2294 + $0x34] sm:$0xf]
    %v2309 = vld [vmem:[%s2294 + $0x38] sm:$0xf]
    %v2310 = vld [vmem:[%s2294 + $0x3c] sm:$0xf]
    %v2311 = vld [vmem:[%s2294 + $0x40] sm:$0xf]
    %v2312 = vld [vmem:[%s2294 + $0x44] sm:$0xf]
    %v2313 = vld [vmem:[%s2294 + $0x48] sm:$0xf]
    %v2314 = vld [vmem:[%s2294 + $0x4c] sm:$0xf]
    %v2335 = vunpack.c.l.b16 %v2295
    %v2336 = vunpack.c.l.b16 %v2296
    %v2337 = vunpack.c.l.b16 %v2297
    %v2338 = vunpack.c.l.b16 %v2298
    %v2339 = vunpack.c.l.b16 %v2299
    %v2340 = vunpack.c.l.b16 %v2300
    %v2341 = vunpack.c.l.b16 %v2301
    %v2342 = vunpack.c.l.b16 %v2302
    %v2343 = vunpack.c.l.b16 %v2303
    %v2344 = vunpack.c.l.b16 %v2304
    %v2345 = vunpack.c.l.b16 %v2305
    %v2346 = vunpack.c.l.b16 %v2306
    %v2347 = vunpack.c.l.b16 %v2307
    %v2348 = vunpack.c.l.b16 %v2308
    %v2349 = vunpack.c.l.b16 %v2309
    %v2350 = vunpack.c.l.b16 %v2310
    %v2351 = vunpack.c.l.b16 %v2311
    %v2352 = vunpack.c.l.b16 %v2312
    %v2353 = vunpack.c.l.b16 %v2313
    %v2354 = vunpack.c.l.b16 %v2314
    %v2355 = vpack.c.b16 %v2336, %v2335
    %v2356 = vpack.c.b16 %v2338, %v2337
    %v2357 = vpack.c.b16 %v2340, %v2339
    %v2358 = vpack.c.b16 %v2342, %v2341
    %v2359 = vpack.c.b16 %v2344, %v2343
    %v2360 = vpack.c.b16 %v2346, %v2345
    %v2361 = vpack.c.b16 %v2348, %v2347
    %v2362 = vpack.c.b16 %v2350, %v2349
    %v2363 = vpack.c.b16 %v2352, %v2351
    %v2364 = vpack.c.b16 %v2354, %v2353
    %v2376 = vsel %vm505, %v2293, 0
    %2378 = vmatpush.bf16.msra.mxu0 %v2362
    %2379 = vmatpush.bf16.msra.mxu0 %v2361
    %2380 = vmatpush.bf16.msra.mxu0 %v2360
    %2381 = vmatpush.bf16.msra.mxu0 %v2359
    %2382 = vmatpush.bf16.msra.mxu0 %v2358
    %2383 = vmatpush.bf16.msra.mxu0 %v2357
    %2384 = vmatpush.bf16.msra.mxu0 %v2356
    %2385 = vmatpush.bf16.msra.mxu0 %v2355
    %2386 = vmatmul.bf16.gmra.mxu0 %v2292
    %v2387 = vpop.f32.mrf.mxu0
    %v2388 = vadd.f32 0.0, %v2387
    %v2389 = vpop.f32.mrf.mxu0
    %2390 = vdwg.mxu0
    %2391 = vmatpush.bf16.msra.mxu0 0
    %2392 = vmatpush.bf16.msra.mxu0 0
    %2393 = vmatpush.bf16.msra.mxu0 0
    %2394 = vmatpush.bf16.msra.mxu0 0
    %2395 = vmatpush.bf16.msra.mxu0 0
    %2396 = vmatpush.bf16.msra.mxu0 0
    %2397 = vmatpush.bf16.msra.mxu0 %v2364
    %2398 = vmatpush.bf16.msra.mxu0 %v2363
    %2399 = vmatmul.bf16.gmra.mxu0 %v2376
    %v2400 = vpop.f32.mrf.mxu0
    %v2401 = vadd.f32 %v2388, %v2400
    %v2402 = vpop.f32.mrf.mxu0
    %2403 = vdwg.mxu0
    %v2404 = vadd.f32 %v2289, %v2401
    %v2405 = vsel %vm1602, 1.0, 0
    %2407 = vmatpush.msra.mxu0 0.0
    %2408 = vmatpush.msra.mxu0 0.0
    %2409 = vmatpush.msra.mxu0 0.0
    %2410 = vmatpush.msra.mxu0 0.0
    %2411 = vmatpush.msra.mxu0 0.0
    %2412 = vmatpush.msra.mxu0 0.0
    %2413 = vmatpush.msra.mxu0 0.0
    %2414 = vmatpush.msra.mxu0 0.0
    %2415 = vmatpush.msra.mxu0 0.0
    %2416 = vmatpush.msra.mxu0 0.0
    %2417 = vmatpush.msra.mxu0 0.0
    %2418 = vmatpush.msra.mxu0 0.0
    %2419 = vmatpush.msra.mxu0 0.0
    %2420 = vmatpush.msra.mxu0 0.0
    %2421 = vmatpush.msra.mxu0 0.0
    %2422 = vmatpush.msra.mxu0 %v2404
    %2423 = vmatmul.f32.gmra.mxu0 %v2405
    %v2424 = vpop.f32.mrf.mxu0
    %v2425 = vadd.f32 0.0, %v2424
    %2426 = vdwg.mxu0
    %v2427 = vld [vmem:[%s13] sm:$0xff]
    %v2428 = vld [vmem:[%s13 + $0x8] sm:$0xff]
    %v2429 = vld [vmem:[%s13 + $0x10] sm:$0xff]
    %v2430 = vld [vmem:[%s13 + $0x18] sm:$0xff]
    %v2431 = vld [vmem:[%s13 + $0x20] sm:$0xff]
    %v2432 = vld [vmem:[%s13 + $0x28] sm:$0xff]
    %v2433 = vld [vmem:[%s13 + $0x30] sm:$0xff]
    %v2434 = vld [vmem:[%s13 + $0x38] sm:$0xff]
    %vm2435 = vcmask 523264
    %v2437 = vsel %vm2435, %v2425, 0
    %2439 = vmatpush.msra.mxu0 0.0
    %2440 = vmatpush.msra.mxu0 0.0
    %2441 = vmatpush.msra.mxu0 0.0
    %2442 = vmatpush.msra.mxu0 0.0
    %2443 = vmatpush.msra.mxu0 0.0
    %2444 = vmatpush.msra.mxu0 0.0
    %2445 = vmatpush.msra.mxu0 0.0
    %2446 = vmatpush.msra.mxu0 0.0
    %2447 = vmatpush.msra.mxu0 %v2434
    %2448 = vmatpush.msra.mxu0 %v2433
    %2449 = vmatpush.msra.mxu0 %v2432
    %2450 = vmatpush.msra.mxu0 %v2431
    %2451 = vmatpush.msra.mxu0 %v2430
    %2452 = vmatpush.msra.mxu0 %v2429
    %2453 = vmatpush.msra.mxu0 %v2428
    %2454 = vmatpush.msra.mxu0 %v2427
    %2455 = vmatmul.f32.gmra.mxu0 %v2437
    %v2456 = vpop.f32.mrf.mxu0
    %v2457 = vadd.f32 0.0, %v2456
    %2458 = vdwg.mxu0
    %v2459 = vperm.slane %v2457, 0
    %v2460 = vsub.f32 %v2404, %v2459
    %v2461 = vmul.f32 %v2460, %v2460
    %2462 = vmatpush.msra.mxu0 0.0
    %2463 = vmatpush.msra.mxu0 0.0
    %2464 = vmatpush.msra.mxu0 0.0
    %2465 = vmatpush.msra.mxu0 0.0
    %2466 = vmatpush.msra.mxu0 0.0
    %2467 = vmatpush.msra.mxu0 0.0
    %2468 = vmatpush.msra.mxu0 0.0
    %2469 = vmatpush.msra.mxu0 0.0
    %2470 = vmatpush.msra.mxu0 0.0
    %2471 = vmatpush.msra.mxu0 0.0
    %2472 = vmatpush.msra.mxu0 0.0
    %2473 = vmatpush.msra.mxu0 0.0
    %2474 = vmatpush.msra.mxu0 0.0
    %2475 = vmatpush.msra.mxu0 0.0
    %2476 = vmatpush.msra.mxu0 0.0
    %2477 = vmatpush.msra.mxu0 %v2461
    %2478 = vmatmul.f32.gmra.mxu0 %v2405
    %v2479 = vpop.f32.mrf.mxu0
    %v2480 = vadd.f32 0.0, %v2479
    %2481 = vdwg.mxu0
    %v2482 = vld [vmem:[%s14] sm:$0x1]
    %v2484 = vsel %vm2435, %v2480, 0
    %2486 = vmatpush.msra.mxu0 0.0
    %2487 = vmatpush.msra.mxu0 0.0
    %2488 = vmatpush.msra.mxu0 0.0
    %2489 = vmatpush.msra.mxu0 0.0
    %2490 = vmatpush.msra.mxu0 0.0
    %2491 = vmatpush.msra.mxu0 0.0
    %2492 = vmatpush.msra.mxu0 0.0
    %2493 = vmatpush.msra.mxu0 0.0
    %2494 = vmatpush.msra.mxu0 %v2434
    %2495 = vmatpush.msra.mxu0 %v2433
    %2496 = vmatpush.msra.mxu0 %v2432
    %2497 = vmatpush.msra.mxu0 %v2431
    %2498 = vmatpush.msra.mxu0 %v2430
    %2499 = vmatpush.msra.mxu0 %v2429
    %2500 = vmatpush.msra.mxu0 %v2428
    %2501 = vmatpush.msra.mxu0 %v2427
    %2502 = vmatmul.f32.gmra.mxu0 %v2484
    %v2503 = vpop.f32.mrf.mxu0
    %v2504 = vadd.f32 1e-05, %v2503
    %2505 = vdwg.mxu0
    %v2506 = vrsqrt.pop %v2504
    %v2507 = vmul.f32 %v2506, %v2504
    %v2508 = vmul.f32 %v2507, %v2506
    %v2509 = vmul.f32 0.5, %v2508
    %v2510 = vsub.f32 1.5, %v2509
    %v2511 = vmul.f32 %v2506, %v2510
    %vm2512 = vweird.f32 %v2504
    %vm2513 = vweird.f32 %v2506
    %vm2514 = vmor %vm2512, %vm2513
    %v2515 = vsel %vm2514, %v2506, %v2511
    %v2516 = vmul.f32 %v2482, %v2515
    %v2518 = vperm.slane %v2516, 0
    %v2520 = vmul.f32 %v2460, %v2518
    %v2521 = vld [vmem:[%s15] sm:$0x1]
    %v2523 = vperm.slane %v2521, 0
    %v2525 = vadd.f32 %v2520, %v2523
    %s2526 = sld [smem:[#allocation5 + $0x2]]
    %vm2527 = vcmp.gt.f32.partialorder %v2525, 0.0
    %v2528 = vstv %s2526
    %v2529 = vmul.f32 %v2528, %v2525
    %v2530 = vsel %vm2527, %v2525, %v2529
    %vm2531 = vcmask 27648
    %2532 = vst.msk [vmem:[%s19] sm:$0xf] %vm2531, %v2530
    %2534 = vrot.lane.b32.xlu0 %v2530, 124
    %v2535 = vpop.permute.xlu0 %2534
    %s2537 = scalar_lea.vmem %s19, 4
    %2538 = vst.msk [vmem:[%s2537] sm:$0xf] %vm2531, %v2535
    %2539 = vrot.lane.b32.xlu0 %v2530, 120
    %v2540 = vpop.permute.xlu0 %2539
    %s2542 = scalar_lea.vmem %s19, 8
    %2543 = vst.msk [vmem:[%s2542] sm:$0xf] %vm2531, %v2540
    %2544 = vrot.lane.b32.xlu0 %v2530, 116
    %v2545 = vpop.permute.xlu0 %2544
    %s2547 = scalar_lea.vmem %s19, 12
    %2548 = vst.msk [vmem:[%s2547] sm:$0xf] %vm2531, %v2545
    %2549 = vrot.lane.b32.xlu0 %v2530, 112
    %v2550 = vpop.permute.xlu0 %2549
    %s2552 = scalar_lea.vmem %s19, 16
    %2553 = vst.msk [vmem:[%s2552] sm:$0xf] %vm2531, %v2550
    %2554 = vrot.lane.b32.xlu0 %v2530, 108
    %v2555 = vpop.permute.xlu0 %2554
    %s2557 = scalar_lea.vmem %s19, 20
    %2558 = vst.msk [vmem:[%s2557] sm:$0xf] %vm2531, %v2555
    %2559 = vrot.lane.b32.xlu0 %v2530, 104
    %v2560 = vpop.permute.xlu0 %2559
    %s2562 = scalar_lea.vmem %s19, 24
    %2563 = vst.msk [vmem:[%s2562] sm:$0xf] %vm2531, %v2560
    %2564 = vrot.lane.b32.xlu0 %v2530, 100
    %v2565 = vpop.permute.xlu0 %2564
    %s2567 = scalar_lea.vmem %s19, 28
    %2568 = vst.msk [vmem:[%s2567] sm:$0xf] %vm2531, %v2565
    %2569 = vrot.lane.b32.xlu0 %v2530, 96
    %v2570 = vpop.permute.xlu0 %2569
    %s2572 = scalar_lea.vmem %s19, 32
    %2573 = vst.msk [vmem:[%s2572] sm:$0xf] %vm2531, %v2570
    %2574 = vrot.lane.b32.xlu0 %v2530, 92
    %v2575 = vpop.permute.xlu0 %2574
    %s2577 = scalar_lea.vmem %s19, 36
    %2578 = vst.msk [vmem:[%s2577] sm:$0xf] %vm2531, %v2575
    %2579 = vrot.lane.b32.xlu0 %v2530, 88
    %v2580 = vpop.permute.xlu0 %2579
    %s2582 = scalar_lea.vmem %s19, 40
    %2583 = vst.msk [vmem:[%s2582] sm:$0xf] %vm2531, %v2580
    %2584 = vrot.lane.b32.xlu0 %v2530, 84
    %v2585 = vpop.permute.xlu0 %2584
    %s2587 = scalar_lea.vmem %s19, 44
    %2588 = vst.msk [vmem:[%s2587] sm:$0xf] %vm2531, %v2585
    %2589 = vrot.lane.b32.xlu0 %v2530, 80
    %v2590 = vpop.permute.xlu0 %2589
    %s2592 = scalar_lea.vmem %s19, 48
    %2593 = vst.msk [vmem:[%s2592] sm:$0xf] %vm2531, %v2590
    %2594 = vrot.lane.b32.xlu0 %v2530, 76
    %v2595 = vpop.permute.xlu0 %2594
    %s2597 = scalar_lea.vmem %s19, 52
    %2598 = vst.msk [vmem:[%s2597] sm:$0xf] %vm2531, %v2595
    %2599 = vrot.lane.b32.xlu0 %v2530, 72
    %v2600 = vpop.permute.xlu0 %2599
    %s2602 = scalar_lea.vmem %s19, 56
    %2603 = vst.msk [vmem:[%s2602] sm:$0xf] %vm2531, %v2600
    %2604 = vrot.lane.b32.xlu0 %v2530, 68
    %v2605 = vpop.permute.xlu0 %2604
    %s2607 = scalar_lea.vmem %s19, 60
    %2608 = vst.msk [vmem:[%s2607] sm:$0xf] %vm2531, %v2605
    %s2609 = scalar_lea.vmem %s19, 64
    %vm2610 = vcmask 31748
    %2611 = vst.msk [vmem:[%s2609 - $0x4] sm:$0xf0] %vm2610, %v2530
    %s2612 = scalar_lea.vmem %s19, 68
    %2613 = vst.msk [vmem:[%s2612 - $0x4] sm:$0xf0] %vm2610, %v2535
    %s2614 = scalar_lea.vmem %s19, 72
    %2615 = vst.msk [vmem:[%s2614 - $0x4] sm:$0xf0] %vm2610, %v2540
    %s2616 = scalar_lea.vmem %s19, 76
    %2617 = vst.msk [vmem:[%s2616 - $0x4] sm:$0xf0] %vm2610, %v2545
    %s2618 = scalar_lea.vmem %s19, 80
    %2619 = vst.msk [vmem:[%s2618 - $0x4] sm:$0xf0] %vm2610, %v2550
    %s2620 = scalar_lea.vmem %s19, 84
    %2621 = vst.msk [vmem:[%s2620 - $0x4] sm:$0xf0] %vm2610, %v2555
    %s2622 = scalar_lea.vmem %s19, 88
    %2623 = vst.msk [vmem:[%s2622 - $0x4] sm:$0xf0] %vm2610, %v2560
    %s2624 = scalar_lea.vmem %s19, 92
    %2625 = vst.msk [vmem:[%s2624 - $0x4] sm:$0xf0] %vm2610, %v2565
    %s2626 = scalar_lea.vmem %s19, 96
    %2627 = vst.msk [vmem:[%s2626 - $0x4] sm:$0xf0] %vm2610, %v2570
    %s2628 = scalar_lea.vmem %s19, 100
    %2629 = vst.msk [vmem:[%s2628 - $0x4] sm:$0xf0] %vm2610, %v2575
    %s2630 = scalar_lea.vmem %s19, 104
    %2631 = vst.msk [vmem:[%s2630 - $0x4] sm:$0xf0] %vm2610, %v2580
    %s2632 = scalar_lea.vmem %s19, 108
    %2633 = vst.msk [vmem:[%s2632 - $0x4] sm:$0xf0] %vm2610, %v2585
    %s2634 = scalar_lea.vmem %s19, 112
    %2635 = vst.msk [vmem:[%s2634 - $0x4] sm:$0xf0] %vm2610, %v2590
    %s2636 = scalar_lea.vmem %s19, 116
    %2637 = vst.msk [vmem:[%s2636 - $0x4] sm:$0xf0] %vm2610, %v2595
    %s2638 = scalar_lea.vmem %s19, 120
    %2639 = vst.msk [vmem:[%s2638 - $0x4] sm:$0xf0] %vm2610, %v2600
    %s2640 = scalar_lea.vmem %s19, 124
    %2641 = vst.msk [vmem:[%s2640 - $0x4] sm:$0xf0] %vm2610, %v2605
    // Predicated region
    $region74: #{forward.1} parent=1 // pred_check
      _
    $region75: #{forward.1} parent=1 // pred_check_branch
      %2643 = sbr.rel (0) target = $region77
    $region76: #{forward.1} parent=1 // pred_region
      %2645 = vsyncadd [#allocation6], 0
      %s2646 = sshll.u32 [#allocation8], 4
      %s2647 = int_to_ptr.vmem [resolvable:$true] %s2646
      %s2648 = sshll.u32 %s17, 4
      %s2649 = int_to_ptr.hbm [resolvable:$true] %s2648
      %2654 = dma.vmem_to_hbm [thread:$0]  %s2647, 4096, %s2649, [#allocation6], 128, 128, 8
    $region77: #{forward.1} parent=1 // pred_fallthru
      _
    // Predicated region
    $region78: #{forward.1} parent=1 // pred_check
      _
    $region79: #{forward.1} parent=1 // pred_check_branch
      %2656 = sbr.rel (0) target = $region81
    $region80: #{forward.1} parent=1 // pred_region
      _
    $region81: #{forward.1} parent=1 // pred_fallthru
      _
    // Predicated region
    $region82: #{forward.1} parent=1 // pred_check
      _
    $region83: #{forward.1} parent=1 // pred_check_branch
      %2658 = sbr.rel (0) target = $region85
    $region84: #{forward.1} parent=1 // pred_region
      _
    $region85: #{forward.1} parent=1 // pred_fallthru
      _
    // Predicated region
    $region86: #{forward.1} parent=1 // pred_check
      _
    $region87: #{forward.1} parent=1 // pred_check_branch
      %2660 = sbr.rel (0) target = $region89
    $region88: #{forward.1} parent=1 // pred_region
      %2662 = dma.done [#allocation6], 4096
    $region89: #{forward.1} parent=1 // pred_fallthru
      _
    // Predicated region
    $region90: #{forward.1} parent=1 // pred_check
      _
    $region91: #{forward.1} parent=1 // pred_check_branch
      %2664 = sbr.rel (0) target = $region93
    $region92: #{forward.1} parent=1 // pred_region
      _
    $region93: #{forward.1} parent=1 // pred_fallthru
      _
    // Predicated region
    $region94: #{forward.1} parent=1 // pred_check
      _
    $region95: #{forward.1} parent=1 // pred_check_branch
      %2666 = sbr.rel (0) target = $region97
    $region96: #{forward.1} parent=1 // pred_region
      _
    $region97: #{forward.1} parent=1 // pred_fallthru
      _
    %2667 = vsyncpa [#allocation6], 1
    %2668 = vsyncpa [#allocation7], 1

</llo_original>
